<compile_context>
chip_gen: v7x
topology: tpu7x:2x2x1
jax: 0.10.0
libtpu: 0.0.40
codegen_flags: <defaults>
</compile_context>

<pallas_src>
import jax
import jax.numpy as jnp
from jax.experimental import pallas as pl
from jax.experimental.pallas import tpu as pltpu

IN_F = 16
MID_F = 64
HID = 128
OUT_F = 3
OUT_PAD = 128          # lane-dense padded width of the final head
B_PAD = 8              # f32 sublane tile: pad batch to this
NEG_SLOPE = 0.01       # nn.LeakyReLU default


def _fast_sigmoid(x):
    # sigmoid(x) == 0.5 * (tanh(0.5*x) + 1): single EUP op (vs. exp + reciprocal).
    return 0.5 * (jnp.tanh(0.5 * x) + 1.0)


# ---------------------------------------------------------------------------
# Single fused kernel.
#   x_ref  : (T*B_PAD, IN_F) time-major, batch padded/zero-filled
#   h0/c0  : (B_PAD, HID) initial LSTM state (padded rows zero)
#   whh / w3p / b3p arrive as HBM refs (pl.ANY) and are DMA'd manually so the
#   copies overlap the hoisted matmuls.
# Outputs: padded head output (T*B_PAD, 128), h_n (B_PAD, HID), c_n (B_PAD, HID).
# ---------------------------------------------------------------------------
def _tester_kernel(x_ref, h0_ref, c0_ref,
                   w1_ref, b1_ref, wih_ref, bl_ref,
                   whh_hbm, w3p_hbm, b3p_hbm,
                   out_ref, hN_ref, cN_ref,
                   whh_vm, w3p_vm, b3p_vm, y_sc, sems):
    n = x_ref.shape[0]          # n = T * B_PAD (time-major rows)
    T = n // B_PAD

    # ---- kick off DMAs of late-use weights; they overlap the matmuls below.
    cp_whh = pltpu.make_async_copy(whh_hbm, whh_vm, sems.at[0])
    cp_w3p = pltpu.make_async_copy(w3p_hbm, w3p_vm, sems.at[1])
    cp_b3p = pltpu.make_async_copy(b3p_hbm, b3p_vm, sems.at[2])
    cp_whh.start()
    cp_w3p.start()
    cp_b3p.start()

    # ---- start: Linear + LeakyReLU for all timesteps at once (batched MXU matmul)
    feat = jnp.dot(x_ref[...], w1_ref[...],
                   preferred_element_type=jnp.float32) + b1_ref[...]      # (n, MID_F)
    feat = jnp.where(feat >= 0, feat, NEG_SLOPE * feat)

    # ---- hoisted input-to-gate projection, LSTM biases (b_ih + b_hh) pre-folded in
    gx = jnp.dot(feat, wih_ref[...],
                 preferred_element_type=jnp.float32) + bl_ref[...]        # (n, 4*HID)

    # ---- recurrence: only h @ W_hh + elementwise gates per step, fully unrolled
    cp_whh.wait()
    whh = whh_vm[...]
    h = h0_ref[...]
    c = c0_ref[...]
    for t in range(T):                                    # T is static & small
        gates = gx[t * B_PAD:(t + 1) * B_PAD, :] + jnp.dot(
            h, whh, preferred_element_type=jnp.float32)   # (B_PAD, 4*HID)
        i_g = _fast_sigmoid(gates[:, 0 * HID:1 * HID])    # PyTorch gate order i,f,g,o
        f_g = _fast_sigmoid(gates[:, 1 * HID:2 * HID])
        g_g = jnp.tanh(gates[:, 2 * HID:3 * HID])
        o_g = _fast_sigmoid(gates[:, 3 * HID:4 * HID])
        c = f_g * c + i_g * g_g
        h = o_g * jnp.tanh(c)
        y_sc[t * B_PAD:(t + 1) * B_PAD, :] = h            # aligned whole-vreg store
    hN_ref[...] = h
    cN_ref[...] = c

    # ---- finish: Linear + Sigmoid on the resident (T*B_PAD, HID) slab, lane-dense store
    cp_w3p.wait()
    cp_b3p.wait()
    out = jnp.dot(y_sc[...], w3p_vm[...],
                  preferred_element_type=jnp.float32) + b3p_vm[...]       # (n, 128)
    out_ref[...] = jax.nn.sigmoid(out)


def _fused_forward(x_tm, h0, c0, w1, b1, wih, bl, whh, w3p, b3p):
    n = x_tm.shape[0]
    return pl.pallas_call(
        _tester_kernel,
        out_shape=(
            jax.ShapeDtypeStruct((n, OUT_PAD), jnp.float32),
            jax.ShapeDtypeStruct((B_PAD, HID), jnp.float32),
            jax.ShapeDtypeStruct((B_PAD, HID), jnp.float32),
        ),
        in_specs=[
            pl.BlockSpec((n, IN_F), lambda: (0, 0)),
            pl.BlockSpec((B_PAD, HID), lambda: (0, 0)),
            pl.BlockSpec((B_PAD, HID), lambda: (0, 0)),
            pl.BlockSpec((IN_F, MID_F), lambda: (0, 0)),
            pl.BlockSpec((1, MID_F), lambda: (0, 0)),
            pl.BlockSpec((MID_F, 4 * HID), lambda: (0, 0)),
            pl.BlockSpec((1, 4 * HID), lambda: (0, 0)),
            pl.BlockSpec(memory_space=pl.ANY),       # W_hh  (late use, manual DMA)
            pl.BlockSpec(memory_space=pl.ANY),       # w3p   (late use, manual DMA)
            pl.BlockSpec(memory_space=pl.ANY),       # b3p   (late use, manual DMA)
        ],
        out_specs=(
            pl.BlockSpec((n, OUT_PAD), lambda: (0, 0)),
            pl.BlockSpec((B_PAD, HID), lambda: (0, 0)),
            pl.BlockSpec((B_PAD, HID), lambda: (0, 0)),
        ),
        scratch_shapes=[
            pltpu.VMEM((HID, 4 * HID), jnp.float32),   # whh_vm
            pltpu.VMEM((HID, OUT_PAD), jnp.float32),   # w3p_vm
            pltpu.VMEM((1, OUT_PAD), jnp.float32),     # b3p_vm
            pltpu.VMEM((n, HID), jnp.float32),         # y_sc (per-step hidden slab)
            pltpu.SemaphoreType.DMA((3,)),
        ],
    )(x_tm, h0, c0, w1, b1, wih, bl, whh, w3p, b3p)


# ---------------------------------------------------------------------------
# Parameter construction (deterministic, PyTorch-style uniform init)
# ---------------------------------------------------------------------------
def init_params(key):
    ks = jax.random.split(key, 8)

    def u(k, shape, bound):
        return jax.random.uniform(k, shape, jnp.float32, -bound, bound)

    b1 = 1.0 / jnp.sqrt(IN_F)
    bL = 1.0 / jnp.sqrt(HID)
    b3 = 1.0 / jnp.sqrt(HID)
    w3 = u(ks[6], (HID, OUT_F), b3)
    b3v = u(ks[7], (1, OUT_F), b3)
    return {
        "w1": u(ks[0], (IN_F, MID_F), b1),        # start Linear weight (transposed)
        "b1": u(ks[1], (1, MID_F), b1),
        "w_ih": u(ks[2], (MID_F, 4 * HID), bL),   # LSTM weight_ih_l0^T
        "w_hh": u(ks[3], (HID, 4 * HID), bL),     # LSTM weight_hh_l0^T
        "b_lstm": u(ks[4], (1, 4 * HID), bL) + u(ks[5], (1, 4 * HID), bL),  # b_ih + b_hh
        "w3": w3,                                  # finish Linear weight (transposed)
        "b3": b3v,
        # Padded lane-dense head, built ONCE here (not per-call inside jit).
        "w3_pad": jnp.zeros((HID, OUT_PAD), jnp.float32).at[:, :OUT_F].set(w3),
        "b3_pad": jnp.zeros((1, OUT_PAD), jnp.float32).at[:, :OUT_F].set(b3v),
    }


# ---------------------------------------------------------------------------
# Full forward, mirroring Tester.forward
# ---------------------------------------------------------------------------
@jax.jit
def tester_forward(x, params, hidden=None):
    sequence = (x.ndim == 3)
    if sequence:
        B, T, _ = x.shape
        x_tm = jnp.transpose(x, (1, 0, 2))          # (T, B, IN_F) time-major
    else:
        B, T = x.shape[0], 1
        x_tm = x[None, :, :]                        # (1, B, IN_F)

    # Pad batch to the f32 sublane tile so the kernel's per-step slices/stores are
    # whole-vreg and unmasked. Padded rows are zero-filled (stay finite through gates).
    x_pad = jnp.zeros((T, B_PAD, IN_F), jnp.float32).at[:, :B, :].set(x_tm)
    x_pad = x_pad.reshape(T * B_PAD, IN_F)

    if hidden is None:
        h0 = jnp.zeros((B_PAD, HID), jnp.float32)
        c0 = jnp.zeros((B_PAD, HID), jnp.float32)
    else:
        h0 = jnp.zeros((B_PAD, HID), jnp.float32).at[:B, :].set(hidden[0].reshape(B, HID))
        c0 = jnp.zeros((B_PAD, HID), jnp.float32).at[:B, :].set(hidden[1].reshape(B, HID))

    out_pad, h_n, c_n = _fused_forward(
        x_pad, h0, c0,
        params["w1"], params["b1"],
        params["w_ih"], params["b_lstm"],
        params["w_hh"], params["w3_pad"], params["b3_pad"])

    out_tm = out_pad.reshape(T, B_PAD, OUT_PAD)[:, :B, :OUT_F]   # (T, B, 3)
    if sequence:
        out = jnp.transpose(out_tm, (1, 0, 2))
    else:
        out = out_tm[0]

    h_n = h_n[:B, :]
    c_n = c_n[:B, :]
    # PyTorch returns hidden as (h_n, c_n) with leading num_layers dim == 1
    return out, (h_n[None, :, :], c_n[None, :, :])


# Pure-JAX reference for a sanity check
def tester_forward_ref(x, params, hidden=None):
    sequence = (x.ndim == 3)
    if sequence:
        B, T, _ = x.shape
    else:
        B, T = x.shape[0], 1
        x = x[:, None, :]

    h0 = x.reshape(B * T, IN_F) @ params["w1"] + params["b1"]
    h0 = jnp.where(h0 >= 0, h0, NEG_SLOPE * h0).reshape(B, T, MID_F)

    if hidden is None:
        h_init = jnp.zeros((B, HID), jnp.float32)
        c_init = jnp.zeros((B, HID), jnp.float32)
    else:
        h_init = hidden[0].reshape(B, HID)
        c_init = hidden[1].reshape(B, HID)

    def step(carry, x_t):
        h, c = carry
        g = x_t @ params["w_ih"] + h @ params["w_hh"] + params["b_lstm"]
        i = jax.nn.sigmoid(g[:, 0 * HID:1 * HID])
        f = jax.nn.sigmoid(g[:, 1 * HID:2 * HID])
        gg = jnp.tanh(g[:, 2 * HID:3 * HID])
        o = jax.nn.sigmoid(g[:, 3 * HID:4 * HID])
        c = f * c + i * gg
        h = o * jnp.tanh(c)
        return (h, c), h

    (h_n, c_n), ys = jax.lax.scan(step, (h_init, c_init), jnp.transpose(h0, (1, 0, 2)))
    y = jnp.transpose(ys, (1, 0, 2))
    out = jax.nn.sigmoid(y.reshape(B * T, HID) @ params["w3"] + params["b3"])
    out = out.reshape(B, T, OUT_F) if sequence else out.reshape(B, OUT_F)
    return out, (h_n[None], c_n[None])


if __name__ == "__main__":
    key = jax.random.PRNGKey(0)
    pkey, xkey, x2key = jax.random.split(key, 3)
    params = init_params(pkey)

    # Sequence (3-D, batch_first) path
    B, T = 2, 8
    x = jax.random.normal(xkey, (B, T, IN_F), jnp.float32)
    out, (h_n, c_n) = tester_forward(x, params)
    jax.block_until_ready((out, h_n, c_n))

    out_r, (h_r, c_r) = tester_forward_ref(x, params)
    assert out.shape == (B, T, OUT_F)
    assert h_n.shape == (1, B, HID) and c_n.shape == (1, B, HID)
    assert jnp.allclose(out, out_r, atol=1e-5, rtol=1e-5)
    assert jnp.allclose(h_n, h_r, atol=1e-5, rtol=1e-5)
    assert jnp.allclose(c_n, c_r, atol=1e-5, rtol=1e-5)

    # Non-sequence (2-D) path, T == 1
    x2d = jax.random.normal(x2key, (B, IN_F), jnp.float32)
    out2, (h2, c2) = tester_forward(x2d, params)
    jax.block_until_ready((out2, h2, c2))
    out2_r, (h2_r, c2_r) = tester_forward_ref(x2d, params)
    assert out2.shape == (B, OUT_F)
    assert jnp.allclose(out2, out2_r, atol=1e-5, rtol=1e-5)
    assert jnp.allclose(h2, h2_r, atol=1e-5, rtol=1e-5)
    assert jnp.allclose(c2, c2_r, atol=1e-5, rtol=1e-5)

    print("KERNEL_OK")
</pallas_src>

<mosaic_0001>
module attributes {stable_mosaic.version = 11 : i64} {
  func.func @_tester_kernel(%arg0: memref<64x16xf32, #tpu.memory_space<vmem>>, %arg1: memref<8x128xf32, #tpu.memory_space<vmem>>, %arg2: memref<8x128xf32, #tpu.memory_space<vmem>>, %arg3: memref<16x64xf32, #tpu.memory_space<vmem>>, %arg4: memref<1x64xf32, #tpu.memory_space<vmem>>, %arg5: memref<64x512xf32, #tpu.memory_space<vmem>>, %arg6: memref<1x512xf32, #tpu.memory_space<vmem>>, %arg7: memref<128x512xf32, #tpu.memory_space<any>>, %arg8: memref<128x128xf32, #tpu.memory_space<any>>, %arg9: memref<1x128xf32, #tpu.memory_space<any>>, %arg10: memref<64x128xf32, #tpu.memory_space<vmem>>, %arg11: memref<8x128xf32, #tpu.memory_space<vmem>>, %arg12: memref<8x128xf32, #tpu.memory_space<vmem>>, %arg13: memref<128x512xf32, #tpu.memory_space<vmem>>, %arg14: memref<128x128xf32, #tpu.memory_space<vmem>>, %arg15: memref<1x128xf32, #tpu.memory_space<vmem>>, %arg16: memref<64x128xf32, #tpu.memory_space<vmem>>, %arg17: memref<3x!tpu.dma_semaphore, #tpu.memory_space<semaphore_mem>>) attributes {dimension_semantics = [], scalar_prefetch = 0 : i64, scratch_operands = 5 : i64, tpu.core_type = #tpu.core_type<tc>} {
    %c0_i32 = arith.constant 0 : i32
    %0 = tpu.memref_slice %arg17[%c0_i32] : memref<3x!tpu.dma_semaphore, #tpu.memory_space<semaphore_mem>> -> memref<1x!tpu.dma_semaphore, #tpu.memory_space<semaphore_mem>>
    %1 = tpu.memref_squeeze %0 : memref<1x!tpu.dma_semaphore, #tpu.memory_space<semaphore_mem>> -> memref<!tpu.dma_semaphore, #tpu.memory_space<semaphore_mem>>
    tpu.enqueue_dma source(%arg7 : memref<128x512xf32, #tpu.memory_space<any>>) target(%arg13 : memref<128x512xf32, #tpu.memory_space<vmem>>) target_semaphore(%1 : memref<!tpu.dma_semaphore, #tpu.memory_space<semaphore_mem>>)
    %c1_i32 = arith.constant 1 : i32
    %2 = tpu.memref_slice %arg17[%c1_i32] : memref<3x!tpu.dma_semaphore, #tpu.memory_space<semaphore_mem>> -> memref<1x!tpu.dma_semaphore, #tpu.memory_space<semaphore_mem>>
    %3 = tpu.memref_squeeze %2 : memref<1x!tpu.dma_semaphore, #tpu.memory_space<semaphore_mem>> -> memref<!tpu.dma_semaphore, #tpu.memory_space<semaphore_mem>>
    tpu.enqueue_dma source(%arg8 : memref<128x128xf32, #tpu.memory_space<any>>) target(%arg14 : memref<128x128xf32, #tpu.memory_space<vmem>>) target_semaphore(%3 : memref<!tpu.dma_semaphore, #tpu.memory_space<semaphore_mem>>)
    %c2_i32 = arith.constant 2 : i32
    %4 = tpu.memref_slice %arg17[%c2_i32] : memref<3x!tpu.dma_semaphore, #tpu.memory_space<semaphore_mem>> -> memref<1x!tpu.dma_semaphore, #tpu.memory_space<semaphore_mem>>
    %5 = tpu.memref_squeeze %4 : memref<1x!tpu.dma_semaphore, #tpu.memory_space<semaphore_mem>> -> memref<!tpu.dma_semaphore, #tpu.memory_space<semaphore_mem>>
    tpu.enqueue_dma source(%arg9 : memref<1x128xf32, #tpu.memory_space<any>>) target(%arg15 : memref<1x128xf32, #tpu.memory_space<vmem>>) target_semaphore(%5 : memref<!tpu.dma_semaphore, #tpu.memory_space<semaphore_mem>>)
    %c0 = arith.constant 0 : index
    %c0_0 = arith.constant 0 : index
    %6 = vector.load %arg0[%c0, %c0_0] : memref<64x16xf32, #tpu.memory_space<vmem>>, vector<64x16xf32>
    %c0_1 = arith.constant 0 : index
    %c0_2 = arith.constant 0 : index
    %7 = vector.load %arg3[%c0_1, %c0_2] : memref<16x64xf32, #tpu.memory_space<vmem>>, vector<16x64xf32>
    %cst = arith.constant dense<0.000000e+00> : vector<64x64xf32>
    %8 = tpu.matmul %6, %7, %cst {dimension_numbers = #tpu.dot_dimension_numbers<[1], [0], [0], [1], [0, 0, 1, 1], [], []>} : vector<64x16xf32>, vector<16x64xf32>, vector<64x64xf32> -> vector<64x64xf32>
    %c0_3 = arith.constant 0 : index
    %c0_4 = arith.constant 0 : index
    %9 = vector.load %arg4[%c0_3, %c0_4] : memref<1x64xf32, #tpu.memory_space<vmem>>, vector<1x64xf32>
    %10 = vector.broadcast %9 : vector<1x64xf32> to vector<64x64xf32>
    %11 = arith.addf %8, %10 : vector<64x64xf32>
    %cst_5 = arith.constant 0.000000e+00 : f32
    %12 = vector.broadcast %cst_5 : f32 to vector<64x64xf32>
    %13 = arith.cmpf oge, %11, %12 : vector<64x64xf32>
    %cst_6 = arith.constant 0.00999999977 : f32
    %14 = vector.broadcast %cst_6 : f32 to vector<64x64xf32>
    %15 = arith.mulf %14, %11 : vector<64x64xf32>
    %16 = arith.select %13, %11, %15 : vector<64x64xi1>, vector<64x64xf32>
    %c0_7 = arith.constant 0 : index
    %c0_8 = arith.constant 0 : index
    %17 = vector.load %arg5[%c0_7, %c0_8] : memref<64x512xf32, #tpu.memory_space<vmem>>, vector<64x512xf32>
    %cst_9 = arith.constant dense<0.000000e+00> : vector<64x512xf32>
    %18 = tpu.matmul %16, %17, %cst_9 {dimension_numbers = #tpu.dot_dimension_numbers<[1], [0], [0], [1], [0, 0, 1, 1], [], []>} : vector<64x64xf32>, vector<64x512xf32>, vector<64x512xf32> -> vector<64x512xf32>
    %c0_10 = arith.constant 0 : index
    %c0_11 = arith.constant 0 : index
    %19 = vector.load %arg6[%c0_10, %c0_11] : memref<1x512xf32, #tpu.memory_space<vmem>>, vector<1x512xf32>
    %20 = vector.broadcast %19 : vector<1x512xf32> to vector<64x512xf32>
    %21 = arith.addf %18, %20 : vector<64x512xf32>
    %c0_i32_12 = arith.constant 0 : i32
    %22 = tpu.memref_slice %arg17[%c0_i32_12] : memref<3x!tpu.dma_semaphore, #tpu.memory_space<semaphore_mem>> -> memref<1x!tpu.dma_semaphore, #tpu.memory_space<semaphore_mem>>
    %23 = tpu.memref_squeeze %22 : memref<1x!tpu.dma_semaphore, #tpu.memory_space<semaphore_mem>> -> memref<!tpu.dma_semaphore, #tpu.memory_space<semaphore_mem>>
    tpu.wait_dma2 semaphore(%23 : memref<!tpu.dma_semaphore, #tpu.memory_space<semaphore_mem>>) src(%arg7 : memref<128x512xf32, #tpu.memory_space<any>>) dst(%arg13 : memref<128x512xf32, #tpu.memory_space<vmem>>)
    %c0_13 = arith.constant 0 : index
    %c0_14 = arith.constant 0 : index
    %24 = vector.load %arg13[%c0_13, %c0_14] : memref<128x512xf32, #tpu.memory_space<vmem>>, vector<128x512xf32>
    %c0_15 = arith.constant 0 : index
    %c0_16 = arith.constant 0 : index
    %25 = vector.load %arg1[%c0_15, %c0_16] : memref<8x128xf32, #tpu.memory_space<vmem>>, vector<8x128xf32>
    %c0_17 = arith.constant 0 : index
    %c0_18 = arith.constant 0 : index
    %26 = vector.load %arg2[%c0_17, %c0_18] : memref<8x128xf32, #tpu.memory_space<vmem>>, vector<8x128xf32>
    %27 = vector.extract_strided_slice %21 {offsets = [0, 0], sizes = [8, 512], strides = [1, 1]} : vector<64x512xf32> to vector<8x512xf32>
    %cst_19 = arith.constant dense<0.000000e+00> : vector<8x512xf32>
    %28 = tpu.matmul %25, %24, %cst_19 {dimension_numbers = #tpu.dot_dimension_numbers<[1], [0], [0], [1], [0, 0, 1, 1], [], []>} : vector<8x128xf32>, vector<128x512xf32>, vector<8x512xf32> -> vector<8x512xf32>
    %29 = arith.addf %27, %28 : vector<8x512xf32>
    %30 = vector.extract_strided_slice %29 {offsets = [0, 0], sizes = [8, 128], strides = [1, 1]} : vector<8x512xf32> to vector<8x128xf32>
    %cst_20 = arith.constant 5.000000e-01 : f32
    %31 = vector.broadcast %cst_20 : f32 to vector<8x128xf32>
    %32 = arith.mulf %31, %30 : vector<8x128xf32>
    %33 = math.tanh %32 : vector<8x128xf32>
    %cst_21 = arith.constant 1.000000e+00 : f32
    %34 = vector.broadcast %cst_21 : f32 to vector<8x128xf32>
    %35 = arith.addf %33, %34 : vector<8x128xf32>
    %cst_22 = arith.constant 5.000000e-01 : f32
    %36 = vector.broadcast %cst_22 : f32 to vector<8x128xf32>
    %37 = arith.mulf %36, %35 : vector<8x128xf32>
    %38 = vector.extract_strided_slice %29 {offsets = [0, 128], sizes = [8, 128], strides = [1, 1]} : vector<8x512xf32> to vector<8x128xf32>
    %cst_23 = arith.constant 5.000000e-01 : f32
    %39 = vector.broadcast %cst_23 : f32 to vector<8x128xf32>
    %40 = arith.mulf %39, %38 : vector<8x128xf32>
    %41 = math.tanh %40 : vector<8x128xf32>
    %cst_24 = arith.constant 1.000000e+00 : f32
    %42 = vector.broadcast %cst_24 : f32 to vector<8x128xf32>
    %43 = arith.addf %41, %42 : vector<8x128xf32>
    %cst_25 = arith.constant 5.000000e-01 : f32
    %44 = vector.broadcast %cst_25 : f32 to vector<8x128xf32>
    %45 = arith.mulf %44, %43 : vector<8x128xf32>
    %46 = vector.extract_strided_slice %29 {offsets = [0, 256], sizes = [8, 128], strides = [1, 1]} : vector<8x512xf32> to vector<8x128xf32>
    %47 = math.tanh %46 : vector<8x128xf32>
    %48 = vector.extract_strided_slice %29 {offsets = [0, 384], sizes = [8, 128], strides = [1, 1]} : vector<8x512xf32> to vector<8x128xf32>
    %cst_26 = arith.constant 5.000000e-01 : f32
    %49 = vector.broadcast %cst_26 : f32 to vector<8x128xf32>
    %50 = arith.mulf %49, %48 : vector<8x128xf32>
    %51 = math.tanh %50 : vector<8x128xf32>
    %cst_27 = arith.constant 1.000000e+00 : f32
    %52 = vector.broadcast %cst_27 : f32 to vector<8x128xf32>
    %53 = arith.addf %51, %52 : vector<8x128xf32>
    %cst_28 = arith.constant 5.000000e-01 : f32
    %54 = vector.broadcast %cst_28 : f32 to vector<8x128xf32>
    %55 = arith.mulf %54, %53 : vector<8x128xf32>
    %56 = arith.mulf %45, %26 : vector<8x128xf32>
    %57 = arith.mulf %37, %47 : vector<8x128xf32>
    %58 = arith.addf %56, %57 : vector<8x128xf32>
    %59 = math.tanh %58 : vector<8x128xf32>
    %60 = arith.mulf %55, %59 : vector<8x128xf32>
    %c0_29 = arith.constant 0 : index
    %c0_30 = arith.constant 0 : index
    %61 = vector.load %arg16[%c0_29, %c0_30] : memref<64x128xf32, #tpu.memory_space<vmem>>, vector<8x128xf32>
    tpu.vector_store %arg16[%c0_29, %c0_30], %60 {strides = array<i32>} : memref<64x128xf32, #tpu.memory_space<vmem>>, vector<8x128xf32>,
    %62 = vector.extract_strided_slice %21 {offsets = [8, 0], sizes = [8, 512], strides = [1, 1]} : vector<64x512xf32> to vector<8x512xf32>
    %cst_31 = arith.constant dense<0.000000e+00> : vector<8x512xf32>
    %63 = tpu.matmul %60, %24, %cst_31 {dimension_numbers = #tpu.dot_dimension_numbers<[1], [0], [0], [1], [0, 0, 1, 1], [], []>} : vector<8x128xf32>, vector<128x512xf32>, vector<8x512xf32> -> vector<8x512xf32>
    %64 = arith.addf %62, %63 : vector<8x512xf32>
    %65 = vector.extract_strided_slice %64 {offsets = [0, 0], sizes = [8, 128], strides = [1, 1]} : vector<8x512xf32> to vector<8x128xf32>
    %cst_32 = arith.constant 5.000000e-01 : f32
    %66 = vector.broadcast %cst_32 : f32 to vector<8x128xf32>
    %67 = arith.mulf %66, %65 : vector<8x128xf32>
    %68 = math.tanh %67 : vector<8x128xf32>
    %cst_33 = arith.constant 1.000000e+00 : f32
    %69 = vector.broadcast %cst_33 : f32 to vector<8x128xf32>
    %70 = arith.addf %68, %69 : vector<8x128xf32>
    %cst_34 = arith.constant 5.000000e-01 : f32
    %71 = vector.broadcast %cst_34 : f32 to vector<8x128xf32>
    %72 = arith.mulf %71, %70 : vector<8x128xf32>
    %73 = vector.extract_strided_slice %64 {offsets = [0, 128], sizes = [8, 128], strides = [1, 1]} : vector<8x512xf32> to vector<8x128xf32>
    %cst_35 = arith.constant 5.000000e-01 : f32
    %74 = vector.broadcast %cst_35 : f32 to vector<8x128xf32>
    %75 = arith.mulf %74, %73 : vector<8x128xf32>
    %76 = math.tanh %75 : vector<8x128xf32>
    %cst_36 = arith.constant 1.000000e+00 : f32
    %77 = vector.broadcast %cst_36 : f32 to vector<8x128xf32>
    %78 = arith.addf %76, %77 : vector<8x128xf32>
    %cst_37 = arith.constant 5.000000e-01 : f32
    %79 = vector.broadcast %cst_37 : f32 to vector<8x128xf32>
    %80 = arith.mulf %79, %78 : vector<8x128xf32>
    %81 = vector.extract_strided_slice %64 {offsets = [0, 256], sizes = [8, 128], strides = [1, 1]} : vector<8x512xf32> to vector<8x128xf32>
    %82 = math.tanh %81 : vector<8x128xf32>
    %83 = vector.extract_strided_slice %64 {offsets = [0, 384], sizes = [8, 128], strides = [1, 1]} : vector<8x512xf32> to vector<8x128xf32>
    %cst_38 = arith.constant 5.000000e-01 : f32
    %84 = vector.broadcast %cst_38 : f32 to vector<8x128xf32>
    %85 = arith.mulf %84, %83 : vector<8x128xf32>
    %86 = math.tanh %85 : vector<8x128xf32>
    %cst_39 = arith.constant 1.000000e+00 : f32
    %87 = vector.broadcast %cst_39 : f32 to vector<8x128xf32>
    %88 = arith.addf %86, %87 : vector<8x128xf32>
    %cst_40 = arith.constant 5.000000e-01 : f32
    %89 = vector.broadcast %cst_40 : f32 to vector<8x128xf32>
    %90 = arith.mulf %89, %88 : vector<8x128xf32>
    %91 = arith.mulf %80, %58 : vector<8x128xf32>
    %92 = arith.mulf %72, %82 : vector<8x128xf32>
    %93 = arith.addf %91, %92 : vector<8x128xf32>
    %94 = math.tanh %93 : vector<8x128xf32>
    %95 = arith.mulf %90, %94 : vector<8x128xf32>
    %c8 = arith.constant 8 : index
    %c0_41 = arith.constant 0 : index
    %96 = vector.load %arg16[%c8, %c0_41] : memref<64x128xf32, #tpu.memory_space<vmem>>, vector<8x128xf32>
    tpu.vector_store %arg16[%c8, %c0_41], %95 {strides = array<i32>} : memref<64x128xf32, #tpu.memory_space<vmem>>, vector<8x128xf32>,
    %97 = vector.extract_strided_slice %21 {offsets = [16, 0], sizes = [8, 512], strides = [1, 1]} : vector<64x512xf32> to vector<8x512xf32>
    %cst_42 = arith.constant dense<0.000000e+00> : vector<8x512xf32>
    %98 = tpu.matmul %95, %24, %cst_42 {dimension_numbers = #tpu.dot_dimension_numbers<[1], [0], [0], [1], [0, 0, 1, 1], [], []>} : vector<8x128xf32>, vector<128x512xf32>, vector<8x512xf32> -> vector<8x512xf32>
    %99 = arith.addf %97, %98 : vector<8x512xf32>
    %100 = vector.extract_strided_slice %99 {offsets = [0, 0], sizes = [8, 128], strides = [1, 1]} : vector<8x512xf32> to vector<8x128xf32>
    %cst_43 = arith.constant 5.000000e-01 : f32
    %101 = vector.broadcast %cst_43 : f32 to vector<8x128xf32>
    %102 = arith.mulf %101, %100 : vector<8x128xf32>
    %103 = math.tanh %102 : vector<8x128xf32>
    %cst_44 = arith.constant 1.000000e+00 : f32
    %104 = vector.broadcast %cst_44 : f32 to vector<8x128xf32>
    %105 = arith.addf %103, %104 : vector<8x128xf32>
    %cst_45 = arith.constant 5.000000e-01 : f32
    %106 = vector.broadcast %cst_45 : f32 to vector<8x128xf32>
    %107 = arith.mulf %106, %105 : vector<8x128xf32>
    %108 = vector.extract_strided_slice %99 {offsets = [0, 128], sizes = [8, 128], strides = [1, 1]} : vector<8x512xf32> to vector<8x128xf32>
    %cst_46 = arith.constant 5.000000e-01 : f32
    %109 = vector.broadcast %cst_46 : f32 to vector<8x128xf32>
    %110 = arith.mulf %109, %108 : vector<8x128xf32>
    %111 = math.tanh %110 : vector<8x128xf32>
    %cst_47 = arith.constant 1.000000e+00 : f32
    %112 = vector.broadcast %cst_47 : f32 to vector<8x128xf32>
    %113 = arith.addf %111, %112 : vector<8x128xf32>
    %cst_48 = arith.constant 5.000000e-01 : f32
    %114 = vector.broadcast %cst_48 : f32 to vector<8x128xf32>
    %115 = arith.mulf %114, %113 : vector<8x128xf32>
    %116 = vector.extract_strided_slice %99 {offsets = [0, 256], sizes = [8, 128], strides = [1, 1]} : vector<8x512xf32> to vector<8x128xf32>
    %117 = math.tanh %116 : vector<8x128xf32>
    %118 = vector.extract_strided_slice %99 {offsets = [0, 384], sizes = [8, 128], strides = [1, 1]} : vector<8x512xf32> to vector<8x128xf32>
    %cst_49 = arith.constant 5.000000e-01 : f32
    %119 = vector.broadcast %cst_49 : f32 to vector<8x128xf32>
    %120 = arith.mulf %119, %118 : vector<8x128xf32>
    %121 = math.tanh %120 : vector<8x128xf32>
    %cst_50 = arith.constant 1.000000e+00 : f32
    %122 = vector.broadcast %cst_50 : f32 to vector<8x128xf32>
    %123 = arith.addf %121, %122 : vector<8x128xf32>
    %cst_51 = arith.constant 5.000000e-01 : f32
    %124 = vector.broadcast %cst_51 : f32 to vector<8x128xf32>
    %125 = arith.mulf %124, %123 : vector<8x128xf32>
    %126 = arith.mulf %115, %93 : vector<8x128xf32>
    %127 = arith.mulf %107, %117 : vector<8x128xf32>
    %128 = arith.addf %126, %127 : vector<8x128xf32>
    %129 = math.tanh %128 : vector<8x128xf32>
    %130 = arith.mulf %125, %129 : vector<8x128xf32>
    %c16 = arith.constant 16 : index
    %c0_52 = arith.constant 0 : index
    %131 = vector.load %arg16[%c16, %c0_52] : memref<64x128xf32, #tpu.memory_space<vmem>>, vector<8x128xf32>
    tpu.vector_store %arg16[%c16, %c0_52], %130 {strides = array<i32>} : memref<64x128xf32, #tpu.memory_space<vmem>>, vector<8x128xf32>,
    %132 = vector.extract_strided_slice %21 {offsets = [24, 0], sizes = [8, 512], strides = [1, 1]} : vector<64x512xf32> to vector<8x512xf32>
    %cst_53 = arith.constant dense<0.000000e+00> : vector<8x512xf32>
    %133 = tpu.matmul %130, %24, %cst_53 {dimension_numbers = #tpu.dot_dimension_numbers<[1], [0], [0], [1], [0, 0, 1, 1], [], []>} : vector<8x128xf32>, vector<128x512xf32>, vector<8x512xf32> -> vector<8x512xf32>
    %134 = arith.addf %132, %133 : vector<8x512xf32>
    %135 = vector.extract_strided_slice %134 {offsets = [0, 0], sizes = [8, 128], strides = [1, 1]} : vector<8x512xf32> to vector<8x128xf32>
    %cst_54 = arith.constant 5.000000e-01 : f32
    %136 = vector.broadcast %cst_54 : f32 to vector<8x128xf32>
    %137 = arith.mulf %136, %135 : vector<8x128xf32>
    %138 = math.tanh %137 : vector<8x128xf32>
    %cst_55 = arith.constant 1.000000e+00 : f32
    %139 = vector.broadcast %cst_55 : f32 to vector<8x128xf32>
    %140 = arith.addf %138, %139 : vector<8x128xf32>
    %cst_56 = arith.constant 5.000000e-01 : f32
    %141 = vector.broadcast %cst_56 : f32 to vector<8x128xf32>
    %142 = arith.mulf %141, %140 : vector<8x128xf32>
    %143 = vector.extract_strided_slice %134 {offsets = [0, 128], sizes = [8, 128], strides = [1, 1]} : vector<8x512xf32> to vector<8x128xf32>
    %cst_57 = arith.constant 5.000000e-01 : f32
    %144 = vector.broadcast %cst_57 : f32 to vector<8x128xf32>
    %145 = arith.mulf %144, %143 : vector<8x128xf32>
    %146 = math.tanh %145 : vector<8x128xf32>
    %cst_58 = arith.constant 1.000000e+00 : f32
    %147 = vector.broadcast %cst_58 : f32 to vector<8x128xf32>
    %148 = arith.addf %146, %147 : vector<8x128xf32>
    %cst_59 = arith.constant 5.000000e-01 : f32
    %149 = vector.broadcast %cst_59 : f32 to vector<8x128xf32>
    %150 = arith.mulf %149, %148 : vector<8x128xf32>
    %151 = vector.extract_strided_slice %134 {offsets = [0, 256], sizes = [8, 128], strides = [1, 1]} : vector<8x512xf32> to vector<8x128xf32>
    %152 = math.tanh %151 : vector<8x128xf32>
    %153 = vector.extract_strided_slice %134 {offsets = [0, 384], sizes = [8, 128], strides = [1, 1]} : vector<8x512xf32> to vector<8x128xf32>
    %cst_60 = arith.constant 5.000000e-01 : f32
    %154 = vector.broadcast %cst_60 : f32 to vector<8x128xf32>
    %155 = arith.mulf %154, %153 : vector<8x128xf32>
    %156 = math.tanh %155 : vector<8x128xf32>
    %cst_61 = arith.constant 1.000000e+00 : f32
    %157 = vector.broadcast %cst_61 : f32 to vector<8x128xf32>
    %158 = arith.addf %156, %157 : vector<8x128xf32>
    %cst_62 = arith.constant 5.000000e-01 : f32
    %159 = vector.broadcast %cst_62 : f32 to vector<8x128xf32>
    %160 = arith.mulf %159, %158 : vector<8x128xf32>
    %161 = arith.mulf %150, %128 : vector<8x128xf32>
    %162 = arith.mulf %142, %152 : vector<8x128xf32>
    %163 = arith.addf %161, %162 : vector<8x128xf32>
    %164 = math.tanh %163 : vector<8x128xf32>
    %165 = arith.mulf %160, %164 : vector<8x128xf32>
    %c24 = arith.constant 24 : index
    %c0_63 = arith.constant 0 : index
    %166 = vector.load %arg16[%c24, %c0_63] : memref<64x128xf32, #tpu.memory_space<vmem>>, vector<8x128xf32>
    tpu.vector_store %arg16[%c24, %c0_63], %165 {strides = array<i32>} : memref<64x128xf32, #tpu.memory_space<vmem>>, vector<8x128xf32>,
    %167 = vector.extract_strided_slice %21 {offsets = [32, 0], sizes = [8, 512], strides = [1, 1]} : vector<64x512xf32> to vector<8x512xf32>
    %cst_64 = arith.constant dense<0.000000e+00> : vector<8x512xf32>
    %168 = tpu.matmul %165, %24, %cst_64 {dimension_numbers = #tpu.dot_dimension_numbers<[1], [0], [0], [1], [0, 0, 1, 1], [], []>} : vector<8x128xf32>, vector<128x512xf32>, vector<8x512xf32> -> vector<8x512xf32>
    %169 = arith.addf %167, %168 : vector<8x512xf32>
    %170 = vector.extract_strided_slice %169 {offsets = [0, 0], sizes = [8, 128], strides = [1, 1]} : vector<8x512xf32> to vector<8x128xf32>
    %cst_65 = arith.constant 5.000000e-01 : f32
    %171 = vector.broadcast %cst_65 : f32 to vector<8x128xf32>
    %172 = arith.mulf %171, %170 : vector<8x128xf32>
    %173 = math.tanh %172 : vector<8x128xf32>
    %cst_66 = arith.constant 1.000000e+00 : f32
    %174 = vector.broadcast %cst_66 : f32 to vector<8x128xf32>
    %175 = arith.addf %173, %174 : vector<8x128xf32>
    %cst_67 = arith.constant 5.000000e-01 : f32
    %176 = vector.broadcast %cst_67 : f32 to vector<8x128xf32>
    %177 = arith.mulf %176, %175 : vector<8x128xf32>
    %178 = vector.extract_strided_slice %169 {offsets = [0, 128], sizes = [8, 128], strides = [1, 1]} : vector<8x512xf32> to vector<8x128xf32>
    %cst_68 = arith.constant 5.000000e-01 : f32
    %179 = vector.broadcast %cst_68 : f32 to vector<8x128xf32>
    %180 = arith.mulf %179, %178 : vector<8x128xf32>
    %181 = math.tanh %180 : vector<8x128xf32>
    %cst_69 = arith.constant 1.000000e+00 : f32
    %182 = vector.broadcast %cst_69 : f32 to vector<8x128xf32>
    %183 = arith.addf %181, %182 : vector<8x128xf32>
    %cst_70 = arith.constant 5.000000e-01 : f32
    %184 = vector.broadcast %cst_70 : f32 to vector<8x128xf32>
    %185 = arith.mulf %184, %183 : vector<8x128xf32>
    %186 = vector.extract_strided_slice %169 {offsets = [0, 256], sizes = [8, 128], strides = [1, 1]} : vector<8x512xf32> to vector<8x128xf32>
    %187 = math.tanh %186 : vector<8x128xf32>
    %188 = vector.extract_strided_slice %169 {offsets = [0, 384], sizes = [8, 128], strides = [1, 1]} : vector<8x512xf32> to vector<8x128xf32>
    %cst_71 = arith.constant 5.000000e-01 : f32
    %189 = vector.broadcast %cst_71 : f32 to vector<8x128xf32>
    %190 = arith.mulf %189, %188 : vector<8x128xf32>
    %191 = math.tanh %190 : vector<8x128xf32>
    %cst_72 = arith.constant 1.000000e+00 : f32
    %192 = vector.broadcast %cst_72 : f32 to vector<8x128xf32>
    %193 = arith.addf %191, %192 : vector<8x128xf32>
    %cst_73 = arith.constant 5.000000e-01 : f32
    %194 = vector.broadcast %cst_73 : f32 to vector<8x128xf32>
    %195 = arith.mulf %194, %193 : vector<8x128xf32>
    %196 = arith.mulf %185, %163 : vector<8x128xf32>
    %197 = arith.mulf %177, %187 : vector<8x128xf32>
    %198 = arith.addf %196, %197 : vector<8x128xf32>
    %199 = math.tanh %198 : vector<8x128xf32>
    %200 = arith.mulf %195, %199 : vector<8x128xf32>
    %c32 = arith.constant 32 : index
    %c0_74 = arith.constant 0 : index
    %201 = vector.load %arg16[%c32, %c0_74] : memref<64x128xf32, #tpu.memory_space<vmem>>, vector<8x128xf32>
    tpu.vector_store %arg16[%c32, %c0_74], %200 {strides = array<i32>} : memref<64x128xf32, #tpu.memory_space<vmem>>, vector<8x128xf32>,
    %202 = vector.extract_strided_slice %21 {offsets = [40, 0], sizes = [8, 512], strides = [1, 1]} : vector<64x512xf32> to vector<8x512xf32>
    %cst_75 = arith.constant dense<0.000000e+00> : vector<8x512xf32>
    %203 = tpu.matmul %200, %24, %cst_75 {dimension_numbers = #tpu.dot_dimension_numbers<[1], [0], [0], [1], [0, 0, 1, 1], [], []>} : vector<8x128xf32>, vector<128x512xf32>, vector<8x512xf32> -> vector<8x512xf32>
    %204 = arith.addf %202, %203 : vector<8x512xf32>
    %205 = vector.extract_strided_slice %204 {offsets = [0, 0], sizes = [8, 128], strides = [1, 1]} : vector<8x512xf32> to vector<8x128xf32>
    %cst_76 = arith.constant 5.000000e-01 : f32
    %206 = vector.broadcast %cst_76 : f32 to vector<8x128xf32>
    %207 = arith.mulf %206, %205 : vector<8x128xf32>
    %208 = math.tanh %207 : vector<8x128xf32>
    %cst_77 = arith.constant 1.000000e+00 : f32
    %209 = vector.broadcast %cst_77 : f32 to vector<8x128xf32>
    %210 = arith.addf %208, %209 : vector<8x128xf32>
    %cst_78 = arith.constant 5.000000e-01 : f32
    %211 = vector.broadcast %cst_78 : f32 to vector<8x128xf32>
    %212 = arith.mulf %211, %210 : vector<8x128xf32>
    %213 = vector.extract_strided_slice %204 {offsets = [0, 128], sizes = [8, 128], strides = [1, 1]} : vector<8x512xf32> to vector<8x128xf32>
    %cst_79 = arith.constant 5.000000e-01 : f32
    %214 = vector.broadcast %cst_79 : f32 to vector<8x128xf32>
    %215 = arith.mulf %214, %213 : vector<8x128xf32>
    %216 = math.tanh %215 : vector<8x128xf32>
    %cst_80 = arith.constant 1.000000e+00 : f32
    %217 = vector.broadcast %cst_80 : f32 to vector<8x128xf32>
    %218 = arith.addf %216, %217 : vector<8x128xf32>
    %cst_81 = arith.constant 5.000000e-01 : f32
    %219 = vector.broadcast %cst_81 : f32 to vector<8x128xf32>
    %220 = arith.mulf %219, %218 : vector<8x128xf32>
    %221 = vector.extract_strided_slice %204 {offsets = [0, 256], sizes = [8, 128], strides = [1, 1]} : vector<8x512xf32> to vector<8x128xf32>
    %222 = math.tanh %221 : vector<8x128xf32>
    %223 = vector.extract_strided_slice %204 {offsets = [0, 384], sizes = [8, 128], strides = [1, 1]} : vector<8x512xf32> to vector<8x128xf32>
    %cst_82 = arith.constant 5.000000e-01 : f32
    %224 = vector.broadcast %cst_82 : f32 to vector<8x128xf32>
    %225 = arith.mulf %224, %223 : vector<8x128xf32>
    %226 = math.tanh %225 : vector<8x128xf32>
    %cst_83 = arith.constant 1.000000e+00 : f32
    %227 = vector.broadcast %cst_83 : f32 to vector<8x128xf32>
    %228 = arith.addf %226, %227 : vector<8x128xf32>
    %cst_84 = arith.constant 5.000000e-01 : f32
    %229 = vector.broadcast %cst_84 : f32 to vector<8x128xf32>
    %230 = arith.mulf %229, %228 : vector<8x128xf32>
    %231 = arith.mulf %220, %198 : vector<8x128xf32>
    %232 = arith.mulf %212, %222 : vector<8x128xf32>
    %233 = arith.addf %231, %232 : vector<8x128xf32>
    %234 = math.tanh %233 : vector<8x128xf32>
    %235 = arith.mulf %230, %234 : vector<8x128xf32>
    %c40 = arith.constant 40 : index
    %c0_85 = arith.constant 0 : index
    %236 = vector.load %arg16[%c40, %c0_85] : memref<64x128xf32, #tpu.memory_space<vmem>>, vector<8x128xf32>
    tpu.vector_store %arg16[%c40, %c0_85], %235 {strides = array<i32>} : memref<64x128xf32, #tpu.memory_space<vmem>>, vector<8x128xf32>,
    %237 = vector.extract_strided_slice %21 {offsets = [48, 0], sizes = [8, 512], strides = [1, 1]} : vector<64x512xf32> to vector<8x512xf32>
    %cst_86 = arith.constant dense<0.000000e+00> : vector<8x512xf32>
    %238 = tpu.matmul %235, %24, %cst_86 {dimension_numbers = #tpu.dot_dimension_numbers<[1], [0], [0], [1], [0, 0, 1, 1], [], []>} : vector<8x128xf32>, vector<128x512xf32>, vector<8x512xf32> -> vector<8x512xf32>
    %239 = arith.addf %237, %238 : vector<8x512xf32>
    %240 = vector.extract_strided_slice %239 {offsets = [0, 0], sizes = [8, 128], strides = [1, 1]} : vector<8x512xf32> to vector<8x128xf32>
    %cst_87 = arith.constant 5.000000e-01 : f32
    %241 = vector.broadcast %cst_87 : f32 to vector<8x128xf32>
    %242 = arith.mulf %241, %240 : vector<8x128xf32>
    %243 = math.tanh %242 : vector<8x128xf32>
    %cst_88 = arith.constant 1.000000e+00 : f32
    %244 = vector.broadcast %cst_88 : f32 to vector<8x128xf32>
    %245 = arith.addf %243, %244 : vector<8x128xf32>
    %cst_89 = arith.constant 5.000000e-01 : f32
    %246 = vector.broadcast %cst_89 : f32 to vector<8x128xf32>
    %247 = arith.mulf %246, %245 : vector<8x128xf32>
    %248 = vector.extract_strided_slice %239 {offsets = [0, 128], sizes = [8, 128], strides = [1, 1]} : vector<8x512xf32> to vector<8x128xf32>
    %cst_90 = arith.constant 5.000000e-01 : f32
    %249 = vector.broadcast %cst_90 : f32 to vector<8x128xf32>
    %250 = arith.mulf %249, %248 : vector<8x128xf32>
    %251 = math.tanh %250 : vector<8x128xf32>
    %cst_91 = arith.constant 1.000000e+00 : f32
    %252 = vector.broadcast %cst_91 : f32 to vector<8x128xf32>
    %253 = arith.addf %251, %252 : vector<8x128xf32>
    %cst_92 = arith.constant 5.000000e-01 : f32
    %254 = vector.broadcast %cst_92 : f32 to vector<8x128xf32>
    %255 = arith.mulf %254, %253 : vector<8x128xf32>
    %256 = vector.extract_strided_slice %239 {offsets = [0, 256], sizes = [8, 128], strides = [1, 1]} : vector<8x512xf32> to vector<8x128xf32>
    %257 = math.tanh %256 : vector<8x128xf32>
    %258 = vector.extract_strided_slice %239 {offsets = [0, 384], sizes = [8, 128], strides = [1, 1]} : vector<8x512xf32> to vector<8x128xf32>
    %cst_93 = arith.constant 5.000000e-01 : f32
    %259 = vector.broadcast %cst_93 : f32 to vector<8x128xf32>
    %260 = arith.mulf %259, %258 : vector<8x128xf32>
    %261 = math.tanh %260 : vector<8x128xf32>
    %cst_94 = arith.constant 1.000000e+00 : f32
    %262 = vector.broadcast %cst_94 : f32 to vector<8x128xf32>
    %263 = arith.addf %261, %262 : vector<8x128xf32>
    %cst_95 = arith.constant 5.000000e-01 : f32
    %264 = vector.broadcast %cst_95 : f32 to vector<8x128xf32>
    %265 = arith.mulf %264, %263 : vector<8x128xf32>
    %266 = arith.mulf %255, %233 : vector<8x128xf32>
    %267 = arith.mulf %247, %257 : vector<8x128xf32>
    %268 = arith.addf %266, %267 : vector<8x128xf32>
    %269 = math.tanh %268 : vector<8x128xf32>
    %270 = arith.mulf %265, %269 : vector<8x128xf32>
    %c48 = arith.constant 48 : index
    %c0_96 = arith.constant 0 : index
    %271 = vector.load %arg16[%c48, %c0_96] : memref<64x128xf32, #tpu.memory_space<vmem>>, vector<8x128xf32>
    tpu.vector_store %arg16[%c48, %c0_96], %270 {strides = array<i32>} : memref<64x128xf32, #tpu.memory_space<vmem>>, vector<8x128xf32>,
    %272 = vector.extract_strided_slice %21 {offsets = [56, 0], sizes = [8, 512], strides = [1, 1]} : vector<64x512xf32> to vector<8x512xf32>
    %cst_97 = arith.constant dense<0.000000e+00> : vector<8x512xf32>
    %273 = tpu.matmul %270, %24, %cst_97 {dimension_numbers = #tpu.dot_dimension_numbers<[1], [0], [0], [1], [0, 0, 1, 1], [], []>} : vector<8x128xf32>, vector<128x512xf32>, vector<8x512xf32> -> vector<8x512xf32>
    %274 = arith.addf %272, %273 : vector<8x512xf32>
    %275 = vector.extract_strided_slice %274 {offsets = [0, 0], sizes = [8, 128], strides = [1, 1]} : vector<8x512xf32> to vector<8x128xf32>
    %cst_98 = arith.constant 5.000000e-01 : f32
    %276 = vector.broadcast %cst_98 : f32 to vector<8x128xf32>
    %277 = arith.mulf %276, %275 : vector<8x128xf32>
    %278 = math.tanh %277 : vector<8x128xf32>
    %cst_99 = arith.constant 1.000000e+00 : f32
    %279 = vector.broadcast %cst_99 : f32 to vector<8x128xf32>
    %280 = arith.addf %278, %279 : vector<8x128xf32>
    %cst_100 = arith.constant 5.000000e-01 : f32
    %281 = vector.broadcast %cst_100 : f32 to vector<8x128xf32>
    %282 = arith.mulf %281, %280 : vector<8x128xf32>
    %283 = vector.extract_strided_slice %274 {offsets = [0, 128], sizes = [8, 128], strides = [1, 1]} : vector<8x512xf32> to vector<8x128xf32>
    %cst_101 = arith.constant 5.000000e-01 : f32
    %284 = vector.broadcast %cst_101 : f32 to vector<8x128xf32>
    %285 = arith.mulf %284, %283 : vector<8x128xf32>
    %286 = math.tanh %285 : vector<8x128xf32>
    %cst_102 = arith.constant 1.000000e+00 : f32
    %287 = vector.broadcast %cst_102 : f32 to vector<8x128xf32>
    %288 = arith.addf %286, %287 : vector<8x128xf32>
    %cst_103 = arith.constant 5.000000e-01 : f32
    %289 = vector.broadcast %cst_103 : f32 to vector<8x128xf32>
    %290 = arith.mulf %289, %288 : vector<8x128xf32>
    %291 = vector.extract_strided_slice %274 {offsets = [0, 256], sizes = [8, 128], strides = [1, 1]} : vector<8x512xf32> to vector<8x128xf32>
    %292 = math.tanh %291 : vector<8x128xf32>
    %293 = vector.extract_strided_slice %274 {offsets = [0, 384], sizes = [8, 128], strides = [1, 1]} : vector<8x512xf32> to vector<8x128xf32>
    %cst_104 = arith.constant 5.000000e-01 : f32
    %294 = vector.broadcast %cst_104 : f32 to vector<8x128xf32>
    %295 = arith.mulf %294, %293 : vector<8x128xf32>
    %296 = math.tanh %295 : vector<8x128xf32>
    %cst_105 = arith.constant 1.000000e+00 : f32
    %297 = vector.broadcast %cst_105 : f32 to vector<8x128xf32>
    %298 = arith.addf %296, %297 : vector<8x128xf32>
    %cst_106 = arith.constant 5.000000e-01 : f32
    %299 = vector.broadcast %cst_106 : f32 to vector<8x128xf32>
    %300 = arith.mulf %299, %298 : vector<8x128xf32>
    %301 = arith.mulf %290, %268 : vector<8x128xf32>
    %302 = arith.mulf %282, %292 : vector<8x128xf32>
    %303 = arith.addf %301, %302 : vector<8x128xf32>
    %304 = math.tanh %303 : vector<8x128xf32>
    %305 = arith.mulf %300, %304 : vector<8x128xf32>
    %c56 = arith.constant 56 : index
    %c0_107 = arith.constant 0 : index
    %306 = vector.load %arg16[%c56, %c0_107] : memref<64x128xf32, #tpu.memory_space<vmem>>, vector<8x128xf32>
    tpu.vector_store %arg16[%c56, %c0_107], %305 {strides = array<i32>} : memref<64x128xf32, #tpu.memory_space<vmem>>, vector<8x128xf32>,
    %c0_108 = arith.constant 0 : index
    %c0_109 = arith.constant 0 : index
    %307 = vector.load %arg11[%c0_108, %c0_109] : memref<8x128xf32, #tpu.memory_space<vmem>>, vector<8x128xf32>
    tpu.vector_store %arg11[%c0_108, %c0_109], %305 {strides = array<i32>} : memref<8x128xf32, #tpu.memory_space<vmem>>, vector<8x128xf32>,
    %c0_110 = arith.constant 0 : index
    %c0_111 = arith.constant 0 : index
    %308 = vector.load %arg12[%c0_110, %c0_111] : memref<8x128xf32, #tpu.memory_space<vmem>>, vector<8x128xf32>
    tpu.vector_store %arg12[%c0_110, %c0_111], %303 {strides = array<i32>} : memref<8x128xf32, #tpu.memory_space<vmem>>, vector<8x128xf32>,
    %c1_i32_112 = arith.constant 1 : i32
    %309 = tpu.memref_slice %arg17[%c1_i32_112] : memref<3x!tpu.dma_semaphore, #tpu.memory_space<semaphore_mem>> -> memref<1x!tpu.dma_semaphore, #tpu.memory_space<semaphore_mem>>
    %310 = tpu.memref_squeeze %309 : memref<1x!tpu.dma_semaphore, #tpu.memory_space<semaphore_mem>> -> memref<!tpu.dma_semaphore, #tpu.memory_space<semaphore_mem>>
    tpu.wait_dma2 semaphore(%310 : memref<!tpu.dma_semaphore, #tpu.memory_space<semaphore_mem>>) src(%arg8 : memref<128x128xf32, #tpu.memory_space<any>>) dst(%arg14 : memref<128x128xf32, #tpu.memory_space<vmem>>)
    %c2_i32_113 = arith.constant 2 : i32
    %311 = tpu.memref_slice %arg17[%c2_i32_113] : memref<3x!tpu.dma_semaphore, #tpu.memory_space<semaphore_mem>> -> memref<1x!tpu.dma_semaphore, #tpu.memory_space<semaphore_mem>>
    %312 = tpu.memref_squeeze %311 : memref<1x!tpu.dma_semaphore, #tpu.memory_space<semaphore_mem>> -> memref<!tpu.dma_semaphore, #tpu.memory_space<semaphore_mem>>
    tpu.wait_dma2 semaphore(%312 : memref<!tpu.dma_semaphore, #tpu.memory_space<semaphore_mem>>) src(%arg9 : memref<1x128xf32, #tpu.memory_space<any>>) dst(%arg15 : memref<1x128xf32, #tpu.memory_space<vmem>>)
    %c0_114 = arith.constant 0 : index
    %c0_115 = arith.constant 0 : index
    %313 = vector.load %arg16[%c0_114, %c0_115] : memref<64x128xf32, #tpu.memory_space<vmem>>, vector<64x128xf32>
    %c0_116 = arith.constant 0 : index
    %c0_117 = arith.constant 0 : index
    %314 = vector.load %arg14[%c0_116, %c0_117] : memref<128x128xf32, #tpu.memory_space<vmem>>, vector<128x128xf32>
    %cst_118 = arith.constant dense<0.000000e+00> : vector<64x128xf32>
    %315 = tpu.matmul %313, %314, %cst_118 {dimension_numbers = #tpu.dot_dimension_numbers<[1], [0], [0], [1], [0, 0, 1, 1], [], []>} : vector<64x128xf32>, vector<128x128xf32>, vector<64x128xf32> -> vector<64x128xf32>
    %c0_119 = arith.constant 0 : index
    %c0_120 = arith.constant 0 : index
    %316 = vector.load %arg15[%c0_119, %c0_120] : memref<1x128xf32, #tpu.memory_space<vmem>>, vector<1x128xf32>
    %317 = vector.broadcast %316 : vector<1x128xf32> to vector<64x128xf32>
    %318 = arith.addf %315, %317 : vector<64x128xf32>
    %319 = arith.negf %318 : vector<64x128xf32>
    %320 = math.exp %319 : vector<64x128xf32>
    %cst_121 = arith.constant 1.000000e+00 : f32
    %321 = vector.broadcast %cst_121 : f32 to vector<64x128xf32>
    %322 = arith.addf %321, %320 : vector<64x128xf32>
    %323 = arith.divf %321, %322 : vector<64x128xf32>
    %c0_122 = arith.constant 0 : index
    %c0_123 = arith.constant 0 : index
    %324 = vector.load %arg10[%c0_122, %c0_123] : memref<64x128xf32, #tpu.memory_space<vmem>>, vector<64x128xf32>
    tpu.vector_store %arg10[%c0_122, %c0_123], %323 {strides = array<i32>} : memref<64x128xf32, #tpu.memory_space<vmem>>, vector<64x128xf32>,
    return
  }
}

</mosaic_0001>

<llo_original>
// kernel: tester_forward.1
$region0: #{tester_forward.1}
  #allocation0 [shape = 'u32[]', space=smem, size = 0x4, offset = 0x4, fixed_abs, tag = 'smem constant byte address 0x4 - core index']
  #allocation1 [shape = 'u32[144,128]{1,0:T(1,128)}', space=vmem, size = 0x12000, scoped, tag = 'internal scratch']
  #allocation2 [shape = 'f32[128,512]{1,0:T(8,128)}', space=vmem, size = 0x40000, scoped, tag = 'scratch operand']
  #allocation3 [shape = 'f32[128,128]{1,0:T(8,128)}', space=vmem, size = 0x10000, scoped, tag = 'scratch operand']
  #allocation4 [shape = 'f32[1,128]{1,0:T(1,128)}', space=vmem, size = 0x200, scoped, tag = 'scratch operand']
  #allocation5 [shape = 'f32[64,128]{1,0:T(8,128)}', space=vmem, size = 0x8000, scoped, tag = 'scratch operand']
  #allocation6 [shape = 's32[3]{0}', space=sflag, size = 0xc, scoped, tag = 'scratch operand']
  #allocation11 [shape = 's32[]', space=sflag, size = 0x4, offset = 0, fixed_abs, tag = 'sflag constant byte address 0x0 - dummy sync flag']
  #allocation12 [shape = 's32[]', space=sflag, size = 0x4, offset = 0, fixed_abs, tag = 'sflag constant byte address 0x0 - dummy sync flag']
  #allocation13 [shape = 'u32[]', space=smem, size = 0x4, offset = 0x44, fixed_abs, tag = 'smem constant byte address 0x44 - assertion arg 0']
  #allocation14 [shape = 'u32[]', space=smem, size = 0x4, offset = 0x48, fixed_abs, tag = 'smem constant byte address 0x48 - assertion arg 1']
  #allocation15 [shape = 's32[]', space=sflag, size = 0x4, offset = 0, fixed_abs, tag = 'sflag constant byte address 0x0 - dummy sync flag']
  #allocation16 [shape = 's32[]', space=sflag, size = 0x4, offset = 0, fixed_abs, tag = 'sflag constant byte address 0x0 - dummy sync flag']
  %s0 = inlined_call_operand.vmem [shape: f32[64,16], index: 0, kind: input, shape index: {}]
  %s1 = inlined_call_operand.vmem [shape: f32[8,128], index: 1, kind: input, shape index: {}, may-alias: {1,2}]
  %s2 = inlined_call_operand.vmem [shape: f32[8,128], index: 2, kind: input, shape index: {}, may-alias: {1,2}]
  %s3 = inlined_call_operand.hbm [shape: f32[16,64], index: 3, kind: input, shape index: {}]
  %s4 = inlined_call_operand.vmem [shape: f32[1,64], index: 4, kind: input, shape index: {}]
  %s5 = inlined_call_operand.hbm [shape: f32[64,512], index: 5, kind: input, shape index: {}]
  %s6 = inlined_call_operand.vmem [shape: f32[1,512], index: 6, kind: input, shape index: {}]
  %s7 = inlined_call_operand.hbm [shape: f32[128,512], index: 7, kind: input, shape index: {}]
  %s8 = inlined_call_operand.vmem [shape: f32[128,128], index: 8, kind: input, shape index: {}]
  %s9 = inlined_call_operand.vmem [shape: f32[1,128], index: 9, kind: input, shape index: {}]
  %s10 = inlined_call_operand.vmem [shape: f32[64,128], index: 10, kind: output, shape index: {0}]
  %s11 = inlined_call_operand.vmem [shape: f32[8,128], index: 11, kind: output, shape index: {1}]
  %s12 = inlined_call_operand.vmem [shape: f32[8,128], index: 12, kind: output, shape index: {2}]
  %13 = xla_tuple %s10, %s11, %s12
  %s14 = sld [smem:[#allocation0]]
  $region130: #{tester_forward.1} parent=0
    _
  %s16 = ssub.s32 1, %s14
  %s17 = scalar_select 0, %s16, %s14
  $region1: #{tester_forward.1} parent=0
    #allocation7 [shape = 'u8[8192]{0}', space=vmem, size = 0x2000, scoped, tag = 'input window, operand 3, single buffered']
    #allocation8 [shape = 's32[1]{0}', space=sflag, size = 0x4, scoped, tag = 'scoped memory for tester_forward.1']
    #allocation9 [shape = 'u8[131072]{0}', space=vmem, size = 0x20000, scoped, tag = 'input window, operand 5, single buffered']
    #allocation10 [shape = 's32[1]{0}', space=sflag, size = 0x4, scoped, tag = 'scoped memory for tester_forward.1']
    %18 = vsyncpa [#allocation8], 0
    %19 = vsyncpa [#allocation10], 0
    // Predicated region
    $region2: #{tester_forward.1} parent=1 // pred_check
      _
    $region3: #{tester_forward.1} parent=1 // pred_check_branch
      %21 = sbr.rel (0) target = $region5
    $region4: #{tester_forward.1} parent=1 // pred_region
      _
    $region5: #{tester_forward.1} parent=1 // pred_fallthru
      _
    // Predicated region
    $region6: #{tester_forward.1} parent=1 // pred_check
      _
    $region7: #{tester_forward.1} parent=1 // pred_check_branch
      %23 = sbr.rel (0) target = $region9
    $region8: #{tester_forward.1} parent=1 // pred_region
      _
    $region9: #{tester_forward.1} parent=1 // pred_fallthru
      _
    // Predicated region
    $region10: #{tester_forward.1} parent=1 // pred_check
      _
    $region11: #{tester_forward.1} parent=1 // pred_check_branch
      %25 = sbr.rel (0) target = $region13
    $region12: #{tester_forward.1} parent=1 // pred_region
      _
    $region13: #{tester_forward.1} parent=1 // pred_fallthru
      _
    // Predicated region
    $region14: #{tester_forward.1} parent=1 // pred_check
      _
    $region15: #{tester_forward.1} parent=1 // pred_check_branch
      %27 = sbr.rel (0) target = $region17
    $region16: #{tester_forward.1} parent=1 // pred_region
      %s29 = ssub.s32 256, 256
      %30 = vsyncadd [#allocation8], %s29
      %s31 = sshll.u32 [#allocation7], 4
      %s32 = int_to_ptr.vmem [resolvable:$true] %s31
      %37 = dma.hbm_to_vmem [thread:$0]  %s3, 256, %s32, [#allocation8], 128, 128, 8
    $region17: #{tester_forward.1} parent=1 // pred_fallthru
      _
    // Predicated region
    $region18: #{tester_forward.1} parent=1 // pred_check
      _
    $region19: #{tester_forward.1} parent=1 // pred_check_branch
      %39 = sbr.rel (0) target = $region21
    $region20: #{tester_forward.1} parent=1 // pred_region
      _
    $region21: #{tester_forward.1} parent=1 // pred_fallthru
      _
    // Predicated region
    $region22: #{tester_forward.1} parent=1 // pred_check
      _
    $region23: #{tester_forward.1} parent=1 // pred_check_branch
      %41 = sbr.rel (0) target = $region25
    $region24: #{tester_forward.1} parent=1 // pred_region
      %s43 = ssub.s32 4096, 4096
      %44 = vsyncadd [#allocation10], %s43
      %s45 = sshll.u32 [#allocation9], 4
      %s46 = int_to_ptr.vmem [resolvable:$true] %s45
      %51 = dma.hbm_to_vmem [thread:$0]  %s5, 4096, %s46, [#allocation10], 512, 512, 32
    $region25: #{tester_forward.1} parent=1 // pred_fallthru
      _
    // Predicated region
    $region26: #{tester_forward.1} parent=1 // pred_check
      _
    $region27: #{tester_forward.1} parent=1 // pred_check_branch
      %53 = sbr.rel (0) target = $region29
    $region28: #{tester_forward.1} parent=1 // pred_region
      _
    $region29: #{tester_forward.1} parent=1 // pred_fallthru
      _
    // Predicated region
    $region30: #{tester_forward.1} parent=1 // pred_check
      _
    $region31: #{tester_forward.1} parent=1 // pred_check_branch
      %55 = sbr.rel (0) target = $region33
    $region32: #{tester_forward.1} parent=1 // pred_region
      %56 = dma.done [#allocation8], 256
    $region33: #{tester_forward.1} parent=1 // pred_fallthru
      _
    // Predicated region
    $region34: #{tester_forward.1} parent=1 // pred_check
      _
    $region35: #{tester_forward.1} parent=1 // pred_check_branch
      %58 = sbr.rel (0) target = $region37
    $region36: #{tester_forward.1} parent=1 // pred_region
      %59 = dma.done [#allocation10], 4096
    $region37: #{tester_forward.1} parent=1 // pred_fallthru
      _
    // Predicated region
    $region38: #{tester_forward.1} parent=1 // pred_check
      _
    $region39: #{tester_forward.1} parent=1 // pred_check_branch
      %61 = sbr.rel target = $region41
    $region40: #{tester_forward.1} parent=1 // pred_region
      %62 = sst [smem:[#allocation13]] [#allocation12]
      %63 = sst [smem:[#allocation14]] [#allocation11]
    $region41: #{tester_forward.1} parent=1 // pred_fallthru
      _
    %65 = shalt.err (0)
    %s67 = sshll.u32 [#allocation2], 4
    %s68 = int_to_ptr.vmem [resolvable:$true] %s67
    %70 = dma.hbm_to_vmem [thread:$0]  %s7, 8192, %s68, [#allocation6]
    %s71 = scalar_lea.sflag [#allocation6], 1
    %p73 = scmp.lt.u32.totalorder 128, 8
    %p74 = pneg %p73
    // Predicated region
    $region42: #{tester_forward.1} parent=1 // pred_check
      _
    $region43: #{tester_forward.1} parent=1 // pred_check_branch
      %76 = sbr.rel (%p73) target = $region45
    $region44: #{tester_forward.1} parent=1 // pred_region
      %s91 = sand.u32 128, 7
      %p92 = scmp.eq.s32.totalorder %s91, 0
      // Predicated region
      $region57: #{tester_forward.1} parent=44 // pred_check
        %p93 = pneg %p92
      $region58: #{tester_forward.1} parent=44 // pred_check_branch
        %95 = sbr.rel (%p93) target = $region60
      $region59: #{tester_forward.1} parent=44 // pred_region
        loop: start=0, step=1, limit=1
        $region61: #{tester_forward.1} parent=59 // loop_pre_header
          _
        $region62: #{tester_forward.1} parent=59 // loop_header
          %s97 = sphi 0, %s101
          %p98 = scmp.ge.s32.totalorder %s97, 1
          %s102 = sphi %s8, %s8
          %s103 = sphi [#allocation3], [#allocation3]
        $region63: #{tester_forward.1} parent=59 // loop_header_branch
          %100 = sbr.rel (%p98) target = $region67
        $region64: #{tester_forward.1} parent=59 // loop_body
          %v104 = vld [vmem:[%s102] sm:$0xff]
          %105 = vst [vmem:[%s103] sm:$0xff] %v104
          %v106 = vld [vmem:[%s102 + $0x8] sm:$0xff]
          %107 = vst [vmem:[%s103 + $0x8] sm:$0xff] %v106
          %v108 = vld [vmem:[%s102 + $0x10] sm:$0xff]
          %109 = vst [vmem:[%s103 + $0x10] sm:$0xff] %v108
          %v110 = vld [vmem:[%s102 + $0x18] sm:$0xff]
          %111 = vst [vmem:[%s103 + $0x18] sm:$0xff] %v110
          %v112 = vld [vmem:[%s102 + $0x20] sm:$0xff]
          %113 = vst [vmem:[%s103 + $0x20] sm:$0xff] %v112
          %v114 = vld [vmem:[%s102 + $0x28] sm:$0xff]
          %115 = vst [vmem:[%s103 + $0x28] sm:$0xff] %v114
          %v116 = vld [vmem:[%s102 + $0x30] sm:$0xff]
          %117 = vst [vmem:[%s103 + $0x30] sm:$0xff] %v116
          %v118 = vld [vmem:[%s102 + $0x38] sm:$0xff]
          %119 = vst [vmem:[%s103 + $0x38] sm:$0xff] %v118
          %v120 = vld [vmem:[%s102 + $0x40] sm:$0xff]
          %121 = vst [vmem:[%s103 + $0x40] sm:$0xff] %v120
          %v122 = vld [vmem:[%s102 + $0x48] sm:$0xff]
          %123 = vst [vmem:[%s103 + $0x48] sm:$0xff] %v122
          %v124 = vld [vmem:[%s102 + $0x50] sm:$0xff]
          %125 = vst [vmem:[%s103 + $0x50] sm:$0xff] %v124
          %v126 = vld [vmem:[%s102 + $0x58] sm:$0xff]
          %127 = vst [vmem:[%s103 + $0x58] sm:$0xff] %v126
          %v128 = vld [vmem:[%s102 + $0x60] sm:$0xff]
          %129 = vst [vmem:[%s103 + $0x60] sm:$0xff] %v128
          %v130 = vld [vmem:[%s102 + $0x68] sm:$0xff]
          %131 = vst [vmem:[%s103 + $0x68] sm:$0xff] %v130
          %v132 = vld [vmem:[%s102 + $0x70] sm:$0xff]
          %133 = vst [vmem:[%s103 + $0x70] sm:$0xff] %v132
          %v134 = vld [vmem:[%s102 + $0x78] sm:$0xff]
          %135 = vst [vmem:[%s103 + $0x78] sm:$0xff] %v134
        $region65: #{tester_forward.1} parent=59 // loop_footer
          %s101 = sadd.s32 1, %s97
        $region66: #{tester_forward.1} parent=59 // loop_footer_branch
          %96 = sbr.rel target = $region62
        $region67: #{tester_forward.1} parent=59 // loop_exit
          _
      $region60: #{tester_forward.1} parent=44 // pred_fallthru
        _
      %p136 = pneg %p92
      // Predicated region
      $region68: #{tester_forward.1} parent=44 // pred_check
        _
      $region69: #{tester_forward.1} parent=44 // pred_check_branch
        %138 = sbr.rel (%p92) target = $region71
      $region70: #{tester_forward.1} parent=44 // pred_region
        %s139 = sand.u32 128, 7
      $region71: #{tester_forward.1} parent=44 // pred_fallthru
        _
    $region45: #{tester_forward.1} parent=1 // pred_fallthru
      _
    // Predicated region
    $region46: #{tester_forward.1} parent=1 // pred_check
      %p77 = pneg %p73
    $region47: #{tester_forward.1} parent=1 // pred_check_branch
      %79 = sbr.rel (%p77) target = $region49
    $region48: #{tester_forward.1} parent=1 // pred_region
      %s80 = sshllo.u32 0, 128
      loop: start=0, step=1, limit=1
      $region50: #{tester_forward.1} parent=48 // loop_pre_header
        _
      $region51: #{tester_forward.1} parent=48 // loop_header
        %s82 = sphi 0, %s86
        %p83 = scmp.ge.s32.totalorder %s82, 1
        %s87 = sphi %s8, %s8
        %s88 = sphi [#allocation3], [#allocation3]
      $region52: #{tester_forward.1} parent=48 // loop_header_branch
        %85 = sbr.rel (%p83) target = $region56
      $region53: #{tester_forward.1} parent=48 // loop_body
        %v89 = vld [vmem:[%s87] sm:%s80]
        %90 = vst [vmem:[%s88] sm:%s80] %v89
      $region54: #{tester_forward.1} parent=48 // loop_footer
        %s86 = sadd.s32 1, %s82
      $region55: #{tester_forward.1} parent=48 // loop_footer_branch
        %81 = sbr.rel target = $region51
      $region56: #{tester_forward.1} parent=48 // loop_exit
        _
    $region49: #{tester_forward.1} parent=1 // pred_fallthru
      _
    // Predicated region
    $region72: #{tester_forward.1} parent=1 // pred_check
      _
    $region73: #{tester_forward.1} parent=1 // pred_check_branch
      %142 = sbr.rel (0) target = $region75
    $region74: #{tester_forward.1} parent=1 // pred_region
      %143 = vsyncadd %s71, 2048
    $region75: #{tester_forward.1} parent=1 // pred_fallthru
      _
    %s144 = scalar_lea.sflag [#allocation6], 2
    %p146 = scmp.lt.u32.totalorder 1, 8
    %p147 = pneg %p146
    // Predicated region
    $region76: #{tester_forward.1} parent=1 // pred_check
      _
    $region77: #{tester_forward.1} parent=1 // pred_check_branch
      %149 = sbr.rel (%p146) target = $region79
    $region78: #{tester_forward.1} parent=1 // pred_region
      %s164 = sand.u32 1, 7
      %p165 = scmp.eq.s32.totalorder %s164, 0
      %p166 = pneg %p165
      // Predicated region
      $region91: #{tester_forward.1} parent=78 // pred_check
        _
      $region92: #{tester_forward.1} parent=78 // pred_check_branch
        %168 = sbr.rel (%p165) target = $region94
      $region93: #{tester_forward.1} parent=78 // pred_region
        %s169 = sand.u32 1, 7
        %s170 = ssub.s32 1, %s169
        %s171 = scalar_lea.vmem %s9, %s170
        %s172 = ssub.s32 1, %s169
        %s173 = scalar_lea.vmem [#allocation4], %s172
        %s174 = sshllo.u32 0, %s169
        loop: start=0, step=1, limit=1
        $region95: #{tester_forward.1} parent=93 // loop_pre_header
          _
        $region96: #{tester_forward.1} parent=93 // loop_header
          %s176 = sphi 0, %s180
          %p177 = scmp.ge.s32.totalorder %s176, 1
          %s181 = sphi %s171, %s171
          %s182 = sphi %s173, %s173
        $region97: #{tester_forward.1} parent=93 // loop_header_branch
          %179 = sbr.rel (%p177) target = $region101
        $region98: #{tester_forward.1} parent=93 // loop_body
          %v183 = vld [vmem:[%s181] sm:%s174]
          %184 = vst [vmem:[%s182] sm:%s174] %v183
        $region99: #{tester_forward.1} parent=93 // loop_footer
          %s180 = sadd.s32 1, %s176
        $region100: #{tester_forward.1} parent=93 // loop_footer_branch
          %175 = sbr.rel target = $region96
        $region101: #{tester_forward.1} parent=93 // loop_exit
          _
      $region94: #{tester_forward.1} parent=78 // pred_fallthru
        _
    $region79: #{tester_forward.1} parent=1 // pred_fallthru
      _
    // Predicated region
    $region80: #{tester_forward.1} parent=1 // pred_check
      %p150 = pneg %p146
    $region81: #{tester_forward.1} parent=1 // pred_check_branch
      %152 = sbr.rel (%p150) target = $region83
    $region82: #{tester_forward.1} parent=1 // pred_region
      %s153 = sshllo.u32 0, 1
      loop: start=0, step=1, limit=1
      $region84: #{tester_forward.1} parent=82 // loop_pre_header
        _
      $region85: #{tester_forward.1} parent=82 // loop_header
        %s155 = sphi 0, %s159
        %p156 = scmp.ge.s32.totalorder %s155, 1
        %s160 = sphi %s9, %s9
        %s161 = sphi [#allocation4], [#allocation4]
      $region86: #{tester_forward.1} parent=82 // loop_header_branch
        %158 = sbr.rel (%p156) target = $region90
      $region87: #{tester_forward.1} parent=82 // loop_body
        %v162 = vld [vmem:[%s160] sm:%s153]
        %163 = vst [vmem:[%s161] sm:%s153] %v162
      $region88: #{tester_forward.1} parent=82 // loop_footer
        %s159 = sadd.s32 1, %s155
      $region89: #{tester_forward.1} parent=82 // loop_footer_branch
        %154 = sbr.rel target = $region85
      $region90: #{tester_forward.1} parent=82 // loop_exit
        _
    $region83: #{tester_forward.1} parent=1 // pred_fallthru
      _
    // Predicated region
    $region102: #{tester_forward.1} parent=1 // pred_check
      _
    $region103: #{tester_forward.1} parent=1 // pred_check_branch
      %187 = sbr.rel (0) target = $region105
    $region104: #{tester_forward.1} parent=1 // pred_region
      %188 = vsyncadd %s144, 16
    $region105: #{tester_forward.1} parent=1 // pred_fallthru
      _
    %v189 = vld [vmem:[%s0] sm:$0xff]
    %v190 = vld [vmem:[%s0 + $0x8] sm:$0xff]
    %v191 = vld [vmem:[%s0 + $0x10] sm:$0xff]
    %v192 = vld [vmem:[%s0 + $0x18] sm:$0xff]
    %v193 = vld [vmem:[%s0 + $0x20] sm:$0xff]
    %v194 = vld [vmem:[%s0 + $0x28] sm:$0xff]
    %v195 = vld [vmem:[%s0 + $0x30] sm:$0xff]
    %v196 = vld [vmem:[%s0 + $0x38] sm:$0xff]
    %v197 = vld [vmem:[#allocation7] sm:$0xff]
    %v198 = vld [vmem:[#allocation7 + $0x8] sm:$0xff]
    %v199 = vld [vmem:[%s4] sm:$0x1]
    %v201 = vlaneseq
    %v202 = vshrl.u32 %v201, 7
    %v203 = vsub.s32 0, %v202
    %v204 = vrot.slane %v199, %v203
    %vm206 = vcmask 130048
    %v208 = vsel %vm206, %v189, 0
    %v211 = vsel %vm206, %v190, 0
    %v214 = vsel %vm206, %v191, 0
    %v217 = vsel %vm206, %v192, 0
    %v220 = vsel %vm206, %v193, 0
    %v223 = vsel %vm206, %v194, 0
    %v226 = vsel %vm206, %v195, 0
    %v229 = vsel %vm206, %v196, 0
    %231 = vmatprep.subr.mxu0 0.0
    %232 = vmatpush1.msra.mxu0 %v197
    %233 = vmatprep.subr.mxu0 0.0
    %234 = vmatpush1.msra.mxu0 %v198
    %235 = vmatprep.subr.mxu0 0.0
    %236 = vmatpush1.msra.mxu0 0.0
    %237 = vmatprep.subr.mxu0 0.0
    %238 = vmatpush1.msra.mxu0 0.0
    %239 = vmatprep.subr.mxu0 0.0
    %240 = vmatpush1.msra.mxu0 0.0
    %241 = vmatprep.subr.mxu0 0.0
    %242 = vmatpush1.msra.mxu0 0.0
    %243 = vmatprep.subr.mxu0 0.0
    %244 = vmatpush1.msra.mxu0 0.0
    %245 = vmatprep.subr.mxu0 0.0
    %246 = vmatpush1.msra.mxu0 0.0
    %247 = vmatprep.subr.mxu0 0.0
    %248 = vmatpush1.msra.mxu0 0.0
    %249 = vmatprep.subr.mxu0 0.0
    %250 = vmatpush1.msra.mxu0 0.0
    %251 = vmatprep.subr.mxu0 0.0
    %252 = vmatpush1.msra.mxu0 0.0
    %253 = vmatprep.subr.mxu0 0.0
    %254 = vmatpush1.msra.mxu0 0.0
    %255 = vmatprep.subr.mxu0 0.0
    %256 = vmatpush1.msra.mxu0 0.0
    %257 = vmatprep.subr.mxu0 0.0
    %258 = vmatpush1.msra.mxu0 0.0
    %259 = vmatprep.subr.mxu0 0.0
    %260 = vmatpush1.msra.mxu0 0.0
    %261 = vmatprep.subr.mxu0 0.0
    %262 = vmatpush1.msra.mxu0 0.0
    %263 = vmatprep.subr.mxu0 0.0
    %264 = vmatpush1.msra.mxu0 0.0
    %265 = vmatprep.subr.mxu0 0.0
    %266 = vmatpush1.msra.mxu0 0.0
    %267 = vmatprep.subr.mxu0 0.0
    %268 = vmatpush1.msra.mxu0 0.0
    %269 = vmatprep.subr.mxu0 0.0
    %270 = vmatpush1.msra.mxu0 0.0
    %271 = vmatprep.subr.mxu0 0.0
    %272 = vmatpush1.msra.mxu0 0.0
    %273 = vmatprep.subr.mxu0 0.0
    %274 = vmatpush1.msra.mxu0 0.0
    %275 = vmatprep.subr.mxu0 0.0
    %276 = vmatpush1.msra.mxu0 0.0
    %277 = vmatprep.subr.mxu0 0.0
    %278 = vmatpush1.msra.mxu0 0.0
    %279 = vmatprep.subr.mxu0 0.0
    %280 = vmatpush1.msra.mxu0 0.0
    %281 = vmatprep.subr.mxu0 0.0
    %282 = vmatpush1.msra.mxu0 0.0
    %283 = vmatprep.subr.mxu0 0.0
    %284 = vmatpush1.msra.mxu0 0.0
    %285 = vmatprep.subr.mxu0 0.0
    %286 = vmatpush1.msra.mxu0 0.0
    %287 = vmatprep.subr.mxu0 0.0
    %288 = vmatpush1.msra.mxu0 0.0
    %289 = vmatprep.subr.mxu0 0.0
    %290 = vmatpush1.msra.mxu0 0.0
    %291 = vmatprep.subr.mxu0 0.0
    %292 = vmatpush1.msra.mxu0 0.0
    %293 = vmatprep.subr.mxu0 0.0
    %294 = vmatpush1.msra.mxu0 0.0
    %295 = vmatprep.mubr.f32.mxu0 0.0
    %296 = vmatmul.mubr.f32.gmra.mrb[0].mxu0 %v208
    %v297 = vpop.f32.mrb[0].mxu0
    %v298 = vadd.f32 %v204, %v297
    %v299 = vpop.f32.mrb[0].mxu0
    %300 = vmatprep.mubr.f32.mxu0 0.0
    %301 = vmatmul.mubr.f32.gmra.mrb[0].mxu0 %v211
    %v302 = vpop.f32.mrb[0].mxu0
    %v303 = vadd.f32 %v204, %v302
    %v304 = vpop.f32.mrb[0].mxu0
    %305 = vmatprep.mubr.f32.mxu0 0.0
    %306 = vmatmul.mubr.f32.gmra.mrb[0].mxu0 %v214
    %v307 = vpop.f32.mrb[0].mxu0
    %v308 = vadd.f32 %v204, %v307
    %v309 = vpop.f32.mrb[0].mxu0
    %310 = vmatprep.mubr.f32.mxu0 0.0
    %311 = vmatmul.mubr.f32.gmra.mrb[0].mxu0 %v217
    %v312 = vpop.f32.mrb[0].mxu0
    %v313 = vadd.f32 %v204, %v312
    %v314 = vpop.f32.mrb[0].mxu0
    %315 = vmatprep.mubr.f32.mxu0 0.0
    %316 = vmatmul.mubr.f32.gmra.mrb[0].mxu0 %v220
    %v317 = vpop.f32.mrb[0].mxu0
    %v318 = vadd.f32 %v204, %v317
    %v319 = vpop.f32.mrb[0].mxu0
    %320 = vmatprep.mubr.f32.mxu0 0.0
    %321 = vmatmul.mubr.f32.gmra.mrb[0].mxu0 %v223
    %v322 = vpop.f32.mrb[0].mxu0
    %v323 = vadd.f32 %v204, %v322
    %v324 = vpop.f32.mrb[0].mxu0
    %325 = vmatprep.mubr.f32.mxu0 0.0
    %326 = vmatmul.mubr.f32.gmra.mrb[0].mxu0 %v226
    %v327 = vpop.f32.mrb[0].mxu0
    %v328 = vadd.f32 %v204, %v327
    %v329 = vpop.f32.mrb[0].mxu0
    %330 = vmatprep.mubr.f32.mxu0 0.0
    %331 = vmatmul.mubr.f32.gmra.mrb[0].mxu0 %v229
    %v332 = vpop.f32.mrb[0].mxu0
    %v333 = vadd.f32 %v204, %v332
    %v334 = vpop.f32.mrb[0].mxu0
    %335 = vdwg.mxu0
    %vm336 = vcmp.ge.f32.partialorder %v298, 0.0
    %vm337 = vcmp.ge.f32.partialorder %v303, 0.0
    %vm338 = vcmp.ge.f32.partialorder %v308, 0.0
    %vm339 = vcmp.ge.f32.partialorder %v313, 0.0
    %vm340 = vcmp.ge.f32.partialorder %v318, 0.0
    %vm341 = vcmp.ge.f32.partialorder %v323, 0.0
    %vm342 = vcmp.ge.f32.partialorder %v328, 0.0
    %vm343 = vcmp.ge.f32.partialorder %v333, 0.0
    %v344 = vmul.f32 %v298, 0.01
    %v345 = vmul.f32 %v303, 0.01
    %v346 = vmul.f32 %v308, 0.01
    %v347 = vmul.f32 %v313, 0.01
    %v348 = vmul.f32 %v318, 0.01
    %v349 = vmul.f32 %v323, 0.01
    %v350 = vmul.f32 %v328, 0.01
    %v351 = vmul.f32 %v333, 0.01
    %v352 = vsel %vm336, %v298, %v344
    %v353 = vsel %vm337, %v303, %v345
    %v354 = vsel %vm338, %v308, %v346
    %v355 = vsel %vm339, %v313, %v347
    %v356 = vsel %vm340, %v318, %v348
    %v357 = vsel %vm341, %v323, %v349
    %v358 = vsel %vm342, %v328, %v350
    %v359 = vsel %vm343, %v333, %v351
    %v360 = vld [vmem:[#allocation9] sm:$0xff]
    %v361 = vld [vmem:[#allocation9 + $0x8] sm:$0xff]
    %v362 = vld [vmem:[#allocation9 + $0x10] sm:$0xff]
    %v363 = vld [vmem:[#allocation9 + $0x18] sm:$0xff]
    %v364 = vld [vmem:[#allocation9 + $0x20] sm:$0xff]
    %v365 = vld [vmem:[#allocation9 + $0x28] sm:$0xff]
    %v366 = vld [vmem:[#allocation9 + $0x30] sm:$0xff]
    %v367 = vld [vmem:[#allocation9 + $0x38] sm:$0xff]
    %v368 = vld [vmem:[#allocation9 + $0x40] sm:$0xff]
    %v369 = vld [vmem:[#allocation9 + $0x48] sm:$0xff]
    %v370 = vld [vmem:[#allocation9 + $0x50] sm:$0xff]
    %v371 = vld [vmem:[#allocation9 + $0x58] sm:$0xff]
    %v372 = vld [vmem:[#allocation9 + $0x60] sm:$0xff]
    %v373 = vld [vmem:[#allocation9 + $0x68] sm:$0xff]
    %v374 = vld [vmem:[#allocation9 + $0x70] sm:$0xff]
    %v375 = vld [vmem:[#allocation9 + $0x78] sm:$0xff]
    %v376 = vld [vmem:[#allocation9 + $0x80] sm:$0xff]
    %v377 = vld [vmem:[#allocation9 + $0x88] sm:$0xff]
    %v378 = vld [vmem:[#allocation9 + $0x90] sm:$0xff]
    %v379 = vld [vmem:[#allocation9 + $0x98] sm:$0xff]
    %v380 = vld [vmem:[#allocation9 + $0xa0] sm:$0xff]
    %v381 = vld [vmem:[#allocation9 + $0xa8] sm:$0xff]
    %v382 = vld [vmem:[#allocation9 + $0xb0] sm:$0xff]
    %v383 = vld [vmem:[#allocation9 + $0xb8] sm:$0xff]
    %v384 = vld [vmem:[#allocation9 + $0xc0] sm:$0xff]
    %v385 = vld [vmem:[#allocation9 + $0xc8] sm:$0xff]
    %v386 = vld [vmem:[#allocation9 + $0xd0] sm:$0xff]
    %v387 = vld [vmem:[#allocation9 + $0xd8] sm:$0xff]
    %v388 = vld [vmem:[#allocation9 + $0xe0] sm:$0xff]
    %v389 = vld [vmem:[#allocation9 + $0xe8] sm:$0xff]
    %v390 = vld [vmem:[#allocation9 + $0xf0] sm:$0xff]
    %v391 = vld [vmem:[#allocation9 + $0xf8] sm:$0xff]
    %v392 = vld [vmem:[%s6] sm:$0xf]
    %v394 = vlaneseq
    %v395 = vshrl.u32 %v394, 7
    %v396 = vsub.s32 0, %v395
    %v397 = vrot.slane %v392, %v396
    %v398 = vlaneseq
    %v399 = vshrl.u32 %v398, 7
    %v400 = vsub.s32 1, %v399
    %v401 = vrot.slane %v392, %v400
    %v402 = vlaneseq
    %v403 = vshrl.u32 %v402, 7
    %v404 = vsub.s32 2, %v403
    %v405 = vrot.slane %v392, %v404
    %v406 = vlaneseq
    %v407 = vshrl.u32 %v406, 7
    %v408 = vsub.s32 3, %v407
    %v409 = vrot.slane %v392, %v408
    %vm414 = vcmask 523264
    %v416 = vsel %vm414, %v352, 0
    %v419 = vsel %vm414, %v353, 0
    %v422 = vsel %vm414, %v354, 0
    %v425 = vsel %vm414, %v355, 0
    %v428 = vsel %vm414, %v356, 0
    %v431 = vsel %vm414, %v357, 0
    %v434 = vsel %vm414, %v358, 0
    %v437 = vsel %vm414, %v359, 0
    %439 = vmatprep.subr.mxu0 %v361
    %440 = vmatpush1.msra.mxu0 %v360
    %441 = vmatprep.subr.mxu0 %v365
    %442 = vmatpush1.msra.mxu0 %v364
    %443 = vmatprep.subr.mxu0 %v369
    %444 = vmatpush1.msra.mxu0 %v368
    %445 = vmatprep.subr.mxu0 %v373
    %446 = vmatpush1.msra.mxu0 %v372
    %447 = vmatprep.subr.mxu0 %v377
    %448 = vmatpush1.msra.mxu0 %v376
    %449 = vmatprep.subr.mxu0 %v381
    %450 = vmatpush1.msra.mxu0 %v380
    %451 = vmatprep.subr.mxu0 %v385
    %452 = vmatpush1.msra.mxu0 %v384
    %453 = vmatprep.subr.mxu0 %v389
    %454 = vmatpush1.msra.mxu0 %v388
    %455 = vmatprep.subr.mxu0 0.0
    %456 = vmatpush1.msra.mxu0 0.0
    %457 = vmatprep.subr.mxu0 0.0
    %458 = vmatpush1.msra.mxu0 0.0
    %459 = vmatprep.subr.mxu0 0.0
    %460 = vmatpush1.msra.mxu0 0.0
    %461 = vmatprep.subr.mxu0 0.0
    %462 = vmatpush1.msra.mxu0 0.0
    %463 = vmatprep.subr.mxu0 0.0
    %464 = vmatpush1.msra.mxu0 0.0
    %465 = vmatprep.subr.mxu0 0.0
    %466 = vmatpush1.msra.mxu0 0.0
    %467 = vmatprep.subr.mxu0 0.0
    %468 = vmatpush1.msra.mxu0 0.0
    %469 = vmatprep.subr.mxu0 0.0
    %470 = vmatpush1.msra.mxu0 0.0
    %471 = vmatprep.subr.mxu0 0.0
    %472 = vmatpush1.msra.mxu0 0.0
    %473 = vmatprep.subr.mxu0 0.0
    %474 = vmatpush1.msra.mxu0 0.0
    %475 = vmatprep.subr.mxu0 0.0
    %476 = vmatpush1.msra.mxu0 0.0
    %477 = vmatprep.subr.mxu0 0.0
    %478 = vmatpush1.msra.mxu0 0.0
    %479 = vmatprep.subr.mxu0 0.0
    %480 = vmatpush1.msra.mxu0 0.0
    %481 = vmatprep.subr.mxu0 0.0
    %482 = vmatpush1.msra.mxu0 0.0
    %483 = vmatprep.subr.mxu0 0.0
    %484 = vmatpush1.msra.mxu0 0.0
    %485 = vmatprep.subr.mxu0 0.0
    %486 = vmatpush1.msra.mxu0 0.0
    %487 = vmatprep.subr.mxu0 0.0
    %488 = vmatpush1.msra.mxu0 0.0
    %489 = vmatprep.subr.mxu0 0.0
    %490 = vmatpush1.msra.mxu0 0.0
    %491 = vmatprep.subr.mxu0 0.0
    %492 = vmatpush1.msra.mxu0 0.0
    %493 = vmatprep.subr.mxu0 0.0
    %494 = vmatpush1.msra.mxu0 0.0
    %495 = vmatprep.subr.mxu0 0.0
    %496 = vmatpush1.msra.mxu0 0.0
    %497 = vmatprep.subr.mxu0 0.0
    %498 = vmatpush1.msra.mxu0 0.0
    %499 = vmatprep.subr.mxu0 0.0
    %500 = vmatpush1.msra.mxu0 0.0
    %501 = vmatprep.subr.mxu0 0.0
    %502 = vmatpush1.msra.mxu0 0.0
    %503 = vmatprep.mubr.f32.mxu0 0.0
    %504 = vmatmul.mubr.f32.gmra.mrb[0].mxu0 %v416
    %v505 = vpop.f32.mrb[0].mxu0
    %v506 = vadd.f32 %v397, %v505
    %v507 = vpop.f32.mrb[0].mxu0
    %v508 = vadd.f32 %v401, %v507
    %509 = vmatprep.mubr.f32.mxu0 0.0
    %510 = vmatmul.mubr.f32.gmra.mrb[0].mxu0 %v419
    %v511 = vpop.f32.mrb[0].mxu0
    %v512 = vadd.f32 %v397, %v511
    %v513 = vpop.f32.mrb[0].mxu0
    %v514 = vadd.f32 %v401, %v513
    %515 = vmatprep.mubr.f32.mxu0 0.0
    %516 = vmatmul.mubr.f32.gmra.mrb[0].mxu0 %v422
    %v517 = vpop.f32.mrb[0].mxu0
    %v518 = vadd.f32 %v397, %v517
    %v519 = vpop.f32.mrb[0].mxu0
    %v520 = vadd.f32 %v401, %v519
    %521 = vmatprep.mubr.f32.mxu0 0.0
    %522 = vmatmul.mubr.f32.gmra.mrb[0].mxu0 %v425
    %v523 = vpop.f32.mrb[0].mxu0
    %v524 = vadd.f32 %v397, %v523
    %v525 = vpop.f32.mrb[0].mxu0
    %v526 = vadd.f32 %v401, %v525
    %527 = vmatprep.mubr.f32.mxu0 0.0
    %528 = vmatmul.mubr.f32.gmra.mrb[0].mxu0 %v428
    %v529 = vpop.f32.mrb[0].mxu0
    %v530 = vadd.f32 %v397, %v529
    %v531 = vpop.f32.mrb[0].mxu0
    %v532 = vadd.f32 %v401, %v531
    %533 = vmatprep.mubr.f32.mxu0 0.0
    %534 = vmatmul.mubr.f32.gmra.mrb[0].mxu0 %v431
    %v535 = vpop.f32.mrb[0].mxu0
    %v536 = vadd.f32 %v397, %v535
    %v537 = vpop.f32.mrb[0].mxu0
    %v538 = vadd.f32 %v401, %v537
    %539 = vmatprep.mubr.f32.mxu0 0.0
    %540 = vmatmul.mubr.f32.gmra.mrb[0].mxu0 %v434
    %v541 = vpop.f32.mrb[0].mxu0
    %v542 = vadd.f32 %v397, %v541
    %v543 = vpop.f32.mrb[0].mxu0
    %v544 = vadd.f32 %v401, %v543
    %545 = vmatprep.mubr.f32.mxu0 0.0
    %546 = vmatmul.mubr.f32.gmra.mrb[0].mxu0 %v437
    %v547 = vpop.f32.mrb[0].mxu0
    %v548 = vadd.f32 %v397, %v547
    %v549 = vpop.f32.mrb[0].mxu0
    %v550 = vadd.f32 %v401, %v549
    %551 = vdwg.mxu0
    %552 = vmatprep.subr.mxu0 %v363
    %553 = vmatpush1.msra.mxu0 %v362
    %554 = vmatprep.subr.mxu0 %v367
    %555 = vmatpush1.msra.mxu0 %v366
    %556 = vmatprep.subr.mxu0 %v371
    %557 = vmatpush1.msra.mxu0 %v370
    %558 = vmatprep.subr.mxu0 %v375
    %559 = vmatpush1.msra.mxu0 %v374
    %560 = vmatprep.subr.mxu0 %v379
    %561 = vmatpush1.msra.mxu0 %v378
    %562 = vmatprep.subr.mxu0 %v383
    %563 = vmatpush1.msra.mxu0 %v382
    %564 = vmatprep.subr.mxu0 %v387
    %565 = vmatpush1.msra.mxu0 %v386
    %566 = vmatprep.subr.mxu0 %v391
    %567 = vmatpush1.msra.mxu0 %v390
    %568 = vmatprep.subr.mxu0 0.0
    %569 = vmatpush1.msra.mxu0 0.0
    %570 = vmatprep.subr.mxu0 0.0
    %571 = vmatpush1.msra.mxu0 0.0
    %572 = vmatprep.subr.mxu0 0.0
    %573 = vmatpush1.msra.mxu0 0.0
    %574 = vmatprep.subr.mxu0 0.0
    %575 = vmatpush1.msra.mxu0 0.0
    %576 = vmatprep.subr.mxu0 0.0
    %577 = vmatpush1.msra.mxu0 0.0
    %578 = vmatprep.subr.mxu0 0.0
    %579 = vmatpush1.msra.mxu0 0.0
    %580 = vmatprep.subr.mxu0 0.0
    %581 = vmatpush1.msra.mxu0 0.0
    %582 = vmatprep.subr.mxu0 0.0
    %583 = vmatpush1.msra.mxu0 0.0
    %584 = vmatprep.subr.mxu0 0.0
    %585 = vmatpush1.msra.mxu0 0.0
    %586 = vmatprep.subr.mxu0 0.0
    %587 = vmatpush1.msra.mxu0 0.0
    %588 = vmatprep.subr.mxu0 0.0
    %589 = vmatpush1.msra.mxu0 0.0
    %590 = vmatprep.subr.mxu0 0.0
    %591 = vmatpush1.msra.mxu0 0.0
    %592 = vmatprep.subr.mxu0 0.0
    %593 = vmatpush1.msra.mxu0 0.0
    %594 = vmatprep.subr.mxu0 0.0
    %595 = vmatpush1.msra.mxu0 0.0
    %596 = vmatprep.subr.mxu0 0.0
    %597 = vmatpush1.msra.mxu0 0.0
    %598 = vmatprep.subr.mxu0 0.0
    %599 = vmatpush1.msra.mxu0 0.0
    %600 = vmatprep.subr.mxu0 0.0
    %601 = vmatpush1.msra.mxu0 0.0
    %602 = vmatprep.subr.mxu0 0.0
    %603 = vmatpush1.msra.mxu0 0.0
    %604 = vmatprep.subr.mxu0 0.0
    %605 = vmatpush1.msra.mxu0 0.0
    %606 = vmatprep.subr.mxu0 0.0
    %607 = vmatpush1.msra.mxu0 0.0
    %608 = vmatprep.subr.mxu0 0.0
    %609 = vmatpush1.msra.mxu0 0.0
    %610 = vmatprep.subr.mxu0 0.0
    %611 = vmatpush1.msra.mxu0 0.0
    %612 = vmatprep.subr.mxu0 0.0
    %613 = vmatpush1.msra.mxu0 0.0
    %614 = vmatprep.subr.mxu0 0.0
    %615 = vmatpush1.msra.mxu0 0.0
    %616 = vmatprep.mubr.f32.mxu0 0.0
    %617 = vmatmul.mubr.f32.gmra.mrb[0].mxu0 %v416
    %v618 = vpop.f32.mrb[0].mxu0
    %v619 = vadd.f32 %v405, %v618
    %v620 = vpop.f32.mrb[0].mxu0
    %v621 = vadd.f32 %v409, %v620
    %622 = vmatprep.mubr.f32.mxu0 0.0
    %623 = vmatmul.mubr.f32.gmra.mrb[0].mxu0 %v419
    %v624 = vpop.f32.mrb[0].mxu0
    %v625 = vadd.f32 %v405, %v624
    %v626 = vpop.f32.mrb[0].mxu0
    %v627 = vadd.f32 %v409, %v626
    %628 = vmatprep.mubr.f32.mxu0 0.0
    %629 = vmatmul.mubr.f32.gmra.mrb[0].mxu0 %v422
    %v630 = vpop.f32.mrb[0].mxu0
    %v631 = vadd.f32 %v405, %v630
    %v632 = vpop.f32.mrb[0].mxu0
    %v633 = vadd.f32 %v409, %v632
    %634 = vmatprep.mubr.f32.mxu0 0.0
    %635 = vmatmul.mubr.f32.gmra.mrb[0].mxu0 %v425
    %v636 = vpop.f32.mrb[0].mxu0
    %v637 = vadd.f32 %v405, %v636
    %v638 = vpop.f32.mrb[0].mxu0
    %v639 = vadd.f32 %v409, %v638
    %640 = vmatprep.mubr.f32.mxu0 0.0
    %641 = vmatmul.mubr.f32.gmra.mrb[0].mxu0 %v428
    %v642 = vpop.f32.mrb[0].mxu0
    %v643 = vadd.f32 %v405, %v642
    %v644 = vpop.f32.mrb[0].mxu0
    %v645 = vadd.f32 %v409, %v644
    %646 = vmatprep.mubr.f32.mxu0 0.0
    %647 = vmatmul.mubr.f32.gmra.mrb[0].mxu0 %v431
    %v648 = vpop.f32.mrb[0].mxu0
    %v649 = vadd.f32 %v405, %v648
    %v650 = vpop.f32.mrb[0].mxu0
    %v651 = vadd.f32 %v409, %v650
    %652 = vmatprep.mubr.f32.mxu0 0.0
    %653 = vmatmul.mubr.f32.gmra.mrb[0].mxu0 %v434
    %v654 = vpop.f32.mrb[0].mxu0
    %v655 = vadd.f32 %v405, %v654
    %v656 = vpop.f32.mrb[0].mxu0
    %v657 = vadd.f32 %v409, %v656
    %658 = vmatprep.mubr.f32.mxu0 0.0
    %659 = vmatmul.mubr.f32.gmra.mrb[0].mxu0 %v437
    %v660 = vpop.f32.mrb[0].mxu0
    %v661 = vadd.f32 %v405, %v660
    %v662 = vpop.f32.mrb[0].mxu0
    %v663 = vadd.f32 %v409, %v662
    %664 = vdwg.mxu0
    %s665 = smul.u32 8, 16
    %s666 = smul.u32 %s665, 4
    %s667 = sshll.u32 %s666, 4
    %668 = dma.done [#allocation6], %s667
    %v669 = vld [vmem:[#allocation2] sm:$0xff]
    %v670 = vld [vmem:[#allocation2 + $0x8] sm:$0xff]
    %v671 = vld [vmem:[#allocation2 + $0x10] sm:$0xff]
    %v672 = vld [vmem:[#allocation2 + $0x18] sm:$0xff]
    %v673 = vld [vmem:[#allocation2 + $0x20] sm:$0xff]
    %v674 = vld [vmem:[#allocation2 + $0x28] sm:$0xff]
    %v675 = vld [vmem:[#allocation2 + $0x30] sm:$0xff]
    %v676 = vld [vmem:[#allocation2 + $0x38] sm:$0xff]
    %v677 = vld [vmem:[#allocation2 + $0x40] sm:$0xff]
    %v678 = vld [vmem:[#allocation2 + $0x48] sm:$0xff]
    %v679 = vld [vmem:[#allocation2 + $0x50] sm:$0xff]
    %v680 = vld [vmem:[#allocation2 + $0x58] sm:$0xff]
    %v681 = vld [vmem:[#allocation2 + $0x60] sm:$0xff]
    %v682 = vld [vmem:[#allocation2 + $0x68] sm:$0xff]
    %v683 = vld [vmem:[#allocation2 + $0x70] sm:$0xff]
    %v684 = vld [vmem:[#allocation2 + $0x78] sm:$0xff]
    %v685 = vld [vmem:[#allocation2 + $0x80] sm:$0xff]
    %v686 = vld [vmem:[#allocation2 + $0x88] sm:$0xff]
    %v687 = vld [vmem:[#allocation2 + $0x90] sm:$0xff]
    %v688 = vld [vmem:[#allocation2 + $0x98] sm:$0xff]
    %v689 = vld [vmem:[#allocation2 + $0xa0] sm:$0xff]
    %v690 = vld [vmem:[#allocation2 + $0xa8] sm:$0xff]
    %v691 = vld [vmem:[#allocation2 + $0xb0] sm:$0xff]
    %v692 = vld [vmem:[#allocation2 + $0xb8] sm:$0xff]
    %v693 = vld [vmem:[#allocation2 + $0xc0] sm:$0xff]
    %v694 = vld [vmem:[#allocation2 + $0xc8] sm:$0xff]
    %v695 = vld [vmem:[#allocation2 + $0xd0] sm:$0xff]
    %v696 = vld [vmem:[#allocation2 + $0xd8] sm:$0xff]
    %v697 = vld [vmem:[#allocation2 + $0xe0] sm:$0xff]
    %v698 = vld [vmem:[#allocation2 + $0xe8] sm:$0xff]
    %v699 = vld [vmem:[#allocation2 + $0xf0] sm:$0xff]
    %v700 = vld [vmem:[#allocation2 + $0xf8] sm:$0xff]
    %v701 = vld [vmem:[#allocation2 + $0x100] sm:$0xff]
    %v702 = vld [vmem:[#allocation2 + $0x108] sm:$0xff]
    %v703 = vld [vmem:[#allocation2 + $0x110] sm:$0xff]
    %v704 = vld [vmem:[#allocation2 + $0x118] sm:$0xff]
    %v705 = vld [vmem:[#allocation2 + $0x120] sm:$0xff]
    %v706 = vld [vmem:[#allocation2 + $0x128] sm:$0xff]
    %v707 = vld [vmem:[#allocation2 + $0x130] sm:$0xff]
    %v708 = vld [vmem:[#allocation2 + $0x138] sm:$0xff]
    %v709 = vld [vmem:[#allocation2 + $0x140] sm:$0xff]
    %v710 = vld [vmem:[#allocation2 + $0x148] sm:$0xff]
    %v711 = vld [vmem:[#allocation2 + $0x150] sm:$0xff]
    %v712 = vld [vmem:[#allocation2 + $0x158] sm:$0xff]
    %v713 = vld [vmem:[#allocation2 + $0x160] sm:$0xff]
    %v714 = vld [vmem:[#allocation2 + $0x168] sm:$0xff]
    %v715 = vld [vmem:[#allocation2 + $0x170] sm:$0xff]
    %v716 = vld [vmem:[#allocation2 + $0x178] sm:$0xff]
    %v717 = vld [vmem:[#allocation2 + $0x180] sm:$0xff]
    %v718 = vld [vmem:[#allocation2 + $0x188] sm:$0xff]
    %v719 = vld [vmem:[#allocation2 + $0x190] sm:$0xff]
    %v720 = vld [vmem:[#allocation2 + $0x198] sm:$0xff]
    %v721 = vld [vmem:[#allocation2 + $0x1a0] sm:$0xff]
    %v722 = vld [vmem:[#allocation2 + $0x1a8] sm:$0xff]
    %v723 = vld [vmem:[#allocation2 + $0x1b0] sm:$0xff]
    %v724 = vld [vmem:[#allocation2 + $0x1b8] sm:$0xff]
    %v725 = vld [vmem:[#allocation2 + $0x1c0] sm:$0xff]
    %v726 = vld [vmem:[#allocation2 + $0x1c8] sm:$0xff]
    %v727 = vld [vmem:[#allocation2 + $0x1d0] sm:$0xff]
    %v728 = vld [vmem:[#allocation2 + $0x1d8] sm:$0xff]
    %v729 = vld [vmem:[#allocation2 + $0x1e0] sm:$0xff]
    %v730 = vld [vmem:[#allocation2 + $0x1e8] sm:$0xff]
    %v731 = vld [vmem:[#allocation2 + $0x1f0] sm:$0xff]
    %v732 = vld [vmem:[#allocation2 + $0x1f8] sm:$0xff]
    %v733 = vld [vmem:[%s1] sm:$0xff]
    %v734 = vld [vmem:[%s2] sm:$0xff]
    %735 = vmatprep.subr.mxu0 %v670
    %736 = vmatpush1.msra.mxu0 %v669
    %737 = vmatprep.subr.mxu0 %v674
    %738 = vmatpush1.msra.mxu0 %v673
    %739 = vmatprep.subr.mxu0 %v678
    %740 = vmatpush1.msra.mxu0 %v677
    %741 = vmatprep.subr.mxu0 %v682
    %742 = vmatpush1.msra.mxu0 %v681
    %743 = vmatprep.subr.mxu0 %v686
    %744 = vmatpush1.msra.mxu0 %v685
    %745 = vmatprep.subr.mxu0 %v690
    %746 = vmatpush1.msra.mxu0 %v689
    %747 = vmatprep.subr.mxu0 %v694
    %748 = vmatpush1.msra.mxu0 %v693
    %749 = vmatprep.subr.mxu0 %v698
    %750 = vmatpush1.msra.mxu0 %v697
    %751 = vmatprep.subr.mxu0 %v702
    %752 = vmatpush1.msra.mxu0 %v701
    %753 = vmatprep.subr.mxu0 %v706
    %754 = vmatpush1.msra.mxu0 %v705
    %755 = vmatprep.subr.mxu0 %v710
    %756 = vmatpush1.msra.mxu0 %v709
    %757 = vmatprep.subr.mxu0 %v714
    %758 = vmatpush1.msra.mxu0 %v713
    %759 = vmatprep.subr.mxu0 %v718
    %760 = vmatpush1.msra.mxu0 %v717
    %761 = vmatprep.subr.mxu0 %v722
    %762 = vmatpush1.msra.mxu0 %v721
    %763 = vmatprep.subr.mxu0 %v726
    %764 = vmatpush1.msra.mxu0 %v725
    %765 = vmatprep.subr.mxu0 %v730
    %766 = vmatpush1.msra.mxu0 %v729
    %767 = vmatprep.subr.mxu0 0.0
    %768 = vmatpush1.msra.mxu0 0.0
    %769 = vmatprep.subr.mxu0 0.0
    %770 = vmatpush1.msra.mxu0 0.0
    %771 = vmatprep.subr.mxu0 0.0
    %772 = vmatpush1.msra.mxu0 0.0
    %773 = vmatprep.subr.mxu0 0.0
    %774 = vmatpush1.msra.mxu0 0.0
    %775 = vmatprep.subr.mxu0 0.0
    %776 = vmatpush1.msra.mxu0 0.0
    %777 = vmatprep.subr.mxu0 0.0
    %778 = vmatpush1.msra.mxu0 0.0
    %779 = vmatprep.subr.mxu0 0.0
    %780 = vmatpush1.msra.mxu0 0.0
    %781 = vmatprep.subr.mxu0 0.0
    %782 = vmatpush1.msra.mxu0 0.0
    %783 = vmatprep.subr.mxu0 0.0
    %784 = vmatpush1.msra.mxu0 0.0
    %785 = vmatprep.subr.mxu0 0.0
    %786 = vmatpush1.msra.mxu0 0.0
    %787 = vmatprep.subr.mxu0 0.0
    %788 = vmatpush1.msra.mxu0 0.0
    %789 = vmatprep.subr.mxu0 0.0
    %790 = vmatpush1.msra.mxu0 0.0
    %791 = vmatprep.subr.mxu0 0.0
    %792 = vmatpush1.msra.mxu0 0.0
    %793 = vmatprep.subr.mxu0 0.0
    %794 = vmatpush1.msra.mxu0 0.0
    %795 = vmatprep.subr.mxu0 0.0
    %796 = vmatpush1.msra.mxu0 0.0
    %797 = vmatprep.subr.mxu0 0.0
    %798 = vmatpush1.msra.mxu0 0.0
    %799 = vmatprep.mubr.f32.mxu0 0.0
    %800 = vmatmul.mubr.f32.gmra.mrb[0].mxu0 %v733
    %v801 = vpop.f32.mrb[0].mxu0
    %v802 = vadd.f32 0.0, %v801
    %v803 = vpop.f32.mrb[0].mxu0
    %v804 = vadd.f32 0.0, %v803
    %805 = vdwg.mxu0
    %806 = vmatprep.subr.mxu0 %v672
    %807 = vmatpush1.msra.mxu0 %v671
    %808 = vmatprep.subr.mxu0 %v676
    %809 = vmatpush1.msra.mxu0 %v675
    %810 = vmatprep.subr.mxu0 %v680
    %811 = vmatpush1.msra.mxu0 %v679
    %812 = vmatprep.subr.mxu0 %v684
    %813 = vmatpush1.msra.mxu0 %v683
    %814 = vmatprep.subr.mxu0 %v688
    %815 = vmatpush1.msra.mxu0 %v687
    %816 = vmatprep.subr.mxu0 %v692
    %817 = vmatpush1.msra.mxu0 %v691
    %818 = vmatprep.subr.mxu0 %v696
    %819 = vmatpush1.msra.mxu0 %v695
    %820 = vmatprep.subr.mxu0 %v700
    %821 = vmatpush1.msra.mxu0 %v699
    %822 = vmatprep.subr.mxu0 %v704
    %823 = vmatpush1.msra.mxu0 %v703
    %824 = vmatprep.subr.mxu0 %v708
    %825 = vmatpush1.msra.mxu0 %v707
    %826 = vmatprep.subr.mxu0 %v712
    %827 = vmatpush1.msra.mxu0 %v711
    %828 = vmatprep.subr.mxu0 %v716
    %829 = vmatpush1.msra.mxu0 %v715
    %830 = vmatprep.subr.mxu0 %v720
    %831 = vmatpush1.msra.mxu0 %v719
    %832 = vmatprep.subr.mxu0 %v724
    %833 = vmatpush1.msra.mxu0 %v723
    %834 = vmatprep.subr.mxu0 %v728
    %835 = vmatpush1.msra.mxu0 %v727
    %836 = vmatprep.subr.mxu0 %v732
    %837 = vmatpush1.msra.mxu0 %v731
    %838 = vmatprep.subr.mxu0 0.0
    %839 = vmatpush1.msra.mxu0 0.0
    %840 = vmatprep.subr.mxu0 0.0
    %841 = vmatpush1.msra.mxu0 0.0
    %842 = vmatprep.subr.mxu0 0.0
    %843 = vmatpush1.msra.mxu0 0.0
    %844 = vmatprep.subr.mxu0 0.0
    %845 = vmatpush1.msra.mxu0 0.0
    %846 = vmatprep.subr.mxu0 0.0
    %847 = vmatpush1.msra.mxu0 0.0
    %848 = vmatprep.subr.mxu0 0.0
    %849 = vmatpush1.msra.mxu0 0.0
    %850 = vmatprep.subr.mxu0 0.0
    %851 = vmatpush1.msra.mxu0 0.0
    %852 = vmatprep.subr.mxu0 0.0
    %853 = vmatpush1.msra.mxu0 0.0
    %854 = vmatprep.subr.mxu0 0.0
    %855 = vmatpush1.msra.mxu0 0.0
    %856 = vmatprep.subr.mxu0 0.0
    %857 = vmatpush1.msra.mxu0 0.0
    %858 = vmatprep.subr.mxu0 0.0
    %859 = vmatpush1.msra.mxu0 0.0
    %860 = vmatprep.subr.mxu0 0.0
    %861 = vmatpush1.msra.mxu0 0.0
    %862 = vmatprep.subr.mxu0 0.0
    %863 = vmatpush1.msra.mxu0 0.0
    %864 = vmatprep.subr.mxu0 0.0
    %865 = vmatpush1.msra.mxu0 0.0
    %866 = vmatprep.subr.mxu0 0.0
    %867 = vmatpush1.msra.mxu0 0.0
    %868 = vmatprep.subr.mxu0 0.0
    %869 = vmatpush1.msra.mxu0 0.0
    %870 = vmatprep.mubr.f32.mxu0 0.0
    %871 = vmatmul.mubr.f32.gmra.mrb[0].mxu0 %v733
    %v872 = vpop.f32.mrb[0].mxu0
    %v873 = vadd.f32 0.0, %v872
    %v874 = vpop.f32.mrb[0].mxu0
    %v875 = vadd.f32 0.0, %v874
    %876 = vdwg.mxu0
    %v877 = vadd.f32 %v506, %v802
    %v878 = vadd.f32 %v508, %v804
    %v879 = vadd.f32 %v619, %v873
    %v880 = vadd.f32 %v621, %v875
    %v881 = vmul.f32 %v877, 0.5
    %v882 = vtanh.pop %v881
    %v883 = vadd.f32 %v882, 1.0
    %v884 = vmul.f32 %v883, 0.5
    %v885 = vmul.f32 %v878, 0.5
    %v886 = vtanh.pop %v885
    %v887 = vadd.f32 %v886, 1.0
    %v888 = vmul.f32 %v887, 0.5
    %v889 = vtanh.pop %v879
    %v890 = vmul.f32 %v880, 0.5
    %v891 = vtanh.pop %v890
    %v892 = vadd.f32 %v891, 1.0
    %v893 = vmul.f32 %v892, 0.5
    %v894 = vmul.f32 %v888, %v734
    %v895 = vmul.f32 %v884, %v889
    %v896 = vadd.f32 %v894, %v895
    %v897 = vtanh.pop %v896
    %v898 = vmul.f32 %v893, %v897
    %899 = vst [vmem:[#allocation5] sm:$0xff] %v898
    %900 = vmatprep.subr.mxu0 %v670
    %901 = vmatpush1.msra.mxu0 %v669
    %902 = vmatprep.subr.mxu0 %v674
    %903 = vmatpush1.msra.mxu0 %v673
    %904 = vmatprep.subr.mxu0 %v678
    %905 = vmatpush1.msra.mxu0 %v677
    %906 = vmatprep.subr.mxu0 %v682
    %907 = vmatpush1.msra.mxu0 %v681
    %908 = vmatprep.subr.mxu0 %v686
    %909 = vmatpush1.msra.mxu0 %v685
    %910 = vmatprep.subr.mxu0 %v690
    %911 = vmatpush1.msra.mxu0 %v689
    %912 = vmatprep.subr.mxu0 %v694
    %913 = vmatpush1.msra.mxu0 %v693
    %914 = vmatprep.subr.mxu0 %v698
    %915 = vmatpush1.msra.mxu0 %v697
    %916 = vmatprep.subr.mxu0 %v702
    %917 = vmatpush1.msra.mxu0 %v701
    %918 = vmatprep.subr.mxu0 %v706
    %919 = vmatpush1.msra.mxu0 %v705
    %920 = vmatprep.subr.mxu0 %v710
    %921 = vmatpush1.msra.mxu0 %v709
    %922 = vmatprep.subr.mxu0 %v714
    %923 = vmatpush1.msra.mxu0 %v713
    %924 = vmatprep.subr.mxu0 %v718
    %925 = vmatpush1.msra.mxu0 %v717
    %926 = vmatprep.subr.mxu0 %v722
    %927 = vmatpush1.msra.mxu0 %v721
    %928 = vmatprep.subr.mxu0 %v726
    %929 = vmatpush1.msra.mxu0 %v725
    %930 = vmatprep.subr.mxu0 %v730
    %931 = vmatpush1.msra.mxu0 %v729
    %932 = vmatprep.subr.mxu0 0.0
    %933 = vmatpush1.msra.mxu0 0.0
    %934 = vmatprep.subr.mxu0 0.0
    %935 = vmatpush1.msra.mxu0 0.0
    %936 = vmatprep.subr.mxu0 0.0
    %937 = vmatpush1.msra.mxu0 0.0
    %938 = vmatprep.subr.mxu0 0.0
    %939 = vmatpush1.msra.mxu0 0.0
    %940 = vmatprep.subr.mxu0 0.0
    %941 = vmatpush1.msra.mxu0 0.0
    %942 = vmatprep.subr.mxu0 0.0
    %943 = vmatpush1.msra.mxu0 0.0
    %944 = vmatprep.subr.mxu0 0.0
    %945 = vmatpush1.msra.mxu0 0.0
    %946 = vmatprep.subr.mxu0 0.0
    %947 = vmatpush1.msra.mxu0 0.0
    %948 = vmatprep.subr.mxu0 0.0
    %949 = vmatpush1.msra.mxu0 0.0
    %950 = vmatprep.subr.mxu0 0.0
    %951 = vmatpush1.msra.mxu0 0.0
    %952 = vmatprep.subr.mxu0 0.0
    %953 = vmatpush1.msra.mxu0 0.0
    %954 = vmatprep.subr.mxu0 0.0
    %955 = vmatpush1.msra.mxu0 0.0
    %956 = vmatprep.subr.mxu0 0.0
    %957 = vmatpush1.msra.mxu0 0.0
    %958 = vmatprep.subr.mxu0 0.0
    %959 = vmatpush1.msra.mxu0 0.0
    %960 = vmatprep.subr.mxu0 0.0
    %961 = vmatpush1.msra.mxu0 0.0
    %962 = vmatprep.subr.mxu0 0.0
    %963 = vmatpush1.msra.mxu0 0.0
    %964 = vmatprep.mubr.f32.mxu0 0.0
    %965 = vmatmul.mubr.f32.gmra.mrb[0].mxu0 %v898
    %v966 = vpop.f32.mrb[0].mxu0
    %v967 = vadd.f32 0.0, %v966
    %v968 = vpop.f32.mrb[0].mxu0
    %v969 = vadd.f32 0.0, %v968
    %970 = vdwg.mxu0
    %971 = vmatprep.subr.mxu0 %v672
    %972 = vmatpush1.msra.mxu0 %v671
    %973 = vmatprep.subr.mxu0 %v676
    %974 = vmatpush1.msra.mxu0 %v675
    %975 = vmatprep.subr.mxu0 %v680
    %976 = vmatpush1.msra.mxu0 %v679
    %977 = vmatprep.subr.mxu0 %v684
    %978 = vmatpush1.msra.mxu0 %v683
    %979 = vmatprep.subr.mxu0 %v688
    %980 = vmatpush1.msra.mxu0 %v687
    %981 = vmatprep.subr.mxu0 %v692
    %982 = vmatpush1.msra.mxu0 %v691
    %983 = vmatprep.subr.mxu0 %v696
    %984 = vmatpush1.msra.mxu0 %v695
    %985 = vmatprep.subr.mxu0 %v700
    %986 = vmatpush1.msra.mxu0 %v699
    %987 = vmatprep.subr.mxu0 %v704
    %988 = vmatpush1.msra.mxu0 %v703
    %989 = vmatprep.subr.mxu0 %v708
    %990 = vmatpush1.msra.mxu0 %v707
    %991 = vmatprep.subr.mxu0 %v712
    %992 = vmatpush1.msra.mxu0 %v711
    %993 = vmatprep.subr.mxu0 %v716
    %994 = vmatpush1.msra.mxu0 %v715
    %995 = vmatprep.subr.mxu0 %v720
    %996 = vmatpush1.msra.mxu0 %v719
    %997 = vmatprep.subr.mxu0 %v724
    %998 = vmatpush1.msra.mxu0 %v723
    %999 = vmatprep.subr.mxu0 %v728
    %1000 = vmatpush1.msra.mxu0 %v727
    %1001 = vmatprep.subr.mxu0 %v732
    %1002 = vmatpush1.msra.mxu0 %v731
    %1003 = vmatprep.subr.mxu0 0.0
    %1004 = vmatpush1.msra.mxu0 0.0
    %1005 = vmatprep.subr.mxu0 0.0
    %1006 = vmatpush1.msra.mxu0 0.0
    %1007 = vmatprep.subr.mxu0 0.0
    %1008 = vmatpush1.msra.mxu0 0.0
    %1009 = vmatprep.subr.mxu0 0.0
    %1010 = vmatpush1.msra.mxu0 0.0
    %1011 = vmatprep.subr.mxu0 0.0
    %1012 = vmatpush1.msra.mxu0 0.0
    %1013 = vmatprep.subr.mxu0 0.0
    %1014 = vmatpush1.msra.mxu0 0.0
    %1015 = vmatprep.subr.mxu0 0.0
    %1016 = vmatpush1.msra.mxu0 0.0
    %1017 = vmatprep.subr.mxu0 0.0
    %1018 = vmatpush1.msra.mxu0 0.0
    %1019 = vmatprep.subr.mxu0 0.0
    %1020 = vmatpush1.msra.mxu0 0.0
    %1021 = vmatprep.subr.mxu0 0.0
    %1022 = vmatpush1.msra.mxu0 0.0
    %1023 = vmatprep.subr.mxu0 0.0
    %1024 = vmatpush1.msra.mxu0 0.0
    %1025 = vmatprep.subr.mxu0 0.0
    %1026 = vmatpush1.msra.mxu0 0.0
    %1027 = vmatprep.subr.mxu0 0.0
    %1028 = vmatpush1.msra.mxu0 0.0
    %1029 = vmatprep.subr.mxu0 0.0
    %1030 = vmatpush1.msra.mxu0 0.0
    %1031 = vmatprep.subr.mxu0 0.0
    %1032 = vmatpush1.msra.mxu0 0.0
    %1033 = vmatprep.subr.mxu0 0.0
    %1034 = vmatpush1.msra.mxu0 0.0
    %1035 = vmatprep.mubr.f32.mxu0 0.0
    %1036 = vmatmul.mubr.f32.gmra.mrb[0].mxu0 %v898
    %v1037 = vpop.f32.mrb[0].mxu0
    %v1038 = vadd.f32 0.0, %v1037
    %v1039 = vpop.f32.mrb[0].mxu0
    %v1040 = vadd.f32 0.0, %v1039
    %1041 = vdwg.mxu0
    %v1042 = vadd.f32 %v512, %v967
    %v1043 = vadd.f32 %v514, %v969
    %v1044 = vadd.f32 %v625, %v1038
    %v1045 = vadd.f32 %v627, %v1040
    %v1046 = vmul.f32 %v1042, 0.5
    %v1047 = vtanh.pop %v1046
    %v1048 = vadd.f32 %v1047, 1.0
    %v1049 = vmul.f32 %v1048, 0.5
    %v1050 = vmul.f32 %v1043, 0.5
    %v1051 = vtanh.pop %v1050
    %v1052 = vadd.f32 %v1051, 1.0
    %v1053 = vmul.f32 %v1052, 0.5
    %v1054 = vtanh.pop %v1044
    %v1055 = vmul.f32 %v1045, 0.5
    %v1056 = vtanh.pop %v1055
    %v1057 = vadd.f32 %v1056, 1.0
    %v1058 = vmul.f32 %v1057, 0.5
    %v1059 = vmul.f32 %v1053, %v896
    %v1060 = vmul.f32 %v1049, %v1054
    %v1061 = vadd.f32 %v1059, %v1060
    %v1062 = vtanh.pop %v1061
    %v1063 = vmul.f32 %v1058, %v1062
    %1064 = vst [vmem:[#allocation5 + $0x8] sm:$0xff] %v1063
    %1065 = vmatprep.subr.mxu0 %v670
    %1066 = vmatpush1.msra.mxu0 %v669
    %1067 = vmatprep.subr.mxu0 %v674
    %1068 = vmatpush1.msra.mxu0 %v673
    %1069 = vmatprep.subr.mxu0 %v678
    %1070 = vmatpush1.msra.mxu0 %v677
    %1071 = vmatprep.subr.mxu0 %v682
    %1072 = vmatpush1.msra.mxu0 %v681
    %1073 = vmatprep.subr.mxu0 %v686
    %1074 = vmatpush1.msra.mxu0 %v685
    %1075 = vmatprep.subr.mxu0 %v690
    %1076 = vmatpush1.msra.mxu0 %v689
    %1077 = vmatprep.subr.mxu0 %v694
    %1078 = vmatpush1.msra.mxu0 %v693
    %1079 = vmatprep.subr.mxu0 %v698
    %1080 = vmatpush1.msra.mxu0 %v697
    %1081 = vmatprep.subr.mxu0 %v702
    %1082 = vmatpush1.msra.mxu0 %v701
    %1083 = vmatprep.subr.mxu0 %v706
    %1084 = vmatpush1.msra.mxu0 %v705
    %1085 = vmatprep.subr.mxu0 %v710
    %1086 = vmatpush1.msra.mxu0 %v709
    %1087 = vmatprep.subr.mxu0 %v714
    %1088 = vmatpush1.msra.mxu0 %v713
    %1089 = vmatprep.subr.mxu0 %v718
    %1090 = vmatpush1.msra.mxu0 %v717
    %1091 = vmatprep.subr.mxu0 %v722
    %1092 = vmatpush1.msra.mxu0 %v721
    %1093 = vmatprep.subr.mxu0 %v726
    %1094 = vmatpush1.msra.mxu0 %v725
    %1095 = vmatprep.subr.mxu0 %v730
    %1096 = vmatpush1.msra.mxu0 %v729
    %1097 = vmatprep.subr.mxu0 0.0
    %1098 = vmatpush1.msra.mxu0 0.0
    %1099 = vmatprep.subr.mxu0 0.0
    %1100 = vmatpush1.msra.mxu0 0.0
    %1101 = vmatprep.subr.mxu0 0.0
    %1102 = vmatpush1.msra.mxu0 0.0
    %1103 = vmatprep.subr.mxu0 0.0
    %1104 = vmatpush1.msra.mxu0 0.0
    %1105 = vmatprep.subr.mxu0 0.0
    %1106 = vmatpush1.msra.mxu0 0.0
    %1107 = vmatprep.subr.mxu0 0.0
    %1108 = vmatpush1.msra.mxu0 0.0
    %1109 = vmatprep.subr.mxu0 0.0
    %1110 = vmatpush1.msra.mxu0 0.0
    %1111 = vmatprep.subr.mxu0 0.0
    %1112 = vmatpush1.msra.mxu0 0.0
    %1113 = vmatprep.subr.mxu0 0.0
    %1114 = vmatpush1.msra.mxu0 0.0
    %1115 = vmatprep.subr.mxu0 0.0
    %1116 = vmatpush1.msra.mxu0 0.0
    %1117 = vmatprep.subr.mxu0 0.0
    %1118 = vmatpush1.msra.mxu0 0.0
    %1119 = vmatprep.subr.mxu0 0.0
    %1120 = vmatpush1.msra.mxu0 0.0
    %1121 = vmatprep.subr.mxu0 0.0
    %1122 = vmatpush1.msra.mxu0 0.0
    %1123 = vmatprep.subr.mxu0 0.0
    %1124 = vmatpush1.msra.mxu0 0.0
    %1125 = vmatprep.subr.mxu0 0.0
    %1126 = vmatpush1.msra.mxu0 0.0
    %1127 = vmatprep.subr.mxu0 0.0
    %1128 = vmatpush1.msra.mxu0 0.0
    %1129 = vmatprep.mubr.f32.mxu0 0.0
    %1130 = vmatmul.mubr.f32.gmra.mrb[0].mxu0 %v1063
    %v1131 = vpop.f32.mrb[0].mxu0
    %v1132 = vadd.f32 0.0, %v1131
    %v1133 = vpop.f32.mrb[0].mxu0
    %v1134 = vadd.f32 0.0, %v1133
    %1135 = vdwg.mxu0
    %1136 = vmatprep.subr.mxu0 %v672
    %1137 = vmatpush1.msra.mxu0 %v671
    %1138 = vmatprep.subr.mxu0 %v676
    %1139 = vmatpush1.msra.mxu0 %v675
    %1140 = vmatprep.subr.mxu0 %v680
    %1141 = vmatpush1.msra.mxu0 %v679
    %1142 = vmatprep.subr.mxu0 %v684
    %1143 = vmatpush1.msra.mxu0 %v683
    %1144 = vmatprep.subr.mxu0 %v688
    %1145 = vmatpush1.msra.mxu0 %v687
    %1146 = vmatprep.subr.mxu0 %v692
    %1147 = vmatpush1.msra.mxu0 %v691
    %1148 = vmatprep.subr.mxu0 %v696
    %1149 = vmatpush1.msra.mxu0 %v695
    %1150 = vmatprep.subr.mxu0 %v700
    %1151 = vmatpush1.msra.mxu0 %v699
    %1152 = vmatprep.subr.mxu0 %v704
    %1153 = vmatpush1.msra.mxu0 %v703
    %1154 = vmatprep.subr.mxu0 %v708
    %1155 = vmatpush1.msra.mxu0 %v707
    %1156 = vmatprep.subr.mxu0 %v712
    %1157 = vmatpush1.msra.mxu0 %v711
    %1158 = vmatprep.subr.mxu0 %v716
    %1159 = vmatpush1.msra.mxu0 %v715
    %1160 = vmatprep.subr.mxu0 %v720
    %1161 = vmatpush1.msra.mxu0 %v719
    %1162 = vmatprep.subr.mxu0 %v724
    %1163 = vmatpush1.msra.mxu0 %v723
    %1164 = vmatprep.subr.mxu0 %v728
    %1165 = vmatpush1.msra.mxu0 %v727
    %1166 = vmatprep.subr.mxu0 %v732
    %1167 = vmatpush1.msra.mxu0 %v731
    %1168 = vmatprep.subr.mxu0 0.0
    %1169 = vmatpush1.msra.mxu0 0.0
    %1170 = vmatprep.subr.mxu0 0.0
    %1171 = vmatpush1.msra.mxu0 0.0
    %1172 = vmatprep.subr.mxu0 0.0
    %1173 = vmatpush1.msra.mxu0 0.0
    %1174 = vmatprep.subr.mxu0 0.0
    %1175 = vmatpush1.msra.mxu0 0.0
    %1176 = vmatprep.subr.mxu0 0.0
    %1177 = vmatpush1.msra.mxu0 0.0
    %1178 = vmatprep.subr.mxu0 0.0
    %1179 = vmatpush1.msra.mxu0 0.0
    %1180 = vmatprep.subr.mxu0 0.0
    %1181 = vmatpush1.msra.mxu0 0.0
    %1182 = vmatprep.subr.mxu0 0.0
    %1183 = vmatpush1.msra.mxu0 0.0
    %1184 = vmatprep.subr.mxu0 0.0
    %1185 = vmatpush1.msra.mxu0 0.0
    %1186 = vmatprep.subr.mxu0 0.0
    %1187 = vmatpush1.msra.mxu0 0.0
    %1188 = vmatprep.subr.mxu0 0.0
    %1189 = vmatpush1.msra.mxu0 0.0
    %1190 = vmatprep.subr.mxu0 0.0
    %1191 = vmatpush1.msra.mxu0 0.0
    %1192 = vmatprep.subr.mxu0 0.0
    %1193 = vmatpush1.msra.mxu0 0.0
    %1194 = vmatprep.subr.mxu0 0.0
    %1195 = vmatpush1.msra.mxu0 0.0
    %1196 = vmatprep.subr.mxu0 0.0
    %1197 = vmatpush1.msra.mxu0 0.0
    %1198 = vmatprep.subr.mxu0 0.0
    %1199 = vmatpush1.msra.mxu0 0.0
    %1200 = vmatprep.mubr.f32.mxu0 0.0
    %1201 = vmatmul.mubr.f32.gmra.mrb[0].mxu0 %v1063
    %v1202 = vpop.f32.mrb[0].mxu0
    %v1203 = vadd.f32 0.0, %v1202
    %v1204 = vpop.f32.mrb[0].mxu0
    %v1205 = vadd.f32 0.0, %v1204
    %1206 = vdwg.mxu0
    %v1207 = vadd.f32 %v518, %v1132
    %v1208 = vadd.f32 %v520, %v1134
    %v1209 = vadd.f32 %v631, %v1203
    %v1210 = vadd.f32 %v633, %v1205
    %v1211 = vmul.f32 %v1207, 0.5
    %v1212 = vtanh.pop %v1211
    %v1213 = vadd.f32 %v1212, 1.0
    %v1214 = vmul.f32 %v1213, 0.5
    %v1215 = vmul.f32 %v1208, 0.5
    %v1216 = vtanh.pop %v1215
    %v1217 = vadd.f32 %v1216, 1.0
    %v1218 = vmul.f32 %v1217, 0.5
    %v1219 = vtanh.pop %v1209
    %v1220 = vmul.f32 %v1210, 0.5
    %v1221 = vtanh.pop %v1220
    %v1222 = vadd.f32 %v1221, 1.0
    %v1223 = vmul.f32 %v1222, 0.5
    %v1224 = vmul.f32 %v1218, %v1061
    %v1225 = vmul.f32 %v1214, %v1219
    %v1226 = vadd.f32 %v1224, %v1225
    %v1227 = vtanh.pop %v1226
    %v1228 = vmul.f32 %v1223, %v1227
    %1229 = vst [vmem:[#allocation5 + $0x10] sm:$0xff] %v1228
    %1230 = vmatprep.subr.mxu0 %v670
    %1231 = vmatpush1.msra.mxu0 %v669
    %1232 = vmatprep.subr.mxu0 %v674
    %1233 = vmatpush1.msra.mxu0 %v673
    %1234 = vmatprep.subr.mxu0 %v678
    %1235 = vmatpush1.msra.mxu0 %v677
    %1236 = vmatprep.subr.mxu0 %v682
    %1237 = vmatpush1.msra.mxu0 %v681
    %1238 = vmatprep.subr.mxu0 %v686
    %1239 = vmatpush1.msra.mxu0 %v685
    %1240 = vmatprep.subr.mxu0 %v690
    %1241 = vmatpush1.msra.mxu0 %v689
    %1242 = vmatprep.subr.mxu0 %v694
    %1243 = vmatpush1.msra.mxu0 %v693
    %1244 = vmatprep.subr.mxu0 %v698
    %1245 = vmatpush1.msra.mxu0 %v697
    %1246 = vmatprep.subr.mxu0 %v702
    %1247 = vmatpush1.msra.mxu0 %v701
    %1248 = vmatprep.subr.mxu0 %v706
    %1249 = vmatpush1.msra.mxu0 %v705
    %1250 = vmatprep.subr.mxu0 %v710
    %1251 = vmatpush1.msra.mxu0 %v709
    %1252 = vmatprep.subr.mxu0 %v714
    %1253 = vmatpush1.msra.mxu0 %v713
    %1254 = vmatprep.subr.mxu0 %v718
    %1255 = vmatpush1.msra.mxu0 %v717
    %1256 = vmatprep.subr.mxu0 %v722
    %1257 = vmatpush1.msra.mxu0 %v721
    %1258 = vmatprep.subr.mxu0 %v726
    %1259 = vmatpush1.msra.mxu0 %v725
    %1260 = vmatprep.subr.mxu0 %v730
    %1261 = vmatpush1.msra.mxu0 %v729
    %1262 = vmatprep.subr.mxu0 0.0
    %1263 = vmatpush1.msra.mxu0 0.0
    %1264 = vmatprep.subr.mxu0 0.0
    %1265 = vmatpush1.msra.mxu0 0.0
    %1266 = vmatprep.subr.mxu0 0.0
    %1267 = vmatpush1.msra.mxu0 0.0
    %1268 = vmatprep.subr.mxu0 0.0
    %1269 = vmatpush1.msra.mxu0 0.0
    %1270 = vmatprep.subr.mxu0 0.0
    %1271 = vmatpush1.msra.mxu0 0.0
    %1272 = vmatprep.subr.mxu0 0.0
    %1273 = vmatpush1.msra.mxu0 0.0
    %1274 = vmatprep.subr.mxu0 0.0
    %1275 = vmatpush1.msra.mxu0 0.0
    %1276 = vmatprep.subr.mxu0 0.0
    %1277 = vmatpush1.msra.mxu0 0.0
    %1278 = vmatprep.subr.mxu0 0.0
    %1279 = vmatpush1.msra.mxu0 0.0
    %1280 = vmatprep.subr.mxu0 0.0
    %1281 = vmatpush1.msra.mxu0 0.0
    %1282 = vmatprep.subr.mxu0 0.0
    %1283 = vmatpush1.msra.mxu0 0.0
    %1284 = vmatprep.subr.mxu0 0.0
    %1285 = vmatpush1.msra.mxu0 0.0
    %1286 = vmatprep.subr.mxu0 0.0
    %1287 = vmatpush1.msra.mxu0 0.0
    %1288 = vmatprep.subr.mxu0 0.0
    %1289 = vmatpush1.msra.mxu0 0.0
    %1290 = vmatprep.subr.mxu0 0.0
    %1291 = vmatpush1.msra.mxu0 0.0
    %1292 = vmatprep.subr.mxu0 0.0
    %1293 = vmatpush1.msra.mxu0 0.0
    %1294 = vmatprep.mubr.f32.mxu0 0.0
    %1295 = vmatmul.mubr.f32.gmra.mrb[0].mxu0 %v1228
    %v1296 = vpop.f32.mrb[0].mxu0
    %v1297 = vadd.f32 0.0, %v1296
    %v1298 = vpop.f32.mrb[0].mxu0
    %v1299 = vadd.f32 0.0, %v1298
    %1300 = vdwg.mxu0
    %1301 = vmatprep.subr.mxu0 %v672
    %1302 = vmatpush1.msra.mxu0 %v671
    %1303 = vmatprep.subr.mxu0 %v676
    %1304 = vmatpush1.msra.mxu0 %v675
    %1305 = vmatprep.subr.mxu0 %v680
    %1306 = vmatpush1.msra.mxu0 %v679
    %1307 = vmatprep.subr.mxu0 %v684
    %1308 = vmatpush1.msra.mxu0 %v683
    %1309 = vmatprep.subr.mxu0 %v688
    %1310 = vmatpush1.msra.mxu0 %v687
    %1311 = vmatprep.subr.mxu0 %v692
    %1312 = vmatpush1.msra.mxu0 %v691
    %1313 = vmatprep.subr.mxu0 %v696
    %1314 = vmatpush1.msra.mxu0 %v695
    %1315 = vmatprep.subr.mxu0 %v700
    %1316 = vmatpush1.msra.mxu0 %v699
    %1317 = vmatprep.subr.mxu0 %v704
    %1318 = vmatpush1.msra.mxu0 %v703
    %1319 = vmatprep.subr.mxu0 %v708
    %1320 = vmatpush1.msra.mxu0 %v707
    %1321 = vmatprep.subr.mxu0 %v712
    %1322 = vmatpush1.msra.mxu0 %v711
    %1323 = vmatprep.subr.mxu0 %v716
    %1324 = vmatpush1.msra.mxu0 %v715
    %1325 = vmatprep.subr.mxu0 %v720
    %1326 = vmatpush1.msra.mxu0 %v719
    %1327 = vmatprep.subr.mxu0 %v724
    %1328 = vmatpush1.msra.mxu0 %v723
    %1329 = vmatprep.subr.mxu0 %v728
    %1330 = vmatpush1.msra.mxu0 %v727
    %1331 = vmatprep.subr.mxu0 %v732
    %1332 = vmatpush1.msra.mxu0 %v731
    %1333 = vmatprep.subr.mxu0 0.0
    %1334 = vmatpush1.msra.mxu0 0.0
    %1335 = vmatprep.subr.mxu0 0.0
    %1336 = vmatpush1.msra.mxu0 0.0
    %1337 = vmatprep.subr.mxu0 0.0
    %1338 = vmatpush1.msra.mxu0 0.0
    %1339 = vmatprep.subr.mxu0 0.0
    %1340 = vmatpush1.msra.mxu0 0.0
    %1341 = vmatprep.subr.mxu0 0.0
    %1342 = vmatpush1.msra.mxu0 0.0
    %1343 = vmatprep.subr.mxu0 0.0
    %1344 = vmatpush1.msra.mxu0 0.0
    %1345 = vmatprep.subr.mxu0 0.0
    %1346 = vmatpush1.msra.mxu0 0.0
    %1347 = vmatprep.subr.mxu0 0.0
    %1348 = vmatpush1.msra.mxu0 0.0
    %1349 = vmatprep.subr.mxu0 0.0
    %1350 = vmatpush1.msra.mxu0 0.0
    %1351 = vmatprep.subr.mxu0 0.0
    %1352 = vmatpush1.msra.mxu0 0.0
    %1353 = vmatprep.subr.mxu0 0.0
    %1354 = vmatpush1.msra.mxu0 0.0
    %1355 = vmatprep.subr.mxu0 0.0
    %1356 = vmatpush1.msra.mxu0 0.0
    %1357 = vmatprep.subr.mxu0 0.0
    %1358 = vmatpush1.msra.mxu0 0.0
    %1359 = vmatprep.subr.mxu0 0.0
    %1360 = vmatpush1.msra.mxu0 0.0
    %1361 = vmatprep.subr.mxu0 0.0
    %1362 = vmatpush1.msra.mxu0 0.0
    %1363 = vmatprep.subr.mxu0 0.0
    %1364 = vmatpush1.msra.mxu0 0.0
    %1365 = vmatprep.mubr.f32.mxu0 0.0
    %1366 = vmatmul.mubr.f32.gmra.mrb[0].mxu0 %v1228
    %v1367 = vpop.f32.mrb[0].mxu0
    %v1368 = vadd.f32 0.0, %v1367
    %v1369 = vpop.f32.mrb[0].mxu0
    %v1370 = vadd.f32 0.0, %v1369
    %1371 = vdwg.mxu0
    %v1372 = vadd.f32 %v524, %v1297
    %v1373 = vadd.f32 %v526, %v1299
    %v1374 = vadd.f32 %v637, %v1368
    %v1375 = vadd.f32 %v639, %v1370
    %v1376 = vmul.f32 %v1372, 0.5
    %v1377 = vtanh.pop %v1376
    %v1378 = vadd.f32 %v1377, 1.0
    %v1379 = vmul.f32 %v1378, 0.5
    %v1380 = vmul.f32 %v1373, 0.5
    %v1381 = vtanh.pop %v1380
    %v1382 = vadd.f32 %v1381, 1.0
    %v1383 = vmul.f32 %v1382, 0.5
    %v1384 = vtanh.pop %v1374
    %v1385 = vmul.f32 %v1375, 0.5
    %v1386 = vtanh.pop %v1385
    %v1387 = vadd.f32 %v1386, 1.0
    %v1388 = vmul.f32 %v1387, 0.5
    %v1389 = vmul.f32 %v1383, %v1226
    %v1390 = vmul.f32 %v1379, %v1384
    %v1391 = vadd.f32 %v1389, %v1390
    %v1392 = vtanh.pop %v1391
    %v1393 = vmul.f32 %v1388, %v1392
    %1394 = vst [vmem:[#allocation5 + $0x18] sm:$0xff] %v1393
    %1395 = vmatprep.subr.mxu0 %v670
    %1396 = vmatpush1.msra.mxu0 %v669
    %1397 = vmatprep.subr.mxu0 %v674
    %1398 = vmatpush1.msra.mxu0 %v673
    %1399 = vmatprep.subr.mxu0 %v678
    %1400 = vmatpush1.msra.mxu0 %v677
    %1401 = vmatprep.subr.mxu0 %v682
    %1402 = vmatpush1.msra.mxu0 %v681
    %1403 = vmatprep.subr.mxu0 %v686
    %1404 = vmatpush1.msra.mxu0 %v685
    %1405 = vmatprep.subr.mxu0 %v690
    %1406 = vmatpush1.msra.mxu0 %v689
    %1407 = vmatprep.subr.mxu0 %v694
    %1408 = vmatpush1.msra.mxu0 %v693
    %1409 = vmatprep.subr.mxu0 %v698
    %1410 = vmatpush1.msra.mxu0 %v697
    %1411 = vmatprep.subr.mxu0 %v702
    %1412 = vmatpush1.msra.mxu0 %v701
    %1413 = vmatprep.subr.mxu0 %v706
    %1414 = vmatpush1.msra.mxu0 %v705
    %1415 = vmatprep.subr.mxu0 %v710
    %1416 = vmatpush1.msra.mxu0 %v709
    %1417 = vmatprep.subr.mxu0 %v714
    %1418 = vmatpush1.msra.mxu0 %v713
    %1419 = vmatprep.subr.mxu0 %v718
    %1420 = vmatpush1.msra.mxu0 %v717
    %1421 = vmatprep.subr.mxu0 %v722
    %1422 = vmatpush1.msra.mxu0 %v721
    %1423 = vmatprep.subr.mxu0 %v726
    %1424 = vmatpush1.msra.mxu0 %v725
    %1425 = vmatprep.subr.mxu0 %v730
    %1426 = vmatpush1.msra.mxu0 %v729
    %1427 = vmatprep.subr.mxu0 0.0
    %1428 = vmatpush1.msra.mxu0 0.0
    %1429 = vmatprep.subr.mxu0 0.0
    %1430 = vmatpush1.msra.mxu0 0.0
    %1431 = vmatprep.subr.mxu0 0.0
    %1432 = vmatpush1.msra.mxu0 0.0
    %1433 = vmatprep.subr.mxu0 0.0
    %1434 = vmatpush1.msra.mxu0 0.0
    %1435 = vmatprep.subr.mxu0 0.0
    %1436 = vmatpush1.msra.mxu0 0.0
    %1437 = vmatprep.subr.mxu0 0.0
    %1438 = vmatpush1.msra.mxu0 0.0
    %1439 = vmatprep.subr.mxu0 0.0
    %1440 = vmatpush1.msra.mxu0 0.0
    %1441 = vmatprep.subr.mxu0 0.0
    %1442 = vmatpush1.msra.mxu0 0.0
    %1443 = vmatprep.subr.mxu0 0.0
    %1444 = vmatpush1.msra.mxu0 0.0
    %1445 = vmatprep.subr.mxu0 0.0
    %1446 = vmatpush1.msra.mxu0 0.0
    %1447 = vmatprep.subr.mxu0 0.0
    %1448 = vmatpush1.msra.mxu0 0.0
    %1449 = vmatprep.subr.mxu0 0.0
    %1450 = vmatpush1.msra.mxu0 0.0
    %1451 = vmatprep.subr.mxu0 0.0
    %1452 = vmatpush1.msra.mxu0 0.0
    %1453 = vmatprep.subr.mxu0 0.0
    %1454 = vmatpush1.msra.mxu0 0.0
    %1455 = vmatprep.subr.mxu0 0.0
    %1456 = vmatpush1.msra.mxu0 0.0
    %1457 = vmatprep.subr.mxu0 0.0
    %1458 = vmatpush1.msra.mxu0 0.0
    %1459 = vmatprep.mubr.f32.mxu0 0.0
    %1460 = vmatmul.mubr.f32.gmra.mrb[0].mxu0 %v1393
    %v1461 = vpop.f32.mrb[0].mxu0
    %v1462 = vadd.f32 0.0, %v1461
    %v1463 = vpop.f32.mrb[0].mxu0
    %v1464 = vadd.f32 0.0, %v1463
    %1465 = vdwg.mxu0
    %1466 = vmatprep.subr.mxu0 %v672
    %1467 = vmatpush1.msra.mxu0 %v671
    %1468 = vmatprep.subr.mxu0 %v676
    %1469 = vmatpush1.msra.mxu0 %v675
    %1470 = vmatprep.subr.mxu0 %v680
    %1471 = vmatpush1.msra.mxu0 %v679
    %1472 = vmatprep.subr.mxu0 %v684
    %1473 = vmatpush1.msra.mxu0 %v683
    %1474 = vmatprep.subr.mxu0 %v688
    %1475 = vmatpush1.msra.mxu0 %v687
    %1476 = vmatprep.subr.mxu0 %v692
    %1477 = vmatpush1.msra.mxu0 %v691
    %1478 = vmatprep.subr.mxu0 %v696
    %1479 = vmatpush1.msra.mxu0 %v695
    %1480 = vmatprep.subr.mxu0 %v700
    %1481 = vmatpush1.msra.mxu0 %v699
    %1482 = vmatprep.subr.mxu0 %v704
    %1483 = vmatpush1.msra.mxu0 %v703
    %1484 = vmatprep.subr.mxu0 %v708
    %1485 = vmatpush1.msra.mxu0 %v707
    %1486 = vmatprep.subr.mxu0 %v712
    %1487 = vmatpush1.msra.mxu0 %v711
    %1488 = vmatprep.subr.mxu0 %v716
    %1489 = vmatpush1.msra.mxu0 %v715
    %1490 = vmatprep.subr.mxu0 %v720
    %1491 = vmatpush1.msra.mxu0 %v719
    %1492 = vmatprep.subr.mxu0 %v724
    %1493 = vmatpush1.msra.mxu0 %v723
    %1494 = vmatprep.subr.mxu0 %v728
    %1495 = vmatpush1.msra.mxu0 %v727
    %1496 = vmatprep.subr.mxu0 %v732
    %1497 = vmatpush1.msra.mxu0 %v731
    %1498 = vmatprep.subr.mxu0 0.0
    %1499 = vmatpush1.msra.mxu0 0.0
    %1500 = vmatprep.subr.mxu0 0.0
    %1501 = vmatpush1.msra.mxu0 0.0
    %1502 = vmatprep.subr.mxu0 0.0
    %1503 = vmatpush1.msra.mxu0 0.0
    %1504 = vmatprep.subr.mxu0 0.0
    %1505 = vmatpush1.msra.mxu0 0.0
    %1506 = vmatprep.subr.mxu0 0.0
    %1507 = vmatpush1.msra.mxu0 0.0
    %1508 = vmatprep.subr.mxu0 0.0
    %1509 = vmatpush1.msra.mxu0 0.0
    %1510 = vmatprep.subr.mxu0 0.0
    %1511 = vmatpush1.msra.mxu0 0.0
    %1512 = vmatprep.subr.mxu0 0.0
    %1513 = vmatpush1.msra.mxu0 0.0
    %1514 = vmatprep.subr.mxu0 0.0
    %1515 = vmatpush1.msra.mxu0 0.0
    %1516 = vmatprep.subr.mxu0 0.0
    %1517 = vmatpush1.msra.mxu0 0.0
    %1518 = vmatprep.subr.mxu0 0.0
    %1519 = vmatpush1.msra.mxu0 0.0
    %1520 = vmatprep.subr.mxu0 0.0
    %1521 = vmatpush1.msra.mxu0 0.0
    %1522 = vmatprep.subr.mxu0 0.0
    %1523 = vmatpush1.msra.mxu0 0.0
    %1524 = vmatprep.subr.mxu0 0.0
    %1525 = vmatpush1.msra.mxu0 0.0
    %1526 = vmatprep.subr.mxu0 0.0
    %1527 = vmatpush1.msra.mxu0 0.0
    %1528 = vmatprep.subr.mxu0 0.0
    %1529 = vmatpush1.msra.mxu0 0.0
    %1530 = vmatprep.mubr.f32.mxu0 0.0
    %1531 = vmatmul.mubr.f32.gmra.mrb[0].mxu0 %v1393
    %v1532 = vpop.f32.mrb[0].mxu0
    %v1533 = vadd.f32 0.0, %v1532
    %v1534 = vpop.f32.mrb[0].mxu0
    %v1535 = vadd.f32 0.0, %v1534
    %1536 = vdwg.mxu0
    %v1537 = vadd.f32 %v530, %v1462
    %v1538 = vadd.f32 %v532, %v1464
    %v1539 = vadd.f32 %v643, %v1533
    %v1540 = vadd.f32 %v645, %v1535
    %v1541 = vmul.f32 %v1537, 0.5
    %v1542 = vtanh.pop %v1541
    %v1543 = vadd.f32 %v1542, 1.0
    %v1544 = vmul.f32 %v1543, 0.5
    %v1545 = vmul.f32 %v1538, 0.5
    %v1546 = vtanh.pop %v1545
    %v1547 = vadd.f32 %v1546, 1.0
    %v1548 = vmul.f32 %v1547, 0.5
    %v1549 = vtanh.pop %v1539
    %v1550 = vmul.f32 %v1540, 0.5
    %v1551 = vtanh.pop %v1550
    %v1552 = vadd.f32 %v1551, 1.0
    %v1553 = vmul.f32 %v1552, 0.5
    %v1554 = vmul.f32 %v1548, %v1391
    %v1555 = vmul.f32 %v1544, %v1549
    %v1556 = vadd.f32 %v1554, %v1555
    %v1557 = vtanh.pop %v1556
    %v1558 = vmul.f32 %v1553, %v1557
    %1559 = vst [vmem:[#allocation5 + $0x20] sm:$0xff] %v1558
    %1560 = vmatprep.subr.mxu0 %v670
    %1561 = vmatpush1.msra.mxu0 %v669
    %1562 = vmatprep.subr.mxu0 %v674
    %1563 = vmatpush1.msra.mxu0 %v673
    %1564 = vmatprep.subr.mxu0 %v678
    %1565 = vmatpush1.msra.mxu0 %v677
    %1566 = vmatprep.subr.mxu0 %v682
    %1567 = vmatpush1.msra.mxu0 %v681
    %1568 = vmatprep.subr.mxu0 %v686
    %1569 = vmatpush1.msra.mxu0 %v685
    %1570 = vmatprep.subr.mxu0 %v690
    %1571 = vmatpush1.msra.mxu0 %v689
    %1572 = vmatprep.subr.mxu0 %v694
    %1573 = vmatpush1.msra.mxu0 %v693
    %1574 = vmatprep.subr.mxu0 %v698
    %1575 = vmatpush1.msra.mxu0 %v697
    %1576 = vmatprep.subr.mxu0 %v702
    %1577 = vmatpush1.msra.mxu0 %v701
    %1578 = vmatprep.subr.mxu0 %v706
    %1579 = vmatpush1.msra.mxu0 %v705
    %1580 = vmatprep.subr.mxu0 %v710
    %1581 = vmatpush1.msra.mxu0 %v709
    %1582 = vmatprep.subr.mxu0 %v714
    %1583 = vmatpush1.msra.mxu0 %v713
    %1584 = vmatprep.subr.mxu0 %v718
    %1585 = vmatpush1.msra.mxu0 %v717
    %1586 = vmatprep.subr.mxu0 %v722
    %1587 = vmatpush1.msra.mxu0 %v721
    %1588 = vmatprep.subr.mxu0 %v726
    %1589 = vmatpush1.msra.mxu0 %v725
    %1590 = vmatprep.subr.mxu0 %v730
    %1591 = vmatpush1.msra.mxu0 %v729
    %1592 = vmatprep.subr.mxu0 0.0
    %1593 = vmatpush1.msra.mxu0 0.0
    %1594 = vmatprep.subr.mxu0 0.0
    %1595 = vmatpush1.msra.mxu0 0.0
    %1596 = vmatprep.subr.mxu0 0.0
    %1597 = vmatpush1.msra.mxu0 0.0
    %1598 = vmatprep.subr.mxu0 0.0
    %1599 = vmatpush1.msra.mxu0 0.0
    %1600 = vmatprep.subr.mxu0 0.0
    %1601 = vmatpush1.msra.mxu0 0.0
    %1602 = vmatprep.subr.mxu0 0.0
    %1603 = vmatpush1.msra.mxu0 0.0
    %1604 = vmatprep.subr.mxu0 0.0
    %1605 = vmatpush1.msra.mxu0 0.0
    %1606 = vmatprep.subr.mxu0 0.0
    %1607 = vmatpush1.msra.mxu0 0.0
    %1608 = vmatprep.subr.mxu0 0.0
    %1609 = vmatpush1.msra.mxu0 0.0
    %1610 = vmatprep.subr.mxu0 0.0
    %1611 = vmatpush1.msra.mxu0 0.0
    %1612 = vmatprep.subr.mxu0 0.0
    %1613 = vmatpush1.msra.mxu0 0.0
    %1614 = vmatprep.subr.mxu0 0.0
    %1615 = vmatpush1.msra.mxu0 0.0
    %1616 = vmatprep.subr.mxu0 0.0
    %1617 = vmatpush1.msra.mxu0 0.0
    %1618 = vmatprep.subr.mxu0 0.0
    %1619 = vmatpush1.msra.mxu0 0.0
    %1620 = vmatprep.subr.mxu0 0.0
    %1621 = vmatpush1.msra.mxu0 0.0
    %1622 = vmatprep.subr.mxu0 0.0
    %1623 = vmatpush1.msra.mxu0 0.0
    %1624 = vmatprep.mubr.f32.mxu0 0.0
    %1625 = vmatmul.mubr.f32.gmra.mrb[0].mxu0 %v1558
    %v1626 = vpop.f32.mrb[0].mxu0
    %v1627 = vadd.f32 0.0, %v1626
    %v1628 = vpop.f32.mrb[0].mxu0
    %v1629 = vadd.f32 0.0, %v1628
    %1630 = vdwg.mxu0
    %1631 = vmatprep.subr.mxu0 %v672
    %1632 = vmatpush1.msra.mxu0 %v671
    %1633 = vmatprep.subr.mxu0 %v676
    %1634 = vmatpush1.msra.mxu0 %v675
    %1635 = vmatprep.subr.mxu0 %v680
    %1636 = vmatpush1.msra.mxu0 %v679
    %1637 = vmatprep.subr.mxu0 %v684
    %1638 = vmatpush1.msra.mxu0 %v683
    %1639 = vmatprep.subr.mxu0 %v688
    %1640 = vmatpush1.msra.mxu0 %v687
    %1641 = vmatprep.subr.mxu0 %v692
    %1642 = vmatpush1.msra.mxu0 %v691
    %1643 = vmatprep.subr.mxu0 %v696
    %1644 = vmatpush1.msra.mxu0 %v695
    %1645 = vmatprep.subr.mxu0 %v700
    %1646 = vmatpush1.msra.mxu0 %v699
    %1647 = vmatprep.subr.mxu0 %v704
    %1648 = vmatpush1.msra.mxu0 %v703
    %1649 = vmatprep.subr.mxu0 %v708
    %1650 = vmatpush1.msra.mxu0 %v707
    %1651 = vmatprep.subr.mxu0 %v712
    %1652 = vmatpush1.msra.mxu0 %v711
    %1653 = vmatprep.subr.mxu0 %v716
    %1654 = vmatpush1.msra.mxu0 %v715
    %1655 = vmatprep.subr.mxu0 %v720
    %1656 = vmatpush1.msra.mxu0 %v719
    %1657 = vmatprep.subr.mxu0 %v724
    %1658 = vmatpush1.msra.mxu0 %v723
    %1659 = vmatprep.subr.mxu0 %v728
    %1660 = vmatpush1.msra.mxu0 %v727
    %1661 = vmatprep.subr.mxu0 %v732
    %1662 = vmatpush1.msra.mxu0 %v731
    %1663 = vmatprep.subr.mxu0 0.0
    %1664 = vmatpush1.msra.mxu0 0.0
    %1665 = vmatprep.subr.mxu0 0.0
    %1666 = vmatpush1.msra.mxu0 0.0
    %1667 = vmatprep.subr.mxu0 0.0
    %1668 = vmatpush1.msra.mxu0 0.0
    %1669 = vmatprep.subr.mxu0 0.0
    %1670 = vmatpush1.msra.mxu0 0.0
    %1671 = vmatprep.subr.mxu0 0.0
    %1672 = vmatpush1.msra.mxu0 0.0
    %1673 = vmatprep.subr.mxu0 0.0
    %1674 = vmatpush1.msra.mxu0 0.0
    %1675 = vmatprep.subr.mxu0 0.0
    %1676 = vmatpush1.msra.mxu0 0.0
    %1677 = vmatprep.subr.mxu0 0.0
    %1678 = vmatpush1.msra.mxu0 0.0
    %1679 = vmatprep.subr.mxu0 0.0
    %1680 = vmatpush1.msra.mxu0 0.0
    %1681 = vmatprep.subr.mxu0 0.0
    %1682 = vmatpush1.msra.mxu0 0.0
    %1683 = vmatprep.subr.mxu0 0.0
    %1684 = vmatpush1.msra.mxu0 0.0
    %1685 = vmatprep.subr.mxu0 0.0
    %1686 = vmatpush1.msra.mxu0 0.0
    %1687 = vmatprep.subr.mxu0 0.0
    %1688 = vmatpush1.msra.mxu0 0.0
    %1689 = vmatprep.subr.mxu0 0.0
    %1690 = vmatpush1.msra.mxu0 0.0
    %1691 = vmatprep.subr.mxu0 0.0
    %1692 = vmatpush1.msra.mxu0 0.0
    %1693 = vmatprep.subr.mxu0 0.0
    %1694 = vmatpush1.msra.mxu0 0.0
    %1695 = vmatprep.mubr.f32.mxu0 0.0
    %1696 = vmatmul.mubr.f32.gmra.mrb[0].mxu0 %v1558
    %v1697 = vpop.f32.mrb[0].mxu0
    %v1698 = vadd.f32 0.0, %v1697
    %v1699 = vpop.f32.mrb[0].mxu0
    %v1700 = vadd.f32 0.0, %v1699
    %1701 = vdwg.mxu0
    %v1702 = vadd.f32 %v536, %v1627
    %v1703 = vadd.f32 %v538, %v1629
    %v1704 = vadd.f32 %v649, %v1698
    %v1705 = vadd.f32 %v651, %v1700
    %v1706 = vmul.f32 %v1702, 0.5
    %v1707 = vtanh.pop %v1706
    %v1708 = vadd.f32 %v1707, 1.0
    %v1709 = vmul.f32 %v1708, 0.5
    %v1710 = vmul.f32 %v1703, 0.5
    %v1711 = vtanh.pop %v1710
    %v1712 = vadd.f32 %v1711, 1.0
    %v1713 = vmul.f32 %v1712, 0.5
    %v1714 = vtanh.pop %v1704
    %v1715 = vmul.f32 %v1705, 0.5
    %v1716 = vtanh.pop %v1715
    %v1717 = vadd.f32 %v1716, 1.0
    %v1718 = vmul.f32 %v1717, 0.5
    %v1719 = vmul.f32 %v1713, %v1556
    %v1720 = vmul.f32 %v1709, %v1714
    %v1721 = vadd.f32 %v1719, %v1720
    %v1722 = vtanh.pop %v1721
    %v1723 = vmul.f32 %v1718, %v1722
    %1724 = vst [vmem:[#allocation5 + $0x28] sm:$0xff] %v1723
    %1725 = vmatprep.subr.mxu0 %v670
    %1726 = vmatpush1.msra.mxu0 %v669
    %1727 = vmatprep.subr.mxu0 %v674
    %1728 = vmatpush1.msra.mxu0 %v673
    %1729 = vmatprep.subr.mxu0 %v678
    %1730 = vmatpush1.msra.mxu0 %v677
    %1731 = vmatprep.subr.mxu0 %v682
    %1732 = vmatpush1.msra.mxu0 %v681
    %1733 = vmatprep.subr.mxu0 %v686
    %1734 = vmatpush1.msra.mxu0 %v685
    %1735 = vmatprep.subr.mxu0 %v690
    %1736 = vmatpush1.msra.mxu0 %v689
    %1737 = vmatprep.subr.mxu0 %v694
    %1738 = vmatpush1.msra.mxu0 %v693
    %1739 = vmatprep.subr.mxu0 %v698
    %1740 = vmatpush1.msra.mxu0 %v697
    %1741 = vmatprep.subr.mxu0 %v702
    %1742 = vmatpush1.msra.mxu0 %v701
    %1743 = vmatprep.subr.mxu0 %v706
    %1744 = vmatpush1.msra.mxu0 %v705
    %1745 = vmatprep.subr.mxu0 %v710
    %1746 = vmatpush1.msra.mxu0 %v709
    %1747 = vmatprep.subr.mxu0 %v714
    %1748 = vmatpush1.msra.mxu0 %v713
    %1749 = vmatprep.subr.mxu0 %v718
    %1750 = vmatpush1.msra.mxu0 %v717
    %1751 = vmatprep.subr.mxu0 %v722
    %1752 = vmatpush1.msra.mxu0 %v721
    %1753 = vmatprep.subr.mxu0 %v726
    %1754 = vmatpush1.msra.mxu0 %v725
    %1755 = vmatprep.subr.mxu0 %v730
    %1756 = vmatpush1.msra.mxu0 %v729
    %1757 = vmatprep.subr.mxu0 0.0
    %1758 = vmatpush1.msra.mxu0 0.0
    %1759 = vmatprep.subr.mxu0 0.0
    %1760 = vmatpush1.msra.mxu0 0.0
    %1761 = vmatprep.subr.mxu0 0.0
    %1762 = vmatpush1.msra.mxu0 0.0
    %1763 = vmatprep.subr.mxu0 0.0
    %1764 = vmatpush1.msra.mxu0 0.0
    %1765 = vmatprep.subr.mxu0 0.0
    %1766 = vmatpush1.msra.mxu0 0.0
    %1767 = vmatprep.subr.mxu0 0.0
    %1768 = vmatpush1.msra.mxu0 0.0
    %1769 = vmatprep.subr.mxu0 0.0
    %1770 = vmatpush1.msra.mxu0 0.0
    %1771 = vmatprep.subr.mxu0 0.0
    %1772 = vmatpush1.msra.mxu0 0.0
    %1773 = vmatprep.subr.mxu0 0.0
    %1774 = vmatpush1.msra.mxu0 0.0
    %1775 = vmatprep.subr.mxu0 0.0
    %1776 = vmatpush1.msra.mxu0 0.0
    %1777 = vmatprep.subr.mxu0 0.0
    %1778 = vmatpush1.msra.mxu0 0.0
    %1779 = vmatprep.subr.mxu0 0.0
    %1780 = vmatpush1.msra.mxu0 0.0
    %1781 = vmatprep.subr.mxu0 0.0
    %1782 = vmatpush1.msra.mxu0 0.0
    %1783 = vmatprep.subr.mxu0 0.0
    %1784 = vmatpush1.msra.mxu0 0.0
    %1785 = vmatprep.subr.mxu0 0.0
    %1786 = vmatpush1.msra.mxu0 0.0
    %1787 = vmatprep.subr.mxu0 0.0
    %1788 = vmatpush1.msra.mxu0 0.0
    %1789 = vmatprep.mubr.f32.mxu0 0.0
    %1790 = vmatmul.mubr.f32.gmra.mrb[0].mxu0 %v1723
    %v1791 = vpop.f32.mrb[0].mxu0
    %v1792 = vadd.f32 0.0, %v1791
    %v1793 = vpop.f32.mrb[0].mxu0
    %v1794 = vadd.f32 0.0, %v1793
    %1795 = vdwg.mxu0
    %1796 = vmatprep.subr.mxu0 %v672
    %1797 = vmatpush1.msra.mxu0 %v671
    %1798 = vmatprep.subr.mxu0 %v676
    %1799 = vmatpush1.msra.mxu0 %v675
    %1800 = vmatprep.subr.mxu0 %v680
    %1801 = vmatpush1.msra.mxu0 %v679
    %1802 = vmatprep.subr.mxu0 %v684
    %1803 = vmatpush1.msra.mxu0 %v683
    %1804 = vmatprep.subr.mxu0 %v688
    %1805 = vmatpush1.msra.mxu0 %v687
    %1806 = vmatprep.subr.mxu0 %v692
    %1807 = vmatpush1.msra.mxu0 %v691
    %1808 = vmatprep.subr.mxu0 %v696
    %1809 = vmatpush1.msra.mxu0 %v695
    %1810 = vmatprep.subr.mxu0 %v700
    %1811 = vmatpush1.msra.mxu0 %v699
    %1812 = vmatprep.subr.mxu0 %v704
    %1813 = vmatpush1.msra.mxu0 %v703
    %1814 = vmatprep.subr.mxu0 %v708
    %1815 = vmatpush1.msra.mxu0 %v707
    %1816 = vmatprep.subr.mxu0 %v712
    %1817 = vmatpush1.msra.mxu0 %v711
    %1818 = vmatprep.subr.mxu0 %v716
    %1819 = vmatpush1.msra.mxu0 %v715
    %1820 = vmatprep.subr.mxu0 %v720
    %1821 = vmatpush1.msra.mxu0 %v719
    %1822 = vmatprep.subr.mxu0 %v724
    %1823 = vmatpush1.msra.mxu0 %v723
    %1824 = vmatprep.subr.mxu0 %v728
    %1825 = vmatpush1.msra.mxu0 %v727
    %1826 = vmatprep.subr.mxu0 %v732
    %1827 = vmatpush1.msra.mxu0 %v731
    %1828 = vmatprep.subr.mxu0 0.0
    %1829 = vmatpush1.msra.mxu0 0.0
    %1830 = vmatprep.subr.mxu0 0.0
    %1831 = vmatpush1.msra.mxu0 0.0
    %1832 = vmatprep.subr.mxu0 0.0
    %1833 = vmatpush1.msra.mxu0 0.0
    %1834 = vmatprep.subr.mxu0 0.0
    %1835 = vmatpush1.msra.mxu0 0.0
    %1836 = vmatprep.subr.mxu0 0.0
    %1837 = vmatpush1.msra.mxu0 0.0
    %1838 = vmatprep.subr.mxu0 0.0
    %1839 = vmatpush1.msra.mxu0 0.0
    %1840 = vmatprep.subr.mxu0 0.0
    %1841 = vmatpush1.msra.mxu0 0.0
    %1842 = vmatprep.subr.mxu0 0.0
    %1843 = vmatpush1.msra.mxu0 0.0
    %1844 = vmatprep.subr.mxu0 0.0
    %1845 = vmatpush1.msra.mxu0 0.0
    %1846 = vmatprep.subr.mxu0 0.0
    %1847 = vmatpush1.msra.mxu0 0.0
    %1848 = vmatprep.subr.mxu0 0.0
    %1849 = vmatpush1.msra.mxu0 0.0
    %1850 = vmatprep.subr.mxu0 0.0
    %1851 = vmatpush1.msra.mxu0 0.0
    %1852 = vmatprep.subr.mxu0 0.0
    %1853 = vmatpush1.msra.mxu0 0.0
    %1854 = vmatprep.subr.mxu0 0.0
    %1855 = vmatpush1.msra.mxu0 0.0
    %1856 = vmatprep.subr.mxu0 0.0
    %1857 = vmatpush1.msra.mxu0 0.0
    %1858 = vmatprep.subr.mxu0 0.0
    %1859 = vmatpush1.msra.mxu0 0.0
    %1860 = vmatprep.mubr.f32.mxu0 0.0
    %1861 = vmatmul.mubr.f32.gmra.mrb[0].mxu0 %v1723
    %v1862 = vpop.f32.mrb[0].mxu0
    %v1863 = vadd.f32 0.0, %v1862
    %v1864 = vpop.f32.mrb[0].mxu0
    %v1865 = vadd.f32 0.0, %v1864
    %1866 = vdwg.mxu0
    %v1867 = vadd.f32 %v542, %v1792
    %v1868 = vadd.f32 %v544, %v1794
    %v1869 = vadd.f32 %v655, %v1863
    %v1870 = vadd.f32 %v657, %v1865
    %v1871 = vmul.f32 %v1867, 0.5
    %v1872 = vtanh.pop %v1871
    %v1873 = vadd.f32 %v1872, 1.0
    %v1874 = vmul.f32 %v1873, 0.5
    %v1875 = vmul.f32 %v1868, 0.5
    %v1876 = vtanh.pop %v1875
    %v1877 = vadd.f32 %v1876, 1.0
    %v1878 = vmul.f32 %v1877, 0.5
    %v1879 = vtanh.pop %v1869
    %v1880 = vmul.f32 %v1870, 0.5
    %v1881 = vtanh.pop %v1880
    %v1882 = vadd.f32 %v1881, 1.0
    %v1883 = vmul.f32 %v1882, 0.5
    %v1884 = vmul.f32 %v1878, %v1721
    %v1885 = vmul.f32 %v1874, %v1879
    %v1886 = vadd.f32 %v1884, %v1885
    %v1887 = vtanh.pop %v1886
    %v1888 = vmul.f32 %v1883, %v1887
    %1889 = vst [vmem:[#allocation5 + $0x30] sm:$0xff] %v1888
    %1890 = vmatprep.subr.mxu0 %v670
    %1891 = vmatpush1.msra.mxu0 %v669
    %1892 = vmatprep.subr.mxu0 %v674
    %1893 = vmatpush1.msra.mxu0 %v673
    %1894 = vmatprep.subr.mxu0 %v678
    %1895 = vmatpush1.msra.mxu0 %v677
    %1896 = vmatprep.subr.mxu0 %v682
    %1897 = vmatpush1.msra.mxu0 %v681
    %1898 = vmatprep.subr.mxu0 %v686
    %1899 = vmatpush1.msra.mxu0 %v685
    %1900 = vmatprep.subr.mxu0 %v690
    %1901 = vmatpush1.msra.mxu0 %v689
    %1902 = vmatprep.subr.mxu0 %v694
    %1903 = vmatpush1.msra.mxu0 %v693
    %1904 = vmatprep.subr.mxu0 %v698
    %1905 = vmatpush1.msra.mxu0 %v697
    %1906 = vmatprep.subr.mxu0 %v702
    %1907 = vmatpush1.msra.mxu0 %v701
    %1908 = vmatprep.subr.mxu0 %v706
    %1909 = vmatpush1.msra.mxu0 %v705
    %1910 = vmatprep.subr.mxu0 %v710
    %1911 = vmatpush1.msra.mxu0 %v709
    %1912 = vmatprep.subr.mxu0 %v714
    %1913 = vmatpush1.msra.mxu0 %v713
    %1914 = vmatprep.subr.mxu0 %v718
    %1915 = vmatpush1.msra.mxu0 %v717
    %1916 = vmatprep.subr.mxu0 %v722
    %1917 = vmatpush1.msra.mxu0 %v721
    %1918 = vmatprep.subr.mxu0 %v726
    %1919 = vmatpush1.msra.mxu0 %v725
    %1920 = vmatprep.subr.mxu0 %v730
    %1921 = vmatpush1.msra.mxu0 %v729
    %1922 = vmatprep.subr.mxu0 0.0
    %1923 = vmatpush1.msra.mxu0 0.0
    %1924 = vmatprep.subr.mxu0 0.0
    %1925 = vmatpush1.msra.mxu0 0.0
    %1926 = vmatprep.subr.mxu0 0.0
    %1927 = vmatpush1.msra.mxu0 0.0
    %1928 = vmatprep.subr.mxu0 0.0
    %1929 = vmatpush1.msra.mxu0 0.0
    %1930 = vmatprep.subr.mxu0 0.0
    %1931 = vmatpush1.msra.mxu0 0.0
    %1932 = vmatprep.subr.mxu0 0.0
    %1933 = vmatpush1.msra.mxu0 0.0
    %1934 = vmatprep.subr.mxu0 0.0
    %1935 = vmatpush1.msra.mxu0 0.0
    %1936 = vmatprep.subr.mxu0 0.0
    %1937 = vmatpush1.msra.mxu0 0.0
    %1938 = vmatprep.subr.mxu0 0.0
    %1939 = vmatpush1.msra.mxu0 0.0
    %1940 = vmatprep.subr.mxu0 0.0
    %1941 = vmatpush1.msra.mxu0 0.0
    %1942 = vmatprep.subr.mxu0 0.0
    %1943 = vmatpush1.msra.mxu0 0.0
    %1944 = vmatprep.subr.mxu0 0.0
    %1945 = vmatpush1.msra.mxu0 0.0
    %1946 = vmatprep.subr.mxu0 0.0
    %1947 = vmatpush1.msra.mxu0 0.0
    %1948 = vmatprep.subr.mxu0 0.0
    %1949 = vmatpush1.msra.mxu0 0.0
    %1950 = vmatprep.subr.mxu0 0.0
    %1951 = vmatpush1.msra.mxu0 0.0
    %1952 = vmatprep.subr.mxu0 0.0
    %1953 = vmatpush1.msra.mxu0 0.0
    %1954 = vmatprep.mubr.f32.mxu0 0.0
    %1955 = vmatmul.mubr.f32.gmra.mrb[0].mxu0 %v1888
    %v1956 = vpop.f32.mrb[0].mxu0
    %v1957 = vadd.f32 0.0, %v1956
    %v1958 = vpop.f32.mrb[0].mxu0
    %v1959 = vadd.f32 0.0, %v1958
    %1960 = vdwg.mxu0
    %1961 = vmatprep.subr.mxu0 %v672
    %1962 = vmatpush1.msra.mxu0 %v671
    %1963 = vmatprep.subr.mxu0 %v676
    %1964 = vmatpush1.msra.mxu0 %v675
    %1965 = vmatprep.subr.mxu0 %v680
    %1966 = vmatpush1.msra.mxu0 %v679
    %1967 = vmatprep.subr.mxu0 %v684
    %1968 = vmatpush1.msra.mxu0 %v683
    %1969 = vmatprep.subr.mxu0 %v688
    %1970 = vmatpush1.msra.mxu0 %v687
    %1971 = vmatprep.subr.mxu0 %v692
    %1972 = vmatpush1.msra.mxu0 %v691
    %1973 = vmatprep.subr.mxu0 %v696
    %1974 = vmatpush1.msra.mxu0 %v695
    %1975 = vmatprep.subr.mxu0 %v700
    %1976 = vmatpush1.msra.mxu0 %v699
    %1977 = vmatprep.subr.mxu0 %v704
    %1978 = vmatpush1.msra.mxu0 %v703
    %1979 = vmatprep.subr.mxu0 %v708
    %1980 = vmatpush1.msra.mxu0 %v707
    %1981 = vmatprep.subr.mxu0 %v712
    %1982 = vmatpush1.msra.mxu0 %v711
    %1983 = vmatprep.subr.mxu0 %v716
    %1984 = vmatpush1.msra.mxu0 %v715
    %1985 = vmatprep.subr.mxu0 %v720
    %1986 = vmatpush1.msra.mxu0 %v719
    %1987 = vmatprep.subr.mxu0 %v724
    %1988 = vmatpush1.msra.mxu0 %v723
    %1989 = vmatprep.subr.mxu0 %v728
    %1990 = vmatpush1.msra.mxu0 %v727
    %1991 = vmatprep.subr.mxu0 %v732
    %1992 = vmatpush1.msra.mxu0 %v731
    %1993 = vmatprep.subr.mxu0 0.0
    %1994 = vmatpush1.msra.mxu0 0.0
    %1995 = vmatprep.subr.mxu0 0.0
    %1996 = vmatpush1.msra.mxu0 0.0
    %1997 = vmatprep.subr.mxu0 0.0
    %1998 = vmatpush1.msra.mxu0 0.0
    %1999 = vmatprep.subr.mxu0 0.0
    %2000 = vmatpush1.msra.mxu0 0.0
    %2001 = vmatprep.subr.mxu0 0.0
    %2002 = vmatpush1.msra.mxu0 0.0
    %2003 = vmatprep.subr.mxu0 0.0
    %2004 = vmatpush1.msra.mxu0 0.0
    %2005 = vmatprep.subr.mxu0 0.0
    %2006 = vmatpush1.msra.mxu0 0.0
    %2007 = vmatprep.subr.mxu0 0.0
    %2008 = vmatpush1.msra.mxu0 0.0
    %2009 = vmatprep.subr.mxu0 0.0
    %2010 = vmatpush1.msra.mxu0 0.0
    %2011 = vmatprep.subr.mxu0 0.0
    %2012 = vmatpush1.msra.mxu0 0.0
    %2013 = vmatprep.subr.mxu0 0.0
    %2014 = vmatpush1.msra.mxu0 0.0
    %2015 = vmatprep.subr.mxu0 0.0
    %2016 = vmatpush1.msra.mxu0 0.0
    %2017 = vmatprep.subr.mxu0 0.0
    %2018 = vmatpush1.msra.mxu0 0.0
    %2019 = vmatprep.subr.mxu0 0.0
    %2020 = vmatpush1.msra.mxu0 0.0
    %2021 = vmatprep.subr.mxu0 0.0
    %2022 = vmatpush1.msra.mxu0 0.0
    %2023 = vmatprep.subr.mxu0 0.0
    %2024 = vmatpush1.msra.mxu0 0.0
    %2025 = vmatprep.mubr.f32.mxu0 0.0
    %2026 = vmatmul.mubr.f32.gmra.mrb[0].mxu0 %v1888
    %v2027 = vpop.f32.mrb[0].mxu0
    %v2028 = vadd.f32 0.0, %v2027
    %v2029 = vpop.f32.mrb[0].mxu0
    %v2030 = vadd.f32 0.0, %v2029
    %2031 = vdwg.mxu0
    %v2032 = vadd.f32 %v548, %v1957
    %v2033 = vadd.f32 %v550, %v1959
    %v2034 = vadd.f32 %v661, %v2028
    %v2035 = vadd.f32 %v663, %v2030
    %v2036 = vmul.f32 %v2032, 0.5
    %v2037 = vtanh.pop %v2036
    %v2038 = vadd.f32 %v2037, 1.0
    %v2039 = vmul.f32 %v2038, 0.5
    %v2040 = vmul.f32 %v2033, 0.5
    %v2041 = vtanh.pop %v2040
    %v2042 = vadd.f32 %v2041, 1.0
    %v2043 = vmul.f32 %v2042, 0.5
    %v2044 = vtanh.pop %v2034
    %v2045 = vmul.f32 %v2035, 0.5
    %v2046 = vtanh.pop %v2045
    %v2047 = vadd.f32 %v2046, 1.0
    %v2048 = vmul.f32 %v2047, 0.5
    %v2049 = vmul.f32 %v2043, %v1886
    %v2050 = vmul.f32 %v2039, %v2044
    %v2051 = vadd.f32 %v2049, %v2050
    %v2052 = vtanh.pop %v2051
    %v2053 = vmul.f32 %v2048, %v2052
    %2054 = vst [vmem:[#allocation5 + $0x38] sm:$0xff] %v2053
    %2055 = vst [vmem:[%s11] sm:$0xff] %v2053
    %2056 = vst [vmem:[%s12] sm:$0xff] %v2051
    %s2057 = smul.u32 128, 1
    %s2058 = sshll.u32 %s2057, 4
    %2059 = dma.done %s71, %s2058
    %s2060 = smul.u32 1, 1
    %s2061 = sshll.u32 %s2060, 4
    %2062 = dma.done %s144, %s2061
    %v2063 = vld [vmem:[#allocation5] sm:$0xff]
    %v2064 = vld [vmem:[#allocation5 + $0x8] sm:$0xff]
    %v2065 = vld [vmem:[#allocation5 + $0x10] sm:$0xff]
    %v2066 = vld [vmem:[#allocation5 + $0x18] sm:$0xff]
    %v2067 = vld [vmem:[#allocation5 + $0x20] sm:$0xff]
    %v2068 = vld [vmem:[#allocation5 + $0x28] sm:$0xff]
    %v2069 = vld [vmem:[#allocation5 + $0x30] sm:$0xff]
    %v2070 = vld [vmem:[#allocation5 + $0x38] sm:$0xff]
    %v2071 = vld [vmem:[#allocation3] sm:$0xff]
    %v2072 = vld [vmem:[#allocation3 + $0x8] sm:$0xff]
    %v2073 = vld [vmem:[#allocation3 + $0x10] sm:$0xff]
    %v2074 = vld [vmem:[#allocation3 + $0x18] sm:$0xff]
    %v2075 = vld [vmem:[#allocation3 + $0x20] sm:$0xff]
    %v2076 = vld [vmem:[#allocation3 + $0x28] sm:$0xff]
    %v2077 = vld [vmem:[#allocation3 + $0x30] sm:$0xff]
    %v2078 = vld [vmem:[#allocation3 + $0x38] sm:$0xff]
    %v2079 = vld [vmem:[#allocation3 + $0x40] sm:$0xff]
    %v2080 = vld [vmem:[#allocation3 + $0x48] sm:$0xff]
    %v2081 = vld [vmem:[#allocation3 + $0x50] sm:$0xff]
    %v2082 = vld [vmem:[#allocation3 + $0x58] sm:$0xff]
    %v2083 = vld [vmem:[#allocation3 + $0x60] sm:$0xff]
    %v2084 = vld [vmem:[#allocation3 + $0x68] sm:$0xff]
    %v2085 = vld [vmem:[#allocation3 + $0x70] sm:$0xff]
    %v2086 = vld [vmem:[#allocation3 + $0x78] sm:$0xff]
    %v2087 = vld [vmem:[#allocation4] sm:$0x1]
    %v2089 = vlaneseq
    %v2090 = vshrl.u32 %v2089, 7
    %v2091 = vsub.s32 0, %v2090
    %v2092 = vrot.slane %v2087, %v2091
    %2094 = vmatprep.subr.mxu0 0.0
    %2095 = vmatpush1.msra.mxu0 %v2071
    %2096 = vmatprep.subr.mxu0 0.0
    %2097 = vmatpush1.msra.mxu0 %v2072
    %2098 = vmatprep.subr.mxu0 0.0
    %2099 = vmatpush1.msra.mxu0 %v2073
    %2100 = vmatprep.subr.mxu0 0.0
    %2101 = vmatpush1.msra.mxu0 %v2074
    %2102 = vmatprep.subr.mxu0 0.0
    %2103 = vmatpush1.msra.mxu0 %v2075
    %2104 = vmatprep.subr.mxu0 0.0
    %2105 = vmatpush1.msra.mxu0 %v2076
    %2106 = vmatprep.subr.mxu0 0.0
    %2107 = vmatpush1.msra.mxu0 %v2077
    %2108 = vmatprep.subr.mxu0 0.0
    %2109 = vmatpush1.msra.mxu0 %v2078
    %2110 = vmatprep.subr.mxu0 0.0
    %2111 = vmatpush1.msra.mxu0 %v2079
    %2112 = vmatprep.subr.mxu0 0.0
    %2113 = vmatpush1.msra.mxu0 %v2080
    %2114 = vmatprep.subr.mxu0 0.0
    %2115 = vmatpush1.msra.mxu0 %v2081
    %2116 = vmatprep.subr.mxu0 0.0
    %2117 = vmatpush1.msra.mxu0 %v2082
    %2118 = vmatprep.subr.mxu0 0.0
    %2119 = vmatpush1.msra.mxu0 %v2083
    %2120 = vmatprep.subr.mxu0 0.0
    %2121 = vmatpush1.msra.mxu0 %v2084
    %2122 = vmatprep.subr.mxu0 0.0
    %2123 = vmatpush1.msra.mxu0 %v2085
    %2124 = vmatprep.subr.mxu0 0.0
    %2125 = vmatpush1.msra.mxu0 %v2086
    %2126 = vmatprep.subr.mxu0 0.0
    %2127 = vmatpush1.msra.mxu0 0.0
    %2128 = vmatprep.subr.mxu0 0.0
    %2129 = vmatpush1.msra.mxu0 0.0
    %2130 = vmatprep.subr.mxu0 0.0
    %2131 = vmatpush1.msra.mxu0 0.0
    %2132 = vmatprep.subr.mxu0 0.0
    %2133 = vmatpush1.msra.mxu0 0.0
    %2134 = vmatprep.subr.mxu0 0.0
    %2135 = vmatpush1.msra.mxu0 0.0
    %2136 = vmatprep.subr.mxu0 0.0
    %2137 = vmatpush1.msra.mxu0 0.0
    %2138 = vmatprep.subr.mxu0 0.0
    %2139 = vmatpush1.msra.mxu0 0.0
    %2140 = vmatprep.subr.mxu0 0.0
    %2141 = vmatpush1.msra.mxu0 0.0
    %2142 = vmatprep.subr.mxu0 0.0
    %2143 = vmatpush1.msra.mxu0 0.0
    %2144 = vmatprep.subr.mxu0 0.0
    %2145 = vmatpush1.msra.mxu0 0.0
    %2146 = vmatprep.subr.mxu0 0.0
    %2147 = vmatpush1.msra.mxu0 0.0
    %2148 = vmatprep.subr.mxu0 0.0
    %2149 = vmatpush1.msra.mxu0 0.0
    %2150 = vmatprep.subr.mxu0 0.0
    %2151 = vmatpush1.msra.mxu0 0.0
    %2152 = vmatprep.subr.mxu0 0.0
    %2153 = vmatpush1.msra.mxu0 0.0
    %2154 = vmatprep.subr.mxu0 0.0
    %2155 = vmatpush1.msra.mxu0 0.0
    %2156 = vmatprep.subr.mxu0 0.0
    %2157 = vmatpush1.msra.mxu0 0.0
    %2158 = vmatprep.mubr.f32.mxu0 0.0
    %2159 = vmatmul.mubr.f32.gmra.mrb[0].mxu0 %v2063
    %v2160 = vpop.f32.mrb[0].mxu0
    %v2161 = vadd.f32 %v2092, %v2160
    %v2162 = vpop.f32.mrb[0].mxu0
    %2163 = vmatprep.mubr.f32.mxu0 0.0
    %2164 = vmatmul.mubr.f32.gmra.mrb[0].mxu0 %v2064
    %v2165 = vpop.f32.mrb[0].mxu0
    %v2166 = vadd.f32 %v2092, %v2165
    %v2167 = vpop.f32.mrb[0].mxu0
    %2168 = vmatprep.mubr.f32.mxu0 0.0
    %2169 = vmatmul.mubr.f32.gmra.mrb[0].mxu0 %v2065
    %v2170 = vpop.f32.mrb[0].mxu0
    %v2171 = vadd.f32 %v2092, %v2170
    %v2172 = vpop.f32.mrb[0].mxu0
    %2173 = vmatprep.mubr.f32.mxu0 0.0
    %2174 = vmatmul.mubr.f32.gmra.mrb[0].mxu0 %v2066
    %v2175 = vpop.f32.mrb[0].mxu0
    %v2176 = vadd.f32 %v2092, %v2175
    %v2177 = vpop.f32.mrb[0].mxu0
    %2178 = vmatprep.mubr.f32.mxu0 0.0
    %2179 = vmatmul.mubr.f32.gmra.mrb[0].mxu0 %v2067
    %v2180 = vpop.f32.mrb[0].mxu0
    %v2181 = vadd.f32 %v2092, %v2180
    %v2182 = vpop.f32.mrb[0].mxu0
    %2183 = vmatprep.mubr.f32.mxu0 0.0
    %2184 = vmatmul.mubr.f32.gmra.mrb[0].mxu0 %v2068
    %v2185 = vpop.f32.mrb[0].mxu0
    %v2186 = vadd.f32 %v2092, %v2185
    %v2187 = vpop.f32.mrb[0].mxu0
    %2188 = vmatprep.mubr.f32.mxu0 0.0
    %2189 = vmatmul.mubr.f32.gmra.mrb[0].mxu0 %v2069
    %v2190 = vpop.f32.mrb[0].mxu0
    %v2191 = vadd.f32 %v2092, %v2190
    %v2192 = vpop.f32.mrb[0].mxu0
    %2193 = vmatprep.mubr.f32.mxu0 0.0
    %2194 = vmatmul.mubr.f32.gmra.mrb[0].mxu0 %v2070
    %v2195 = vpop.f32.mrb[0].mxu0
    %v2196 = vadd.f32 %v2092, %v2195
    %v2197 = vpop.f32.mrb[0].mxu0
    %2198 = vdwg.mxu0
    %v2199 = vxor.u32 %v2161, 2147483648
    %v2200 = vxor.u32 %v2166, 2147483648
    %v2201 = vxor.u32 %v2171, 2147483648
    %v2202 = vxor.u32 %v2176, 2147483648
    %v2203 = vxor.u32 %v2181, 2147483648
    %v2204 = vxor.u32 %v2186, 2147483648
    %v2205 = vxor.u32 %v2191, 2147483648
    %v2206 = vxor.u32 %v2196, 2147483648
    %v2207 = vmul.f32 %v2199, 1.442695
    %v2208 = vpow.pop %v2207
    %v2209 = vmul.f32 %v2200, 1.442695
    %v2210 = vpow.pop %v2209
    %v2211 = vmul.f32 %v2201, 1.442695
    %v2212 = vpow.pop %v2211
    %v2213 = vmul.f32 %v2202, 1.442695
    %v2214 = vpow.pop %v2213
    %v2215 = vmul.f32 %v2203, 1.442695
    %v2216 = vpow.pop %v2215
    %v2217 = vmul.f32 %v2204, 1.442695
    %v2218 = vpow.pop %v2217
    %v2219 = vmul.f32 %v2205, 1.442695
    %v2220 = vpow.pop %v2219
    %v2221 = vmul.f32 %v2206, 1.442695
    %v2222 = vpow.pop %v2221
    %v2223 = vadd.f32 %v2208, 1.0
    %v2224 = vadd.f32 %v2210, 1.0
    %v2225 = vadd.f32 %v2212, 1.0
    %v2226 = vadd.f32 %v2214, 1.0
    %v2227 = vadd.f32 %v2216, 1.0
    %v2228 = vadd.f32 %v2218, 1.0
    %v2229 = vadd.f32 %v2220, 1.0
    %v2230 = vadd.f32 %v2222, 1.0
    %v2231 = vrcp.pop %v2223
    %v2232 = vmul.f32 1.0, %v2231
    %v2233 = vrcp.pop %v2224
    %v2234 = vmul.f32 1.0, %v2233
    %v2235 = vrcp.pop %v2225
    %v2236 = vmul.f32 1.0, %v2235
    %v2237 = vrcp.pop %v2226
    %v2238 = vmul.f32 1.0, %v2237
    %v2239 = vrcp.pop %v2227
    %v2240 = vmul.f32 1.0, %v2239
    %v2241 = vrcp.pop %v2228
    %v2242 = vmul.f32 1.0, %v2241
    %v2243 = vrcp.pop %v2229
    %v2244 = vmul.f32 1.0, %v2243
    %v2245 = vrcp.pop %v2230
    %v2246 = vmul.f32 1.0, %v2245
    %2247 = vst [vmem:[%s10] sm:$0xff] %v2232
    %2248 = vst [vmem:[%s10 + $0x8] sm:$0xff] %v2234
    %2249 = vst [vmem:[%s10 + $0x10] sm:$0xff] %v2236
    %2250 = vst [vmem:[%s10 + $0x18] sm:$0xff] %v2238
    %2251 = vst [vmem:[%s10 + $0x20] sm:$0xff] %v2240
    %2252 = vst [vmem:[%s10 + $0x28] sm:$0xff] %v2242
    %2253 = vst [vmem:[%s10 + $0x30] sm:$0xff] %v2244
    %2254 = vst [vmem:[%s10 + $0x38] sm:$0xff] %v2246
    // Predicated region
    $region106: #{tester_forward.1} parent=1 // pred_check
      _
    $region107: #{tester_forward.1} parent=1 // pred_check_branch
      %2256 = sbr.rel (0) target = $region109
    $region108: #{tester_forward.1} parent=1 // pred_region
      _
    $region109: #{tester_forward.1} parent=1 // pred_fallthru
      _
    // Predicated region
    $region110: #{tester_forward.1} parent=1 // pred_check
      _
    $region111: #{tester_forward.1} parent=1 // pred_check_branch
      %2258 = sbr.rel (0) target = $region113
    $region112: #{tester_forward.1} parent=1 // pred_region
      _
    $region113: #{tester_forward.1} parent=1 // pred_fallthru
      _
    // Predicated region
    $region114: #{tester_forward.1} parent=1 // pred_check
      _
    $region115: #{tester_forward.1} parent=1 // pred_check_branch
      %2260 = sbr.rel (0) target = $region117
    $region116: #{tester_forward.1} parent=1 // pred_region
      _
    $region117: #{tester_forward.1} parent=1 // pred_fallthru
      _
    // Predicated region
    $region118: #{tester_forward.1} parent=1 // pred_check
      _
    $region119: #{tester_forward.1} parent=1 // pred_check_branch
      %2262 = sbr.rel (0) target = $region121
    $region120: #{tester_forward.1} parent=1 // pred_region
      _
    $region121: #{tester_forward.1} parent=1 // pred_fallthru
      _
    // Predicated region
    $region122: #{tester_forward.1} parent=1 // pred_check
      _
    $region123: #{tester_forward.1} parent=1 // pred_check_branch
      %2264 = sbr.rel (0) target = $region125
    $region124: #{tester_forward.1} parent=1 // pred_region
      _
    $region125: #{tester_forward.1} parent=1 // pred_fallthru
      _
    // Predicated region
    $region126: #{tester_forward.1} parent=1 // pred_check
      _
    $region127: #{tester_forward.1} parent=1 // pred_check_branch
      %2266 = sbr.rel (0) target = $region129
    $region128: #{tester_forward.1} parent=1 // pred_region
      _
    $region129: #{tester_forward.1} parent=1 // pred_fallthru
      _
    %2267 = vsyncpa [#allocation8], 1
    %2268 = vsyncpa [#allocation10], 1
  %2269 = vsyncmov [#allocation6]
  %s2270 = vpop.sfrf %2269
  %p2271 = scmp.eq.s32.totalorder %s2270, 0
  %p2272 = pneg %p2271
  %2274 = shalt.err (%p2272)
  %s2275 = scalar_lea.sflag [#allocation6], 1
  %2276 = vsyncmov %s2275
  %s2277 = vpop.sfrf %2276
  %p2278 = scmp.eq.s32.totalorder %s2277, 0
  %p2279 = pneg %p2278
  %2281 = shalt.err (%p2279)
  %s2282 = scalar_lea.sflag [#allocation6], 2
  %2283 = vsyncmov %s2282
  %s2284 = vpop.sfrf %2283
  %p2285 = scmp.eq.s32.totalorder %s2284, 0
  %p2286 = pneg %p2285
  %2288 = shalt.err (%p2286)

</llo_original>
